<compile_context>
chip_gen: v5e
topology: v5e:2x2
jax: 0.10.0
libtpu: 0.0.40
codegen_flags: <defaults>
</compile_context>

<pallas_src>
import jax
import jax.numpy as jnp
from jax import lax
from jax.experimental import pallas as pl
from jax.experimental.pallas import tpu as pltpu


# ---------------- model hyper-parameters (from config.MODEL) ----------------
INPUT_SIZE = 4               # config.MODEL['input_size']
NUM_CLASSES = 6              # config.MODEL['num_classes']
GRU_HIDDEN = 32              # config.MODEL['gru_hidden_size']
CONV_CHANNELS = (32, 64, 128)
KSIZE, PAD = 5, 2
ATTN_HIDDEN = 64
BN_EPS = 1e-5
HEAD_PAD = 128               # lane-dense classifier output width (sliced to 6 outside)
R0 = 8                       # sublane-aligned read offset inside the im2col staging buffers


def pulse_classifier_kernel(*refs):
    (x_ref,
     w1_ref, s1_ref, w2_ref, s2_ref, w3_ref, s3_ref,
     wih0_ref, bih0_ref, whh0_ref, bhh0_ref,
     wih1_ref, bih1_ref, whh1_ref, bhh1_ref,
     a1_ref, a1b_ref, a2v_ref, a2b_ref,
     c1_ref, c1b_ref, c2_ref, c2b_ref, c3_ref, c3b_ref,
     out_ref,
     im1_ref, act1_ref, im2_ref, act2_ref, im3_ref, act3_ref,
     p3tm_ref, xp0f_ref, xp0b_ref, x1f_ref, x1b_ref,
     xp1f_ref, xp1b_ref, x2f_ref, x2b_ref) = refs

    B, T, _ = x_ref.shape
    H = GRU_HIDDEN
    T4 = T // 8                        # sequence length after three maxpool(2,2)
    SUB = p3tm_ref.shape[0] // T4      # 8-aligned per-timestep row stride in seq scratch
    f32 = jnp.float32
    c1, c2, c3 = CONV_CHANNELS

    # ---- fused Conv1d(k=5,p=2) + BN + ReLU (im2col built by K shifted STORES) ----
    def conv_block(src3d, t_in, c_in, im_ref, act_ref, w_ref, shift_ref):
        # zero only the read-window rows that the shifted stores leave untouched
        pad_zeros = jnp.zeros((B, PAD, KSIZE * c_in), f32)
        im_ref[:, R0:R0 + PAD, :] = pad_zeros
        im_ref[:, R0 + t_in - PAD:R0 + t_in, :] = pad_zeros
        # tap k of the im2col operand = input shifted by (PAD - k) rows
        for k in range(KSIZE):
            im_ref[:, R0 + PAD - k:R0 + PAD - k + t_in,
                   k * c_in:(k + 1) * c_in] = src3d
        wins = im_ref[:, R0:R0 + t_in, :].reshape(B * t_in, KSIZE * c_in)
        acc = jnp.dot(wins, w_ref[...], preferred_element_type=f32)      # (B*t_in, c_out)
        act_ref[...] = jnp.maximum(acc + shift_ref[...], 0.0)            # BN folded

    # MaxPool1d(2,2) over batch-major activations (pairs never cross batch rows)
    def pool(act_ref, rows):
        half = rows // 2
        return jnp.maximum(act_ref[pl.ds(0, half, stride=2), :],
                           act_ref[pl.ds(1, half, stride=2), :])

    conv_block(x_ref[...], T, INPUT_SIZE, im1_ref, act1_ref, w1_ref, s1_ref)
    p1 = pool(act1_ref, B * T)                                           # (B*T/2, 32)
    conv_block(p1.reshape(B, T // 2, c1), T // 2, c1, im2_ref, act2_ref, w2_ref, s2_ref)
    p2 = pool(act2_ref, B * (T // 2))                                    # (B*T/4, 64)
    conv_block(p2.reshape(B, T // 4, c2), T // 4, c2, im3_ref, act3_ref, w3_ref, s3_ref)

    # conv3 maxpool fused with the batch-major -> time-major transpose, so the GRU
    # time loops see only contiguous row blocks (no strided gathers on the serial path)
    for t in range(T4):
        p3tm_ref[t * SUB:t * SUB + B, :] = jnp.maximum(
            act3_ref[pl.ds(2 * t, B, stride=2 * T4), :],
            act3_ref[pl.ds(2 * t + 1, B, stride=2 * T4), :])

    # ---- BiGRU step: ONE block-diagonal (2H,6H) recurrent matmul for both dirs ----
    def bigru_step(gx_f, gx_b, h, whh_ref, bhh_ref):
        gh = jnp.dot(h, whh_ref[...], preferred_element_type=f32) + bhh_ref[...]  # (B,6H)

        def gates(gx, ghd, h_prev):
            r = jax.nn.sigmoid(gx[:, 0:H] + ghd[:, 0:H])
            z = jax.nn.sigmoid(gx[:, H:2 * H] + ghd[:, H:2 * H])
            n = jnp.tanh(gx[:, 2 * H:3 * H] + r * ghd[:, 2 * H:3 * H])
            return (1.0 - z) * n + z * h_prev

        h_f = gates(gx_f, gh[:, 0:3 * H], h[:, 0:H])
        h_b = gates(gx_b, gh[:, 3 * H:6 * H], h[:, H:2 * H])
        return h_f, h_b

    def run_bigru(xpf_ref, xpb_ref, whh_ref, bhh_ref, outf_ref, outb_ref):
        def step(s, rev, h):
            rf = s * SUB
            rb = rev * SUB
            if not isinstance(rf, int):           # dynamic (fori_loop) index: 8-aligned
                rf = pl.multiple_of(rf, 8)
                rb = pl.multiple_of(rb, 8)
            gx_f = xpf_ref[pl.ds(rf, B), :]
            gx_b = xpb_ref[pl.ds(rb, B), :]
            h_f, h_b = bigru_step(gx_f, gx_b, h, whh_ref, bhh_ref)
            outf_ref[pl.ds(rf, B), :] = h_f
            outb_ref[pl.ds(rb, B), :] = h_b
            return jnp.concatenate([h_f, h_b], axis=-1)

        h0 = jnp.zeros((B, 2 * H), f32)
        if T4 <= 8:
            # short sequences: static unrolled loop (compile-time addresses)
            h = h0
            for s in range(T4):
                h = step(s, T4 - 1 - s, h)
        else:
            # long sequences: visible loop body, bounded live ranges
            lax.fori_loop(0, T4, lambda s, h: step(s, T4 - 1 - s, h), h0, unroll=False)

    # ---- BiGRU layer 0: input projection hoisted & batched over the sequence ----
    proj0 = (jnp.dot(p3tm_ref[...], wih0_ref[...], preferred_element_type=f32)
             + bih0_ref[...])                                  # (T4*SUB, 6H) time-major
    xp0f_ref[...] = proj0[:, 0:3 * H]
    xp0b_ref[...] = proj0[:, 3 * H:6 * H]
    run_bigru(xp0f_ref, xp0b_ref, whh0_ref, bhh0_ref, x1f_ref, x1b_ref)

    # ---- BiGRU layer 1 ----
    seq1 = jnp.concatenate([x1f_ref[...], x1b_ref[...]], axis=-1)        # (T4*SUB, 2H)
    proj1 = (jnp.dot(seq1, wih1_ref[...], preferred_element_type=f32)
             + bih1_ref[...])
    xp1f_ref[...] = proj1[:, 0:3 * H]
    xp1b_ref[...] = proj1[:, 3 * H:6 * H]
    run_bigru(xp1f_ref, xp1b_ref, whh1_ref, bhh1_ref, x2f_ref, x2b_ref)

    # ---- attention: ONE batched matmul + one lane reduce for all timesteps ----
    seq2 = jnp.concatenate([x2f_ref[...], x2b_ref[...]], axis=-1)        # (T4*SUB, 2H)
    e = jnp.tanh(jnp.dot(seq2, a1_ref[...], preferred_element_type=f32) + a1b_ref[...])
    s_all = jnp.sum(e * a2v_ref[...], axis=-1, keepdims=True) + a2b_ref[...]   # (T4*SUB,1)
    logits_t = jnp.concatenate(
        [s_all[t * SUB:t * SUB + B, :] for t in range(T4)], axis=-1)     # (B, T4)
    m = jnp.max(logits_t, axis=-1, keepdims=True)
    pexp = jnp.exp(logits_t - m)
    alpha = pexp * pl.reciprocal(jnp.sum(pexp, axis=-1, keepdims=True), approx=True)
    context = jnp.zeros((B, 2 * H), f32)
    for t in range(T4):
        context = context + alpha[:, t:t + 1] * seq2[t * SUB:t * SUB + B, :]

    # ---- classifier head (Dropout = identity at inference, lane-padded logits) ----
    f1 = jnp.maximum(jnp.dot(context, c1_ref[...], preferred_element_type=f32)
                     + c1b_ref[...], 0.0)
    f2 = jnp.maximum(jnp.dot(f1, c2_ref[...], preferred_element_type=f32)
                     + c2b_ref[...], 0.0)
    out_ref[...] = (jnp.dot(f2, c3_ref[...], preferred_element_type=f32)
                    + c3b_ref[...]).astype(out_ref.dtype)


def pulse_classifier_forward(x, kp, *, batch_block=None):
    B, T, _ = x.shape
    assert T % 8 == 0, "sequence length must be divisible by 8 (three maxpool(2,2))"
    H = GRU_HIDDEN
    T4 = T // 8
    cc1, cc2, cc3 = CONV_CHANNELS

    Bb = batch_block or B
    assert B % Bb == 0 and (Bb == B or Bb % 8 == 0), \
        "batch block must divide B and be 8-aligned when it tiles the batch"
    grid = (B // Bb,)
    SUB = ((Bb + 7) // 8) * 8          # 8-aligned per-timestep row stride (seq scratch)

    weights = (
        kp["w1"], kp["s1"], kp["w2"], kp["s2"], kp["w3"], kp["s3"],
        kp["wih0"], kp["bih0"], kp["whh0"], kp["bhh0"],
        kp["wih1"], kp["bih1"], kp["whh1"], kp["bhh1"],
        kp["a1"], kp["a1b"], kp["a2v"], kp["a2b"],
        kp["c1"], kp["c1b"], kp["c2"], kp["c2b"], kp["c3"], kp["c3b"])

    x_spec = pl.BlockSpec((Bb, T, INPUT_SIZE), lambda i: (i, 0, 0))
    w_specs = [pl.BlockSpec(w.shape, lambda i, n=w.ndim: (0,) * n) for w in weights]
    out_spec = pl.BlockSpec((Bb, HEAD_PAD), lambda i: (i, 0))

    scratch_shapes_list = [
        (Bb, T + R0 + PAD, KSIZE * INPUT_SIZE),        # im1 (im2col staging, conv1)
        (Bb * T, cc1),                                 # act1
        (Bb, T // 2 + R0 + PAD, KSIZE * cc1),          # im2
        (Bb * (T // 2), cc2),                          # act2
        (Bb, T // 4 + R0 + PAD, KSIZE * cc2),          # im3
        (Bb * (T // 4), cc3),                          # act3
        (T4 * SUB, cc3),                               # p3 (time-major GRU input)
        (T4 * SUB, 3 * H),                             # xproj0 fwd
        (T4 * SUB, 3 * H),                             # xproj0 bwd
        (T4 * SUB, H),                                 # layer-0 out fwd
        (T4 * SUB, H),                                 # layer-0 out bwd
        (T4 * SUB, 3 * H),                             # xproj1 fwd
        (T4 * SUB, 3 * H),                             # xproj1 bwd
        (T4 * SUB, H),                                 # layer-1 out fwd
        (T4 * SUB, H),                                 # layer-1 out bwd
    ]
    scratch = [pltpu.VMEM(s, jnp.float32) for s in scratch_shapes_list]

    # size the scoped-VMEM limit from the actual scratch + operand footprint
    def padded_bytes(shape):
        lead = 1
        for d in shape[:-2]:
            lead *= d
        sub = ((shape[-2] + 7) // 8) * 8 if len(shape) >= 2 else 1
        lane = ((shape[-1] + 127) // 128) * 128
        return lead * sub * lane * 4

    vmem_bytes = sum(padded_bytes(s) for s in scratch_shapes_list)
    vmem_bytes += 2 * sum(padded_bytes(tuple(w.shape)) for w in weights)
    vmem_bytes += 2 * (padded_bytes((Bb, T, INPUT_SIZE)) + padded_bytes((Bb, HEAD_PAD)))
    vmem_limit = int(min(100 * 1024 * 1024, max(32 * 1024 * 1024, 2 * vmem_bytes)))

    flops = 0
    flops += 2 * B * T * (KSIZE * INPUT_SIZE) * cc1
    flops += 2 * B * (T // 2) * (KSIZE * cc1) * cc2
    flops += 2 * B * (T // 4) * (KSIZE * cc2) * cc3
    flops += 2 * B * T4 * (cc3 * 6 * H + 2 * H * 6 * H)        # layer-0 proj + recurrence
    flops += 2 * B * T4 * (2 * H * 6 * H + 2 * H * 6 * H)      # layer-1 proj + recurrence
    flops += 2 * B * T4 * (2 * H) * ATTN_HIDDEN                # attention scores
    flops += 2 * B * (2 * H * 256 + 256 * 128 + 128 * HEAD_PAD)
    cost = pl.CostEstimate(
        flops=int(flops),
        transcendentals=int(B * T4 * (12 * H + ATTN_HIDDEN + 1)),
        bytes_accessed=int(x.size * 4 + sum(int(w.size) * 4 for w in weights)
                           + B * HEAD_PAD * 4))

    out = pl.pallas_call(
        pulse_classifier_kernel,
        out_shape=jax.ShapeDtypeStruct((B, HEAD_PAD), jnp.float32),
        grid=grid,
        in_specs=[x_spec] + w_specs,
        out_specs=out_spec,
        scratch_shapes=scratch,
        compiler_params=pltpu.CompilerParams(
            dimension_semantics=("parallel",),
            vmem_limit_bytes=vmem_limit),
        cost_estimate=cost,
    )(x, *weights)
    return out[:, :NUM_CLASSES]


# ---------------- deterministic PyTorch-layout parameters ----------------
def init_torch_params(key):
    def u(k, shape, bound):
        return jax.random.uniform(k, shape, jnp.float32, -bound, bound)

    keys = iter(jax.random.split(key, 64))
    tp = {}
    conv = []
    cin = INPUT_SIZE
    for cout in CONV_CHANNELS:
        b = 1.0 / (cin * KSIZE) ** 0.5
        conv.append(dict(
            w=u(next(keys), (cout, cin, KSIZE), b),
            b=u(next(keys), (cout,), b),
            gamma=jax.random.uniform(next(keys), (cout,), jnp.float32, 0.5, 1.5),
            beta=u(next(keys), (cout,), 0.5),
            mean=u(next(keys), (cout,), 0.5),
            var=jax.random.uniform(next(keys), (cout,), jnp.float32, 0.5, 1.5),
        ))
        cin = cout
    tp["conv"] = conv

    H = GRU_HIDDEN
    gru = []
    in_size = CONV_CHANNELS[-1]
    for _layer in range(2):
        b = 1.0 / H ** 0.5
        lp = {}
        for tag in ("f", "b"):
            lp["w_ih_" + tag] = u(next(keys), (3 * H, in_size), b)
            lp["w_hh_" + tag] = u(next(keys), (3 * H, H), b)
            lp["b_ih_" + tag] = u(next(keys), (3 * H,), b)
            lp["b_hh_" + tag] = u(next(keys), (3 * H,), b)
        gru.append(lp)
        in_size = 2 * H
    tp["gru"] = gru

    b = 1.0 / (2 * H) ** 0.5
    tp["a1_w"] = u(next(keys), (ATTN_HIDDEN, 2 * H), b)
    tp["a1_b"] = u(next(keys), (ATTN_HIDDEN,), b)
    b = 1.0 / ATTN_HIDDEN ** 0.5
    tp["a2_w"] = u(next(keys), (1, ATTN_HIDDEN), b)
    tp["a2_b"] = u(next(keys), (1,), b)

    b = 1.0 / (2 * H) ** 0.5
    tp["c1_w"] = u(next(keys), (256, 2 * H), b)
    tp["c1_b"] = u(next(keys), (256,), b)
    b = 1.0 / 256 ** 0.5
    tp["c2_w"] = u(next(keys), (128, 256), b)
    tp["c2_b"] = u(next(keys), (128,), b)
    b = 1.0 / 128 ** 0.5
    tp["c3_w"] = u(next(keys), (NUM_CLASSES, 128), b)
    tp["c3_b"] = u(next(keys), (NUM_CLASSES,), b)
    return tp


# ----- convert to kernel layout (fold BN, fuse gates + directions, pad head) -----
def prep_kernel_params(tp):
    kp = {}
    for i, blk in enumerate(tp["conv"], start=1):
        scale = blk["gamma"] / jnp.sqrt(blk["var"] + BN_EPS)
        cout = blk["w"].shape[0]
        wflat = jnp.transpose(blk["w"], (2, 1, 0)).reshape(-1, cout) * scale[None, :]
        shift = ((blk["b"] - blk["mean"]) * scale + blk["beta"])[None, :]
        kp[f"w{i}"] = wflat                       # (K*Cin, Cout), BN scale folded in
        kp[f"s{i}"] = shift                       # (1, Cout)

    H = GRU_HIDDEN
    z = jnp.zeros((H, 3 * H), jnp.float32)
    for layer, lp in enumerate(tp["gru"]):
        kp[f"wih{layer}"] = jnp.concatenate([lp["w_ih_f"].T, lp["w_ih_b"].T], axis=1)
        kp[f"bih{layer}"] = jnp.concatenate([lp["b_ih_f"], lp["b_ih_b"]])[None, :]
        # fwd/bwd recurrent weights fused into ONE block-diagonal (2H, 6H) operand
        kp[f"whh{layer}"] = jnp.concatenate(
            [jnp.concatenate([lp["w_hh_f"].T, z], axis=1),
             jnp.concatenate([z, lp["w_hh_b"].T], axis=1)], axis=0)
        kp[f"bhh{layer}"] = jnp.concatenate([lp["b_hh_f"], lp["b_hh_b"]])[None, :]

    kp["a1"] = tp["a1_w"].T                       # (2H, 64)
    kp["a1b"] = tp["a1_b"][None, :]
    kp["a2v"] = tp["a2_w"]                        # (1, 64)
    kp["a2b"] = tp["a2_b"][None, :]               # (1, 1)
    kp["c1"] = tp["c1_w"].T
    kp["c1b"] = tp["c1_b"][None, :]
    kp["c2"] = tp["c2_w"].T
    kp["c2b"] = tp["c2_b"][None, :]
    # lane-dense classifier output: pad Linear(128 -> 6) to 128 output columns
    kp["c3"] = jnp.pad(tp["c3_w"].T, ((0, 0), (0, HEAD_PAD - NUM_CLASSES)))
    kp["c3b"] = jnp.pad(tp["c3_b"][None, :], ((0, 0), (0, HEAD_PAD - NUM_CLASSES)))
    return kp


# ---------------- pure-JAX reference (PyTorch semantics, eval mode) ----------------
def reference_forward(x, tp):
    B = x.shape[0]
    H = GRU_HIDDEN
    h = x
    for blk in tp["conv"]:
        w, bias = blk["w"], blk["b"]
        ks = w.shape[2]
        t_len = h.shape[1]
        hp = jnp.pad(h, ((0, 0), (PAD, PAD), (0, 0)))
        conv = sum(jnp.einsum("btc,oc->bto", hp[:, k:k + t_len, :], w[:, :, k])
                   for k in range(ks)) + bias[None, None, :]
        bn = (conv - blk["mean"]) / jnp.sqrt(blk["var"] + BN_EPS) * blk["gamma"] + blk["beta"]
        act = jnp.maximum(bn, 0.0)
        h = jnp.maximum(act[:, 0::2, :], act[:, 1::2, :])        # MaxPool1d(2,2)

    def run_dir(xseq, w_ih, w_hh, b_ih, b_hh, reverse):
        tn = xseq.shape[1]
        hh = jnp.zeros((B, H), jnp.float32)
        outs = [None] * tn
        steps = range(tn - 1, -1, -1) if reverse else range(tn)
        for t in steps:
            xt = xseq[:, t, :]
            gi = xt @ w_ih.T + b_ih
            gh = hh @ w_hh.T + b_hh
            r = jax.nn.sigmoid(gi[:, :H] + gh[:, :H])
            z = jax.nn.sigmoid(gi[:, H:2 * H] + gh[:, H:2 * H])
            n = jnp.tanh(gi[:, 2 * H:] + r * gh[:, 2 * H:])
            hh = (1.0 - z) * n + z * hh
            outs[t] = hh
        return jnp.stack(outs, axis=1)

    seq = h
    for lp in tp["gru"]:
        fwd = run_dir(seq, lp["w_ih_f"], lp["w_hh_f"], lp["b_ih_f"], lp["b_hh_f"], False)
        bwd = run_dir(seq, lp["w_ih_b"], lp["w_hh_b"], lp["b_ih_b"], lp["b_hh_b"], True)
        seq = jnp.concatenate([fwd, bwd], axis=-1)

    e = jnp.tanh(seq @ tp["a1_w"].T + tp["a1_b"]) @ tp["a2_w"].T + tp["a2_b"]
    attn = jax.nn.softmax(e, axis=1)
    context = jnp.sum(attn * seq, axis=1)
    f1 = jnp.maximum(context @ tp["c1_w"].T + tp["c1_b"], 0.0)
    f2 = jnp.maximum(f1 @ tp["c2_w"].T + tp["c2_b"], 0.0)
    return f2 @ tp["c3_w"].T + tp["c3_b"]


if __name__ == "__main__":
    key = jax.random.PRNGKey(0)
    k_x, k_p = jax.random.split(key)

    B, T = 2, 32                      # 32 -> 16 -> 8 -> 4 GRU timesteps
    x = jax.random.normal(k_x, (B, T, INPUT_SIZE), jnp.float32)
    tp = init_torch_params(k_p)
    kp = prep_kernel_params(tp)

    out = pulse_classifier_forward(x, kp)
    out = jax.block_until_ready(out)

    ref = reference_forward(x, tp)
    assert out.shape == (B, NUM_CLASSES)
    assert jnp.allclose(out, ref, rtol=3e-3, atol=3e-3), (out, ref)

    print("KERNEL_OK")
</pallas_src>

<mosaic_0001>
module attributes {stable_mosaic.version = 11 : i64} {
  func.func @pulse_classifier_kernel(%arg0: i32, %arg1: memref<2x32x4xf32, #tpu.memory_space<vmem>>, %arg2: memref<20x32xf32, #tpu.memory_space<vmem>>, %arg3: memref<1x32xf32, #tpu.memory_space<vmem>>, %arg4: memref<160x64xf32, #tpu.memory_space<vmem>>, %arg5: memref<1x64xf32, #tpu.memory_space<vmem>>, %arg6: memref<320x128xf32, #tpu.memory_space<vmem>>, %arg7: memref<1x128xf32, #tpu.memory_space<vmem>>, %arg8: memref<128x192xf32, #tpu.memory_space<vmem>>, %arg9: memref<1x192xf32, #tpu.memory_space<vmem>>, %arg10: memref<64x192xf32, #tpu.memory_space<vmem>>, %arg11: memref<1x192xf32, #tpu.memory_space<vmem>>, %arg12: memref<64x192xf32, #tpu.memory_space<vmem>>, %arg13: memref<1x192xf32, #tpu.memory_space<vmem>>, %arg14: memref<64x192xf32, #tpu.memory_space<vmem>>, %arg15: memref<1x192xf32, #tpu.memory_space<vmem>>, %arg16: memref<64x64xf32, #tpu.memory_space<vmem>>, %arg17: memref<1x64xf32, #tpu.memory_space<vmem>>, %arg18: memref<1x64xf32, #tpu.memory_space<vmem>>, %arg19: memref<1x1xf32, #tpu.memory_space<vmem>>, %arg20: memref<64x256xf32, #tpu.memory_space<vmem>>, %arg21: memref<1x256xf32, #tpu.memory_space<vmem>>, %arg22: memref<256x128xf32, #tpu.memory_space<vmem>>, %arg23: memref<1x128xf32, #tpu.memory_space<vmem>>, %arg24: memref<128x128xf32, #tpu.memory_space<vmem>>, %arg25: memref<1x128xf32, #tpu.memory_space<vmem>>, %arg26: memref<2x128xf32, #tpu.memory_space<vmem>>, %arg27: memref<2x42x20xf32, #tpu.memory_space<vmem>>, %arg28: memref<64x32xf32, #tpu.memory_space<vmem>>, %arg29: memref<2x26x160xf32, #tpu.memory_space<vmem>>, %arg30: memref<32x64xf32, #tpu.memory_space<vmem>>, %arg31: memref<2x18x320xf32, #tpu.memory_space<vmem>>, %arg32: memref<16x128xf32, #tpu.memory_space<vmem>>, %arg33: memref<32x128xf32, #tpu.memory_space<vmem>>, %arg34: memref<32x96xf32, #tpu.memory_space<vmem>>, %arg35: memref<32x96xf32, #tpu.memory_space<vmem>>, %arg36: memref<32x32xf32, #tpu.memory_space<vmem>>, %arg37: memref<32x32xf32, #tpu.memory_space<vmem>>, %arg38: memref<32x96xf32, #tpu.memory_space<vmem>>, %arg39: memref<32x96xf32, #tpu.memory_space<vmem>>, %arg40: memref<32x32xf32, #tpu.memory_space<vmem>>, %arg41: memref<32x32xf32, #tpu.memory_space<vmem>>) attributes {dimension_semantics = [#tpu.dimension_semantics<parallel>], iteration_bounds = array<i64: 1>, scalar_prefetch = 0 : i64, scratch_operands = 15 : i64, tpu.core_type = #tpu.core_type<tc>, window_params = [{transform_indices = @transform_0, window_bounds = array<i64: 2, 32, 4>}, {pipeline_mode = #tpu.pipeline_mode<synchronous>, transform_indices = @transform_1, window_bounds = array<i64: 20, 32>}, {pipeline_mode = #tpu.pipeline_mode<synchronous>, transform_indices = @transform_2, window_bounds = array<i64: 1, 32>}, {pipeline_mode = #tpu.pipeline_mode<synchronous>, transform_indices = @transform_3, window_bounds = array<i64: 160, 64>}, {pipeline_mode = #tpu.pipeline_mode<synchronous>, transform_indices = @transform_4, window_bounds = array<i64: 1, 64>}, {pipeline_mode = #tpu.pipeline_mode<synchronous>, transform_indices = @transform_5, window_bounds = array<i64: 320, 128>}, {pipeline_mode = #tpu.pipeline_mode<synchronous>, transform_indices = @transform_6, window_bounds = array<i64: 1, 128>}, {pipeline_mode = #tpu.pipeline_mode<synchronous>, transform_indices = @transform_7, window_bounds = array<i64: 128, 192>}, {pipeline_mode = #tpu.pipeline_mode<synchronous>, transform_indices = @transform_8, window_bounds = array<i64: 1, 192>}, {pipeline_mode = #tpu.pipeline_mode<synchronous>, transform_indices = @transform_9, window_bounds = array<i64: 64, 192>}, {pipeline_mode = #tpu.pipeline_mode<synchronous>, transform_indices = @transform_10, window_bounds = array<i64: 1, 192>}, {pipeline_mode = #tpu.pipeline_mode<synchronous>, transform_indices = @transform_11, window_bounds = array<i64: 64, 192>}, {pipeline_mode = #tpu.pipeline_mode<synchronous>, transform_indices = @transform_12, window_bounds = array<i64: 1, 192>}, {pipeline_mode = #tpu.pipeline_mode<synchronous>, transform_indices = @transform_13, window_bounds = array<i64: 64, 192>}, {pipeline_mode = #tpu.pipeline_mode<synchronous>, transform_indices = @transform_14, window_bounds = array<i64: 1, 192>}, {pipeline_mode = #tpu.pipeline_mode<synchronous>, transform_indices = @transform_15, window_bounds = array<i64: 64, 64>}, {pipeline_mode = #tpu.pipeline_mode<synchronous>, transform_indices = @transform_16, window_bounds = array<i64: 1, 64>}, {pipeline_mode = #tpu.pipeline_mode<synchronous>, transform_indices = @transform_17, window_bounds = array<i64: 1, 64>}, {pipeline_mode = #tpu.pipeline_mode<synchronous>, transform_indices = @transform_18, window_bounds = array<i64: 1, 1>}, {pipeline_mode = #tpu.pipeline_mode<synchronous>, transform_indices = @transform_19, window_bounds = array<i64: 64, 256>}, {pipeline_mode = #tpu.pipeline_mode<synchronous>, transform_indices = @transform_20, window_bounds = array<i64: 1, 256>}, {pipeline_mode = #tpu.pipeline_mode<synchronous>, transform_indices = @transform_21, window_bounds = array<i64: 256, 128>}, {pipeline_mode = #tpu.pipeline_mode<synchronous>, transform_indices = @transform_22, window_bounds = array<i64: 1, 128>}, {pipeline_mode = #tpu.pipeline_mode<synchronous>, transform_indices = @transform_23, window_bounds = array<i64: 128, 128>}, {pipeline_mode = #tpu.pipeline_mode<synchronous>, transform_indices = @transform_24, window_bounds = array<i64: 1, 128>}, {transform_indices = @transform_25, window_bounds = array<i64: 2, 128>}]} {
    %c0 = arith.constant 0 : index
    %c0_0 = arith.constant 0 : index
    %c0_1 = arith.constant 0 : index
    %0 = vector.load %arg1[%c0, %c0_0, %c0_1] : memref<2x32x4xf32, #tpu.memory_space<vmem>>, vector<2x32x4xf32>
    %cst = arith.constant 0.000000e+00 : f32
    %1 = vector.broadcast %cst : f32 to vector<2x2x20xf32>
    %c0_2 = arith.constant 0 : index
    %c8 = arith.constant 8 : index
    %c0_3 = arith.constant 0 : index
    %2 = vector.load %arg27[%c0_2, %c8, %c0_3] : memref<2x42x20xf32, #tpu.memory_space<vmem>>, vector<2x2x20xf32>
    tpu.vector_store %arg27[%c0_2, %c8, %c0_3], %1 {strides = array<i32>} : memref<2x42x20xf32, #tpu.memory_space<vmem>>, vector<2x2x20xf32>,
    %c0_4 = arith.constant 0 : index
    %c38 = arith.constant 38 : index
    %c0_5 = arith.constant 0 : index
    %3 = vector.load %arg27[%c0_4, %c38, %c0_5] : memref<2x42x20xf32, #tpu.memory_space<vmem>>, vector<2x2x20xf32>
    tpu.vector_store %arg27[%c0_4, %c38, %c0_5], %1 {strides = array<i32>} : memref<2x42x20xf32, #tpu.memory_space<vmem>>, vector<2x2x20xf32>,
    %c0_6 = arith.constant 0 : index
    %c10 = arith.constant 10 : index
    %c0_7 = arith.constant 0 : index
    %4 = vector.load %arg27[%c0_6, %c10, %c0_7] : memref<2x42x20xf32, #tpu.memory_space<vmem>>, vector<2x32x4xf32>
    tpu.vector_store %arg27[%c0_6, %c10, %c0_7], %0 {strides = array<i32>} : memref<2x42x20xf32, #tpu.memory_space<vmem>>, vector<2x32x4xf32>,
    %c0_8 = arith.constant 0 : index
    %c9 = arith.constant 9 : index
    %c4 = arith.constant 4 : index
    %5 = vector.load %arg27[%c0_8, %c9, %c4] : memref<2x42x20xf32, #tpu.memory_space<vmem>>, vector<2x32x4xf32>
    tpu.vector_store %arg27[%c0_8, %c9, %c4], %0 {strides = array<i32>} : memref<2x42x20xf32, #tpu.memory_space<vmem>>, vector<2x32x4xf32>,
    %c0_9 = arith.constant 0 : index
    %c8_10 = arith.constant 8 : index
    %c8_11 = arith.constant 8 : index
    %6 = vector.load %arg27[%c0_9, %c8_10, %c8_11] : memref<2x42x20xf32, #tpu.memory_space<vmem>>, vector<2x32x4xf32>
    tpu.vector_store %arg27[%c0_9, %c8_10, %c8_11], %0 {strides = array<i32>} : memref<2x42x20xf32, #tpu.memory_space<vmem>>, vector<2x32x4xf32>,
    %c0_12 = arith.constant 0 : index
    %c7 = arith.constant 7 : index
    %c12 = arith.constant 12 : index
    %7 = vector.load %arg27[%c0_12, %c7, %c12] : memref<2x42x20xf32, #tpu.memory_space<vmem>>, vector<2x32x4xf32>
    tpu.vector_store %arg27[%c0_12, %c7, %c12], %0 {strides = array<i32>} : memref<2x42x20xf32, #tpu.memory_space<vmem>>, vector<2x32x4xf32>,
    %c0_13 = arith.constant 0 : index
    %c6 = arith.constant 6 : index
    %c16 = arith.constant 16 : index
    %8 = vector.load %arg27[%c0_13, %c6, %c16] : memref<2x42x20xf32, #tpu.memory_space<vmem>>, vector<2x32x4xf32>
    tpu.vector_store %arg27[%c0_13, %c6, %c16], %0 {strides = array<i32>} : memref<2x42x20xf32, #tpu.memory_space<vmem>>, vector<2x32x4xf32>,
    %c0_14 = arith.constant 0 : index
    %c8_15 = arith.constant 8 : index
    %c0_16 = arith.constant 0 : index
    %9 = vector.load %arg27[%c0_14, %c8_15, %c0_16] : memref<2x42x20xf32, #tpu.memory_space<vmem>>, vector<2x32x20xf32>
    %10 = vector.shape_cast %9 : vector<2x32x20xf32> to vector<64x20xf32>
    %c0_17 = arith.constant 0 : index
    %c0_18 = arith.constant 0 : index
    %11 = vector.load %arg2[%c0_17, %c0_18] : memref<20x32xf32, #tpu.memory_space<vmem>>, vector<20x32xf32>
    %cst_19 = arith.constant dense<0.000000e+00> : vector<64x32xf32>
    %12 = tpu.matmul %10, %11, %cst_19 {dimension_numbers = #tpu.dot_dimension_numbers<[1], [0], [0], [1], [0, 0, 1, 1], [], []>} : vector<64x20xf32>, vector<20x32xf32>, vector<64x32xf32> -> vector<64x32xf32>
    %c0_20 = arith.constant 0 : index
    %c0_21 = arith.constant 0 : index
    %13 = vector.load %arg3[%c0_20, %c0_21] : memref<1x32xf32, #tpu.memory_space<vmem>>, vector<1x32xf32>
    %14 = vector.broadcast %13 : vector<1x32xf32> to vector<64x32xf32>
    %15 = arith.addf %12, %14 : vector<64x32xf32>
    %cst_22 = arith.constant 0.000000e+00 : f32
    %16 = vector.broadcast %cst_22 : f32 to vector<64x32xf32>
    %17 = arith.maximumf %15, %16 : vector<64x32xf32>
    %c0_23 = arith.constant 0 : index
    %c0_24 = arith.constant 0 : index
    %18 = vector.load %arg28[%c0_23, %c0_24] : memref<64x32xf32, #tpu.memory_space<vmem>>, vector<64x32xf32>
    tpu.vector_store %arg28[%c0_23, %c0_24], %17 {strides = array<i32>} : memref<64x32xf32, #tpu.memory_space<vmem>>, vector<64x32xf32>,
    %c0_25 = arith.constant 0 : index
    %c0_26 = arith.constant 0 : index
    %19 = tpu.strided_load %arg28[%c0_25, %c0_26] {strides = array<i32: 2, 1>} : memref<64x32xf32, #tpu.memory_space<vmem>>, vector<32x32xf32>
    %c1 = arith.constant 1 : index
    %c0_27 = arith.constant 0 : index
    %20 = tpu.strided_load %arg28[%c1, %c0_27] {strides = array<i32: 2, 1>} : memref<64x32xf32, #tpu.memory_space<vmem>>, vector<32x32xf32>
    %21 = arith.maximumf %19, %20 : vector<32x32xf32>
    %22 = vector.shape_cast %21 : vector<32x32xf32> to vector<2x16x32xf32>
    %cst_28 = arith.constant 0.000000e+00 : f32
    %23 = vector.broadcast %cst_28 : f32 to vector<2x2x160xf32>
    %c0_29 = arith.constant 0 : index
    %c8_30 = arith.constant 8 : index
    %c0_31 = arith.constant 0 : index
    %24 = vector.load %arg29[%c0_29, %c8_30, %c0_31] : memref<2x26x160xf32, #tpu.memory_space<vmem>>, vector<2x2x160xf32>
    tpu.vector_store %arg29[%c0_29, %c8_30, %c0_31], %23 {strides = array<i32>} : memref<2x26x160xf32, #tpu.memory_space<vmem>>, vector<2x2x160xf32>,
    %c0_32 = arith.constant 0 : index
    %c22 = arith.constant 22 : index
    %c0_33 = arith.constant 0 : index
    %25 = vector.load %arg29[%c0_32, %c22, %c0_33] : memref<2x26x160xf32, #tpu.memory_space<vmem>>, vector<2x2x160xf32>
    tpu.vector_store %arg29[%c0_32, %c22, %c0_33], %23 {strides = array<i32>} : memref<2x26x160xf32, #tpu.memory_space<vmem>>, vector<2x2x160xf32>,
    %c0_34 = arith.constant 0 : index
    %c10_35 = arith.constant 10 : index
    %c0_36 = arith.constant 0 : index
    %26 = vector.load %arg29[%c0_34, %c10_35, %c0_36] : memref<2x26x160xf32, #tpu.memory_space<vmem>>, vector<2x16x32xf32>
    tpu.vector_store %arg29[%c0_34, %c10_35, %c0_36], %22 {strides = array<i32>} : memref<2x26x160xf32, #tpu.memory_space<vmem>>, vector<2x16x32xf32>,
    %c0_37 = arith.constant 0 : index
    %c9_38 = arith.constant 9 : index
    %c32 = arith.constant 32 : index
    %27 = vector.load %arg29[%c0_37, %c9_38, %c32] : memref<2x26x160xf32, #tpu.memory_space<vmem>>, vector<2x16x32xf32>
    tpu.vector_store %arg29[%c0_37, %c9_38, %c32], %22 {strides = array<i32>} : memref<2x26x160xf32, #tpu.memory_space<vmem>>, vector<2x16x32xf32>,
    %c0_39 = arith.constant 0 : index
    %c8_40 = arith.constant 8 : index
    %c64 = arith.constant 64 : index
    %28 = vector.load %arg29[%c0_39, %c8_40, %c64] : memref<2x26x160xf32, #tpu.memory_space<vmem>>, vector<2x16x32xf32>
    tpu.vector_store %arg29[%c0_39, %c8_40, %c64], %22 {strides = array<i32>} : memref<2x26x160xf32, #tpu.memory_space<vmem>>, vector<2x16x32xf32>,
    %c0_41 = arith.constant 0 : index
    %c7_42 = arith.constant 7 : index
    %c96 = arith.constant 96 : index
    %29 = vector.load %arg29[%c0_41, %c7_42, %c96] : memref<2x26x160xf32, #tpu.memory_space<vmem>>, vector<2x16x32xf32>
    tpu.vector_store %arg29[%c0_41, %c7_42, %c96], %22 {strides = array<i32>} : memref<2x26x160xf32, #tpu.memory_space<vmem>>, vector<2x16x32xf32>,
    %c0_43 = arith.constant 0 : index
    %c6_44 = arith.constant 6 : index
    %c128 = arith.constant 128 : index
    %30 = vector.load %arg29[%c0_43, %c6_44, %c128] : memref<2x26x160xf32, #tpu.memory_space<vmem>>, vector<2x16x32xf32>
    tpu.vector_store %arg29[%c0_43, %c6_44, %c128], %22 {strides = array<i32>} : memref<2x26x160xf32, #tpu.memory_space<vmem>>, vector<2x16x32xf32>,
    %c0_45 = arith.constant 0 : index
    %c8_46 = arith.constant 8 : index
    %c0_47 = arith.constant 0 : index
    %31 = vector.load %arg29[%c0_45, %c8_46, %c0_47] : memref<2x26x160xf32, #tpu.memory_space<vmem>>, vector<2x16x160xf32>
    %32 = vector.shape_cast %31 : vector<2x16x160xf32> to vector<32x160xf32>
    %c0_48 = arith.constant 0 : index
    %c0_49 = arith.constant 0 : index
    %33 = vector.load %arg4[%c0_48, %c0_49] : memref<160x64xf32, #tpu.memory_space<vmem>>, vector<160x64xf32>
    %cst_50 = arith.constant dense<0.000000e+00> : vector<32x64xf32>
    %34 = tpu.matmul %32, %33, %cst_50 {dimension_numbers = #tpu.dot_dimension_numbers<[1], [0], [0], [1], [0, 0, 1, 1], [], []>} : vector<32x160xf32>, vector<160x64xf32>, vector<32x64xf32> -> vector<32x64xf32>
    %c0_51 = arith.constant 0 : index
    %c0_52 = arith.constant 0 : index
    %35 = vector.load %arg5[%c0_51, %c0_52] : memref<1x64xf32, #tpu.memory_space<vmem>>, vector<1x64xf32>
    %36 = vector.broadcast %35 : vector<1x64xf32> to vector<32x64xf32>
    %37 = arith.addf %34, %36 : vector<32x64xf32>
    %cst_53 = arith.constant 0.000000e+00 : f32
    %38 = vector.broadcast %cst_53 : f32 to vector<32x64xf32>
    %39 = arith.maximumf %37, %38 : vector<32x64xf32>
    %c0_54 = arith.constant 0 : index
    %c0_55 = arith.constant 0 : index
    %40 = vector.load %arg30[%c0_54, %c0_55] : memref<32x64xf32, #tpu.memory_space<vmem>>, vector<32x64xf32>
    tpu.vector_store %arg30[%c0_54, %c0_55], %39 {strides = array<i32>} : memref<32x64xf32, #tpu.memory_space<vmem>>, vector<32x64xf32>,
    %c0_56 = arith.constant 0 : index
    %c0_57 = arith.constant 0 : index
    %41 = tpu.strided_load %arg30[%c0_56, %c0_57] {strides = array<i32: 2, 1>} : memref<32x64xf32, #tpu.memory_space<vmem>>, vector<16x64xf32>
    %c1_58 = arith.constant 1 : index
    %c0_59 = arith.constant 0 : index
    %42 = tpu.strided_load %arg30[%c1_58, %c0_59] {strides = array<i32: 2, 1>} : memref<32x64xf32, #tpu.memory_space<vmem>>, vector<16x64xf32>
    %43 = arith.maximumf %41, %42 : vector<16x64xf32>
    %44 = vector.shape_cast %43 : vector<16x64xf32> to vector<2x8x64xf32>
    %cst_60 = arith.constant 0.000000e+00 : f32
    %45 = vector.broadcast %cst_60 : f32 to vector<2x2x320xf32>
    %c0_61 = arith.constant 0 : index
    %c8_62 = arith.constant 8 : index
    %c0_63 = arith.constant 0 : index
    %46 = vector.load %arg31[%c0_61, %c8_62, %c0_63] : memref<2x18x320xf32, #tpu.memory_space<vmem>>, vector<2x2x320xf32>
    tpu.vector_store %arg31[%c0_61, %c8_62, %c0_63], %45 {strides = array<i32>} : memref<2x18x320xf32, #tpu.memory_space<vmem>>, vector<2x2x320xf32>,
    %c0_64 = arith.constant 0 : index
    %c14 = arith.constant 14 : index
    %c0_65 = arith.constant 0 : index
    %47 = vector.load %arg31[%c0_64, %c14, %c0_65] : memref<2x18x320xf32, #tpu.memory_space<vmem>>, vector<2x2x320xf32>
    tpu.vector_store %arg31[%c0_64, %c14, %c0_65], %45 {strides = array<i32>} : memref<2x18x320xf32, #tpu.memory_space<vmem>>, vector<2x2x320xf32>,
    %c0_66 = arith.constant 0 : index
    %c10_67 = arith.constant 10 : index
    %c0_68 = arith.constant 0 : index
    %48 = vector.load %arg31[%c0_66, %c10_67, %c0_68] : memref<2x18x320xf32, #tpu.memory_space<vmem>>, vector<2x8x64xf32>
    tpu.vector_store %arg31[%c0_66, %c10_67, %c0_68], %44 {strides = array<i32>} : memref<2x18x320xf32, #tpu.memory_space<vmem>>, vector<2x8x64xf32>,
    %c0_69 = arith.constant 0 : index
    %c9_70 = arith.constant 9 : index
    %c64_71 = arith.constant 64 : index
    %49 = vector.load %arg31[%c0_69, %c9_70, %c64_71] : memref<2x18x320xf32, #tpu.memory_space<vmem>>, vector<2x8x64xf32>
    tpu.vector_store %arg31[%c0_69, %c9_70, %c64_71], %44 {strides = array<i32>} : memref<2x18x320xf32, #tpu.memory_space<vmem>>, vector<2x8x64xf32>,
    %c0_72 = arith.constant 0 : index
    %c8_73 = arith.constant 8 : index
    %c128_74 = arith.constant 128 : index
    %50 = vector.load %arg31[%c0_72, %c8_73, %c128_74] : memref<2x18x320xf32, #tpu.memory_space<vmem>>, vector<2x8x64xf32>
    tpu.vector_store %arg31[%c0_72, %c8_73, %c128_74], %44 {strides = array<i32>} : memref<2x18x320xf32, #tpu.memory_space<vmem>>, vector<2x8x64xf32>,
    %c0_75 = arith.constant 0 : index
    %c7_76 = arith.constant 7 : index
    %c192 = arith.constant 192 : index
    %51 = vector.load %arg31[%c0_75, %c7_76, %c192] : memref<2x18x320xf32, #tpu.memory_space<vmem>>, vector<2x8x64xf32>
    tpu.vector_store %arg31[%c0_75, %c7_76, %c192], %44 {strides = array<i32>} : memref<2x18x320xf32, #tpu.memory_space<vmem>>, vector<2x8x64xf32>,
    %c0_77 = arith.constant 0 : index
    %c6_78 = arith.constant 6 : index
    %c256 = arith.constant 256 : index
    %52 = vector.load %arg31[%c0_77, %c6_78, %c256] : memref<2x18x320xf32, #tpu.memory_space<vmem>>, vector<2x8x64xf32>
    tpu.vector_store %arg31[%c0_77, %c6_78, %c256], %44 {strides = array<i32>} : memref<2x18x320xf32, #tpu.memory_space<vmem>>, vector<2x8x64xf32>,
    %c0_79 = arith.constant 0 : index
    %c8_80 = arith.constant 8 : index
    %c0_81 = arith.constant 0 : index
    %53 = vector.load %arg31[%c0_79, %c8_80, %c0_81] : memref<2x18x320xf32, #tpu.memory_space<vmem>>, vector<2x8x320xf32>
    %54 = vector.shape_cast %53 : vector<2x8x320xf32> to vector<16x320xf32>
    %c0_82 = arith.constant 0 : index
    %c0_83 = arith.constant 0 : index
    %55 = vector.load %arg6[%c0_82, %c0_83] : memref<320x128xf32, #tpu.memory_space<vmem>>, vector<320x128xf32>
    %cst_84 = arith.constant dense<0.000000e+00> : vector<16x128xf32>
    %56 = tpu.matmul %54, %55, %cst_84 {dimension_numbers = #tpu.dot_dimension_numbers<[1], [0], [0], [1], [0, 0, 1, 1], [], []>} : vector<16x320xf32>, vector<320x128xf32>, vector<16x128xf32> -> vector<16x128xf32>
    %c0_85 = arith.constant 0 : index
    %c0_86 = arith.constant 0 : index
    %57 = vector.load %arg7[%c0_85, %c0_86] : memref<1x128xf32, #tpu.memory_space<vmem>>, vector<1x128xf32>
    %58 = vector.broadcast %57 : vector<1x128xf32> to vector<16x128xf32>
    %59 = arith.addf %56, %58 : vector<16x128xf32>
    %cst_87 = arith.constant 0.000000e+00 : f32
    %60 = vector.broadcast %cst_87 : f32 to vector<16x128xf32>
    %61 = arith.maximumf %59, %60 : vector<16x128xf32>
    %c0_88 = arith.constant 0 : index
    %c0_89 = arith.constant 0 : index
    %62 = vector.load %arg32[%c0_88, %c0_89] : memref<16x128xf32, #tpu.memory_space<vmem>>, vector<16x128xf32>
    tpu.vector_store %arg32[%c0_88, %c0_89], %61 {strides = array<i32>} : memref<16x128xf32, #tpu.memory_space<vmem>>, vector<16x128xf32>,
    %c0_90 = arith.constant 0 : index
    %c0_91 = arith.constant 0 : index
    %63 = tpu.strided_load %arg32[%c0_90, %c0_91] {strides = array<i32: 8, 1>} : memref<16x128xf32, #tpu.memory_space<vmem>>, vector<2x128xf32>
    %c1_92 = arith.constant 1 : index
    %c0_93 = arith.constant 0 : index
    %64 = tpu.strided_load %arg32[%c1_92, %c0_93] {strides = array<i32: 8, 1>} : memref<16x128xf32, #tpu.memory_space<vmem>>, vector<2x128xf32>
    %65 = arith.maximumf %63, %64 : vector<2x128xf32>
    %c0_94 = arith.constant 0 : index
    %c0_95 = arith.constant 0 : index
    %66 = vector.load %arg33[%c0_94, %c0_95] : memref<32x128xf32, #tpu.memory_space<vmem>>, vector<2x128xf32>
    tpu.vector_store %arg33[%c0_94, %c0_95], %65 {strides = array<i32>} : memref<32x128xf32, #tpu.memory_space<vmem>>, vector<2x128xf32>,
    %c2 = arith.constant 2 : index
    %c0_96 = arith.constant 0 : index
    %67 = tpu.strided_load %arg32[%c2, %c0_96] {strides = array<i32: 8, 1>} : memref<16x128xf32, #tpu.memory_space<vmem>>, vector<2x128xf32>
    %c3 = arith.constant 3 : index
    %c0_97 = arith.constant 0 : index
    %68 = tpu.strided_load %arg32[%c3, %c0_97] {strides = array<i32: 8, 1>} : memref<16x128xf32, #tpu.memory_space<vmem>>, vector<2x128xf32>
    %69 = arith.maximumf %67, %68 : vector<2x128xf32>
    %c8_98 = arith.constant 8 : index
    %c0_99 = arith.constant 0 : index
    %70 = vector.load %arg33[%c8_98, %c0_99] : memref<32x128xf32, #tpu.memory_space<vmem>>, vector<2x128xf32>
    tpu.vector_store %arg33[%c8_98, %c0_99], %69 {strides = array<i32>} : memref<32x128xf32, #tpu.memory_space<vmem>>, vector<2x128xf32>,
    %c4_100 = arith.constant 4 : index
    %c0_101 = arith.constant 0 : index
    %71 = tpu.strided_load %arg32[%c4_100, %c0_101] {strides = array<i32: 8, 1>} : memref<16x128xf32, #tpu.memory_space<vmem>>, vector<2x128xf32>
    %c5 = arith.constant 5 : index
    %c0_102 = arith.constant 0 : index
    %72 = tpu.strided_load %arg32[%c5, %c0_102] {strides = array<i32: 8, 1>} : memref<16x128xf32, #tpu.memory_space<vmem>>, vector<2x128xf32>
    %73 = arith.maximumf %71, %72 : vector<2x128xf32>
    %c16_103 = arith.constant 16 : index
    %c0_104 = arith.constant 0 : index
    %74 = vector.load %arg33[%c16_103, %c0_104] : memref<32x128xf32, #tpu.memory_space<vmem>>, vector<2x128xf32>
    tpu.vector_store %arg33[%c16_103, %c0_104], %73 {strides = array<i32>} : memref<32x128xf32, #tpu.memory_space<vmem>>, vector<2x128xf32>,
    %c6_105 = arith.constant 6 : index
    %c0_106 = arith.constant 0 : index
    %75 = tpu.strided_load %arg32[%c6_105, %c0_106] {strides = array<i32: 8, 1>} : memref<16x128xf32, #tpu.memory_space<vmem>>, vector<2x128xf32>
    %c7_107 = arith.constant 7 : index
    %c0_108 = arith.constant 0 : index
    %76 = tpu.strided_load %arg32[%c7_107, %c0_108] {strides = array<i32: 8, 1>} : memref<16x128xf32, #tpu.memory_space<vmem>>, vector<2x128xf32>
    %77 = arith.maximumf %75, %76 : vector<2x128xf32>
    %c24 = arith.constant 24 : index
    %c0_109 = arith.constant 0 : index
    %78 = vector.load %arg33[%c24, %c0_109] : memref<32x128xf32, #tpu.memory_space<vmem>>, vector<2x128xf32>
    tpu.vector_store %arg33[%c24, %c0_109], %77 {strides = array<i32>} : memref<32x128xf32, #tpu.memory_space<vmem>>, vector<2x128xf32>,
    %c0_110 = arith.constant 0 : index
    %c0_111 = arith.constant 0 : index
    %79 = vector.load %arg33[%c0_110, %c0_111] : memref<32x128xf32, #tpu.memory_space<vmem>>, vector<32x128xf32>
    %c0_112 = arith.constant 0 : index
    %c0_113 = arith.constant 0 : index
    %80 = vector.load %arg8[%c0_112, %c0_113] : memref<128x192xf32, #tpu.memory_space<vmem>>, vector<128x192xf32>
    %cst_114 = arith.constant dense<0.000000e+00> : vector<32x192xf32>
    %81 = tpu.matmul %79, %80, %cst_114 {dimension_numbers = #tpu.dot_dimension_numbers<[1], [0], [0], [1], [0, 0, 1, 1], [], []>} : vector<32x128xf32>, vector<128x192xf32>, vector<32x192xf32> -> vector<32x192xf32>
    %c0_115 = arith.constant 0 : index
    %c0_116 = arith.constant 0 : index
    %82 = vector.load %arg9[%c0_115, %c0_116] : memref<1x192xf32, #tpu.memory_space<vmem>>, vector<1x192xf32>
    %83 = vector.broadcast %82 : vector<1x192xf32> to vector<32x192xf32>
    %84 = arith.addf %81, %83 : vector<32x192xf32>
    %85 = vector.extract_strided_slice %84 {offsets = [0, 0], sizes = [32, 96], strides = [1, 1]} : vector<32x192xf32> to vector<32x96xf32>
    %c0_117 = arith.constant 0 : index
    %c0_118 = arith.constant 0 : index
    %86 = vector.load %arg34[%c0_117, %c0_118] : memref<32x96xf32, #tpu.memory_space<vmem>>, vector<32x96xf32>
    tpu.vector_store %arg34[%c0_117, %c0_118], %85 {strides = array<i32>} : memref<32x96xf32, #tpu.memory_space<vmem>>, vector<32x96xf32>,
    %87 = vector.extract_strided_slice %84 {offsets = [0, 96], sizes = [32, 96], strides = [1, 1]} : vector<32x192xf32> to vector<32x96xf32>
    %c0_119 = arith.constant 0 : index
    %c0_120 = arith.constant 0 : index
    %88 = vector.load %arg35[%c0_119, %c0_120] : memref<32x96xf32, #tpu.memory_space<vmem>>, vector<32x96xf32>
    tpu.vector_store %arg35[%c0_119, %c0_120], %87 {strides = array<i32>} : memref<32x96xf32, #tpu.memory_space<vmem>>, vector<32x96xf32>,
    %cst_121 = arith.constant 0.000000e+00 : f32
    %89 = vector.broadcast %cst_121 : f32 to vector<2x64xf32>
    %c0_122 = arith.constant 0 : index
    %c0_123 = arith.constant 0 : index
    %90 = vector.load %arg34[%c0_122, %c0_123] : memref<32x96xf32, #tpu.memory_space<vmem>>, vector<2x96xf32>
    %c24_124 = arith.constant 24 : index
    %c0_125 = arith.constant 0 : index
    %91 = vector.load %arg35[%c24_124, %c0_125] : memref<32x96xf32, #tpu.memory_space<vmem>>, vector<2x96xf32>
    %c0_126 = arith.constant 0 : index
    %c0_127 = arith.constant 0 : index
    %92 = vector.load %arg10[%c0_126, %c0_127] : memref<64x192xf32, #tpu.memory_space<vmem>>, vector<64x192xf32>
    %cst_128 = arith.constant dense<0.000000e+00> : vector<2x192xf32>
    %93 = tpu.matmul %89, %92, %cst_128 {dimension_numbers = #tpu.dot_dimension_numbers<[1], [0], [0], [1], [0, 0, 1, 1], [], []>} : vector<2x64xf32>, vector<64x192xf32>, vector<2x192xf32> -> vector<2x192xf32>
    %c0_129 = arith.constant 0 : index
    %c0_130 = arith.constant 0 : index
    %94 = vector.load %arg11[%c0_129, %c0_130] : memref<1x192xf32, #tpu.memory_space<vmem>>, vector<1x192xf32>
    %95 = vector.broadcast %94 : vector<1x192xf32> to vector<2x192xf32>
    %96 = arith.addf %93, %95 : vector<2x192xf32>
    %97 = vector.extract_strided_slice %96 {offsets = [0, 0], sizes = [2, 96], strides = [1, 1]} : vector<2x192xf32> to vector<2x96xf32>
    %98 = vector.extract_strided_slice %89 {offsets = [0, 0], sizes = [2, 32], strides = [1, 1]} : vector<2x64xf32> to vector<2x32xf32>
    %99 = vector.extract_strided_slice %90 {offsets = [0, 0], sizes = [2, 32], strides = [1, 1]} : vector<2x96xf32> to vector<2x32xf32>
    %100 = vector.extract_strided_slice %97 {offsets = [0, 0], sizes = [2, 32], strides = [1, 1]} : vector<2x96xf32> to vector<2x32xf32>
    %101 = arith.addf %99, %100 : vector<2x32xf32>
    %102 = arith.negf %101 : vector<2x32xf32>
    %103 = math.exp %102 : vector<2x32xf32>
    %cst_131 = arith.constant 1.000000e+00 : f32
    %104 = vector.broadcast %cst_131 : f32 to vector<2x32xf32>
    %105 = arith.addf %104, %103 : vector<2x32xf32>
    %106 = arith.divf %104, %105 : vector<2x32xf32>
    %107 = vector.extract_strided_slice %90 {offsets = [0, 32], sizes = [2, 32], strides = [1, 1]} : vector<2x96xf32> to vector<2x32xf32>
    %108 = vector.extract_strided_slice %97 {offsets = [0, 32], sizes = [2, 32], strides = [1, 1]} : vector<2x96xf32> to vector<2x32xf32>
    %109 = arith.addf %107, %108 : vector<2x32xf32>
    %110 = arith.negf %109 : vector<2x32xf32>
    %111 = math.exp %110 : vector<2x32xf32>
    %cst_132 = arith.constant 1.000000e+00 : f32
    %112 = vector.broadcast %cst_132 : f32 to vector<2x32xf32>
    %113 = arith.addf %112, %111 : vector<2x32xf32>
    %114 = arith.divf %112, %113 : vector<2x32xf32>
    %115 = vector.extract_strided_slice %90 {offsets = [0, 64], sizes = [2, 32], strides = [1, 1]} : vector<2x96xf32> to vector<2x32xf32>
    %116 = vector.extract_strided_slice %97 {offsets = [0, 64], sizes = [2, 32], strides = [1, 1]} : vector<2x96xf32> to vector<2x32xf32>
    %117 = arith.mulf %106, %116 : vector<2x32xf32>
    %118 = arith.addf %115, %117 : vector<2x32xf32>
    %119 = math.tanh %118 : vector<2x32xf32>
    %cst_133 = arith.constant 1.000000e+00 : f32
    %120 = vector.broadcast %cst_133 : f32 to vector<2x32xf32>
    %121 = arith.subf %120, %114 : vector<2x32xf32>
    %122 = arith.mulf %121, %119 : vector<2x32xf32>
    %123 = arith.mulf %114, %98 : vector<2x32xf32>
    %124 = arith.addf %122, %123 : vector<2x32xf32>
    %125 = vector.extract_strided_slice %96 {offsets = [0, 96], sizes = [2, 96], strides = [1, 1]} : vector<2x192xf32> to vector<2x96xf32>
    %126 = vector.extract_strided_slice %89 {offsets = [0, 32], sizes = [2, 32], strides = [1, 1]} : vector<2x64xf32> to vector<2x32xf32>
    %127 = vector.extract_strided_slice %91 {offsets = [0, 0], sizes = [2, 32], strides = [1, 1]} : vector<2x96xf32> to vector<2x32xf32>
    %128 = vector.extract_strided_slice %125 {offsets = [0, 0], sizes = [2, 32], strides = [1, 1]} : vector<2x96xf32> to vector<2x32xf32>
    %129 = arith.addf %127, %128 : vector<2x32xf32>
    %130 = arith.negf %129 : vector<2x32xf32>
    %131 = math.exp %130 : vector<2x32xf32>
    %cst_134 = arith.constant 1.000000e+00 : f32
    %132 = vector.broadcast %cst_134 : f32 to vector<2x32xf32>
    %133 = arith.addf %132, %131 : vector<2x32xf32>
    %134 = arith.divf %132, %133 : vector<2x32xf32>
    %135 = vector.extract_strided_slice %91 {offsets = [0, 32], sizes = [2, 32], strides = [1, 1]} : vector<2x96xf32> to vector<2x32xf32>
    %136 = vector.extract_strided_slice %125 {offsets = [0, 32], sizes = [2, 32], strides = [1, 1]} : vector<2x96xf32> to vector<2x32xf32>
    %137 = arith.addf %135, %136 : vector<2x32xf32>
    %138 = arith.negf %137 : vector<2x32xf32>
    %139 = math.exp %138 : vector<2x32xf32>
    %cst_135 = arith.constant 1.000000e+00 : f32
    %140 = vector.broadcast %cst_135 : f32 to vector<2x32xf32>
    %141 = arith.addf %140, %139 : vector<2x32xf32>
    %142 = arith.divf %140, %141 : vector<2x32xf32>
    %143 = vector.extract_strided_slice %91 {offsets = [0, 64], sizes = [2, 32], strides = [1, 1]} : vector<2x96xf32> to vector<2x32xf32>
    %144 = vector.extract_strided_slice %125 {offsets = [0, 64], sizes = [2, 32], strides = [1, 1]} : vector<2x96xf32> to vector<2x32xf32>
    %145 = arith.mulf %134, %144 : vector<2x32xf32>
    %146 = arith.addf %143, %145 : vector<2x32xf32>
    %147 = math.tanh %146 : vector<2x32xf32>
    %cst_136 = arith.constant 1.000000e+00 : f32
    %148 = vector.broadcast %cst_136 : f32 to vector<2x32xf32>
    %149 = arith.subf %148, %142 : vector<2x32xf32>
    %150 = arith.mulf %149, %147 : vector<2x32xf32>
    %151 = arith.mulf %142, %126 : vector<2x32xf32>
    %152 = arith.addf %150, %151 : vector<2x32xf32>
    %c0_137 = arith.constant 0 : index
    %c0_138 = arith.constant 0 : index
    %153 = vector.load %arg36[%c0_137, %c0_138] : memref<32x32xf32, #tpu.memory_space<vmem>>, vector<2x32xf32>
    tpu.vector_store %arg36[%c0_137, %c0_138], %124 {strides = array<i32>} : memref<32x32xf32, #tpu.memory_space<vmem>>, vector<2x32xf32>,
    %c24_139 = arith.constant 24 : index
    %c0_140 = arith.constant 0 : index
    %154 = vector.load %arg37[%c24_139, %c0_140] : memref<32x32xf32, #tpu.memory_space<vmem>>, vector<2x32xf32>
    tpu.vector_store %arg37[%c24_139, %c0_140], %152 {strides = array<i32>} : memref<32x32xf32, #tpu.memory_space<vmem>>, vector<2x32xf32>,
    %155 = tpu.concatenate %124, %152 in 1 : vector<2x32xf32>, vector<2x32xf32> -> vector<2x64xf32>
    %c8_141 = arith.constant 8 : index
    %c0_142 = arith.constant 0 : index
    %156 = vector.load %arg34[%c8_141, %c0_142] : memref<32x96xf32, #tpu.memory_space<vmem>>, vector<2x96xf32>
    %c16_143 = arith.constant 16 : index
    %c0_144 = arith.constant 0 : index
    %157 = vector.load %arg35[%c16_143, %c0_144] : memref<32x96xf32, #tpu.memory_space<vmem>>, vector<2x96xf32>
    %c0_145 = arith.constant 0 : index
    %c0_146 = arith.constant 0 : index
    %158 = vector.load %arg10[%c0_145, %c0_146] : memref<64x192xf32, #tpu.memory_space<vmem>>, vector<64x192xf32>
    %cst_147 = arith.constant dense<0.000000e+00> : vector<2x192xf32>
    %159 = tpu.matmul %155, %158, %cst_147 {dimension_numbers = #tpu.dot_dimension_numbers<[1], [0], [0], [1], [0, 0, 1, 1], [], []>} : vector<2x64xf32>, vector<64x192xf32>, vector<2x192xf32> -> vector<2x192xf32>
    %c0_148 = arith.constant 0 : index
    %c0_149 = arith.constant 0 : index
    %160 = vector.load %arg11[%c0_148, %c0_149] : memref<1x192xf32, #tpu.memory_space<vmem>>, vector<1x192xf32>
    %161 = vector.broadcast %160 : vector<1x192xf32> to vector<2x192xf32>
    %162 = arith.addf %159, %161 : vector<2x192xf32>
    %163 = vector.extract_strided_slice %162 {offsets = [0, 0], sizes = [2, 96], strides = [1, 1]} : vector<2x192xf32> to vector<2x96xf32>
    %164 = vector.extract_strided_slice %155 {offsets = [0, 0], sizes = [2, 32], strides = [1, 1]} : vector<2x64xf32> to vector<2x32xf32>
    %165 = vector.extract_strided_slice %156 {offsets = [0, 0], sizes = [2, 32], strides = [1, 1]} : vector<2x96xf32> to vector<2x32xf32>
    %166 = vector.extract_strided_slice %163 {offsets = [0, 0], sizes = [2, 32], strides = [1, 1]} : vector<2x96xf32> to vector<2x32xf32>
    %167 = arith.addf %165, %166 : vector<2x32xf32>
    %168 = arith.negf %167 : vector<2x32xf32>
    %169 = math.exp %168 : vector<2x32xf32>
    %cst_150 = arith.constant 1.000000e+00 : f32
    %170 = vector.broadcast %cst_150 : f32 to vector<2x32xf32>
    %171 = arith.addf %170, %169 : vector<2x32xf32>
    %172 = arith.divf %170, %171 : vector<2x32xf32>
    %173 = vector.extract_strided_slice %156 {offsets = [0, 32], sizes = [2, 32], strides = [1, 1]} : vector<2x96xf32> to vector<2x32xf32>
    %174 = vector.extract_strided_slice %163 {offsets = [0, 32], sizes = [2, 32], strides = [1, 1]} : vector<2x96xf32> to vector<2x32xf32>
    %175 = arith.addf %173, %174 : vector<2x32xf32>
    %176 = arith.negf %175 : vector<2x32xf32>
    %177 = math.exp %176 : vector<2x32xf32>
    %cst_151 = arith.constant 1.000000e+00 : f32
    %178 = vector.broadcast %cst_151 : f32 to vector<2x32xf32>
    %179 = arith.addf %178, %177 : vector<2x32xf32>
    %180 = arith.divf %178, %179 : vector<2x32xf32>
    %181 = vector.extract_strided_slice %156 {offsets = [0, 64], sizes = [2, 32], strides = [1, 1]} : vector<2x96xf32> to vector<2x32xf32>
    %182 = vector.extract_strided_slice %163 {offsets = [0, 64], sizes = [2, 32], strides = [1, 1]} : vector<2x96xf32> to vector<2x32xf32>
    %183 = arith.mulf %172, %182 : vector<2x32xf32>
    %184 = arith.addf %181, %183 : vector<2x32xf32>
    %185 = math.tanh %184 : vector<2x32xf32>
    %cst_152 = arith.constant 1.000000e+00 : f32
    %186 = vector.broadcast %cst_152 : f32 to vector<2x32xf32>
    %187 = arith.subf %186, %180 : vector<2x32xf32>
    %188 = arith.mulf %187, %185 : vector<2x32xf32>
    %189 = arith.mulf %180, %164 : vector<2x32xf32>
    %190 = arith.addf %188, %189 : vector<2x32xf32>
    %191 = vector.extract_strided_slice %162 {offsets = [0, 96], sizes = [2, 96], strides = [1, 1]} : vector<2x192xf32> to vector<2x96xf32>
    %192 = vector.extract_strided_slice %155 {offsets = [0, 32], sizes = [2, 32], strides = [1, 1]} : vector<2x64xf32> to vector<2x32xf32>
    %193 = vector.extract_strided_slice %157 {offsets = [0, 0], sizes = [2, 32], strides = [1, 1]} : vector<2x96xf32> to vector<2x32xf32>
    %194 = vector.extract_strided_slice %191 {offsets = [0, 0], sizes = [2, 32], strides = [1, 1]} : vector<2x96xf32> to vector<2x32xf32>
    %195 = arith.addf %193, %194 : vector<2x32xf32>
    %196 = arith.negf %195 : vector<2x32xf32>
    %197 = math.exp %196 : vector<2x32xf32>
    %cst_153 = arith.constant 1.000000e+00 : f32
    %198 = vector.broadcast %cst_153 : f32 to vector<2x32xf32>
    %199 = arith.addf %198, %197 : vector<2x32xf32>
    %200 = arith.divf %198, %199 : vector<2x32xf32>
    %201 = vector.extract_strided_slice %157 {offsets = [0, 32], sizes = [2, 32], strides = [1, 1]} : vector<2x96xf32> to vector<2x32xf32>
    %202 = vector.extract_strided_slice %191 {offsets = [0, 32], sizes = [2, 32], strides = [1, 1]} : vector<2x96xf32> to vector<2x32xf32>
    %203 = arith.addf %201, %202 : vector<2x32xf32>
    %204 = arith.negf %203 : vector<2x32xf32>
    %205 = math.exp %204 : vector<2x32xf32>
    %cst_154 = arith.constant 1.000000e+00 : f32
    %206 = vector.broadcast %cst_154 : f32 to vector<2x32xf32>
    %207 = arith.addf %206, %205 : vector<2x32xf32>
    %208 = arith.divf %206, %207 : vector<2x32xf32>
    %209 = vector.extract_strided_slice %157 {offsets = [0, 64], sizes = [2, 32], strides = [1, 1]} : vector<2x96xf32> to vector<2x32xf32>
    %210 = vector.extract_strided_slice %191 {offsets = [0, 64], sizes = [2, 32], strides = [1, 1]} : vector<2x96xf32> to vector<2x32xf32>
    %211 = arith.mulf %200, %210 : vector<2x32xf32>
    %212 = arith.addf %209, %211 : vector<2x32xf32>
    %213 = math.tanh %212 : vector<2x32xf32>
    %cst_155 = arith.constant 1.000000e+00 : f32
    %214 = vector.broadcast %cst_155 : f32 to vector<2x32xf32>
    %215 = arith.subf %214, %208 : vector<2x32xf32>
    %216 = arith.mulf %215, %213 : vector<2x32xf32>
    %217 = arith.mulf %208, %192 : vector<2x32xf32>
    %218 = arith.addf %216, %217 : vector<2x32xf32>
    %c8_156 = arith.constant 8 : index
    %c0_157 = arith.constant 0 : index
    %219 = vector.load %arg36[%c8_156, %c0_157] : memref<32x32xf32, #tpu.memory_space<vmem>>, vector<2x32xf32>
    tpu.vector_store %arg36[%c8_156, %c0_157], %190 {strides = array<i32>} : memref<32x32xf32, #tpu.memory_space<vmem>>, vector<2x32xf32>,
    %c16_158 = arith.constant 16 : index
    %c0_159 = arith.constant 0 : index
    %220 = vector.load %arg37[%c16_158, %c0_159] : memref<32x32xf32, #tpu.memory_space<vmem>>, vector<2x32xf32>
    tpu.vector_store %arg37[%c16_158, %c0_159], %218 {strides = array<i32>} : memref<32x32xf32, #tpu.memory_space<vmem>>, vector<2x32xf32>,
    %221 = tpu.concatenate %190, %218 in 1 : vector<2x32xf32>, vector<2x32xf32> -> vector<2x64xf32>
    %c16_160 = arith.constant 16 : index
    %c0_161 = arith.constant 0 : index
    %222 = vector.load %arg34[%c16_160, %c0_161] : memref<32x96xf32, #tpu.memory_space<vmem>>, vector<2x96xf32>
    %c8_162 = arith.constant 8 : index
    %c0_163 = arith.constant 0 : index
    %223 = vector.load %arg35[%c8_162, %c0_163] : memref<32x96xf32, #tpu.memory_space<vmem>>, vector<2x96xf32>
    %c0_164 = arith.constant 0 : index
    %c0_165 = arith.constant 0 : index
    %224 = vector.load %arg10[%c0_164, %c0_165] : memref<64x192xf32, #tpu.memory_space<vmem>>, vector<64x192xf32>
    %cst_166 = arith.constant dense<0.000000e+00> : vector<2x192xf32>
    %225 = tpu.matmul %221, %224, %cst_166 {dimension_numbers = #tpu.dot_dimension_numbers<[1], [0], [0], [1], [0, 0, 1, 1], [], []>} : vector<2x64xf32>, vector<64x192xf32>, vector<2x192xf32> -> vector<2x192xf32>
    %c0_167 = arith.constant 0 : index
    %c0_168 = arith.constant 0 : index
    %226 = vector.load %arg11[%c0_167, %c0_168] : memref<1x192xf32, #tpu.memory_space<vmem>>, vector<1x192xf32>
    %227 = vector.broadcast %226 : vector<1x192xf32> to vector<2x192xf32>
    %228 = arith.addf %225, %227 : vector<2x192xf32>
    %229 = vector.extract_strided_slice %228 {offsets = [0, 0], sizes = [2, 96], strides = [1, 1]} : vector<2x192xf32> to vector<2x96xf32>
    %230 = vector.extract_strided_slice %221 {offsets = [0, 0], sizes = [2, 32], strides = [1, 1]} : vector<2x64xf32> to vector<2x32xf32>
    %231 = vector.extract_strided_slice %222 {offsets = [0, 0], sizes = [2, 32], strides = [1, 1]} : vector<2x96xf32> to vector<2x32xf32>
    %232 = vector.extract_strided_slice %229 {offsets = [0, 0], sizes = [2, 32], strides = [1, 1]} : vector<2x96xf32> to vector<2x32xf32>
    %233 = arith.addf %231, %232 : vector<2x32xf32>
    %234 = arith.negf %233 : vector<2x32xf32>
    %235 = math.exp %234 : vector<2x32xf32>
    %cst_169 = arith.constant 1.000000e+00 : f32
    %236 = vector.broadcast %cst_169 : f32 to vector<2x32xf32>
    %237 = arith.addf %236, %235 : vector<2x32xf32>
    %238 = arith.divf %236, %237 : vector<2x32xf32>
    %239 = vector.extract_strided_slice %222 {offsets = [0, 32], sizes = [2, 32], strides = [1, 1]} : vector<2x96xf32> to vector<2x32xf32>
    %240 = vector.extract_strided_slice %229 {offsets = [0, 32], sizes = [2, 32], strides = [1, 1]} : vector<2x96xf32> to vector<2x32xf32>
    %241 = arith.addf %239, %240 : vector<2x32xf32>
    %242 = arith.negf %241 : vector<2x32xf32>
    %243 = math.exp %242 : vector<2x32xf32>
    %cst_170 = arith.constant 1.000000e+00 : f32
    %244 = vector.broadcast %cst_170 : f32 to vector<2x32xf32>
    %245 = arith.addf %244, %243 : vector<2x32xf32>
    %246 = arith.divf %244, %245 : vector<2x32xf32>
    %247 = vector.extract_strided_slice %222 {offsets = [0, 64], sizes = [2, 32], strides = [1, 1]} : vector<2x96xf32> to vector<2x32xf32>
    %248 = vector.extract_strided_slice %229 {offsets = [0, 64], sizes = [2, 32], strides = [1, 1]} : vector<2x96xf32> to vector<2x32xf32>
    %249 = arith.mulf %238, %248 : vector<2x32xf32>
    %250 = arith.addf %247, %249 : vector<2x32xf32>
    %251 = math.tanh %250 : vector<2x32xf32>
    %cst_171 = arith.constant 1.000000e+00 : f32
    %252 = vector.broadcast %cst_171 : f32 to vector<2x32xf32>
    %253 = arith.subf %252, %246 : vector<2x32xf32>
    %254 = arith.mulf %253, %251 : vector<2x32xf32>
    %255 = arith.mulf %246, %230 : vector<2x32xf32>
    %256 = arith.addf %254, %255 : vector<2x32xf32>
    %257 = vector.extract_strided_slice %228 {offsets = [0, 96], sizes = [2, 96], strides = [1, 1]} : vector<2x192xf32> to vector<2x96xf32>
    %258 = vector.extract_strided_slice %221 {offsets = [0, 32], sizes = [2, 32], strides = [1, 1]} : vector<2x64xf32> to vector<2x32xf32>
    %259 = vector.extract_strided_slice %223 {offsets = [0, 0], sizes = [2, 32], strides = [1, 1]} : vector<2x96xf32> to vector<2x32xf32>
    %260 = vector.extract_strided_slice %257 {offsets = [0, 0], sizes = [2, 32], strides = [1, 1]} : vector<2x96xf32> to vector<2x32xf32>
    %261 = arith.addf %259, %260 : vector<2x32xf32>
    %262 = arith.negf %261 : vector<2x32xf32>
    %263 = math.exp %262 : vector<2x32xf32>
    %cst_172 = arith.constant 1.000000e+00 : f32
    %264 = vector.broadcast %cst_172 : f32 to vector<2x32xf32>
    %265 = arith.addf %264, %263 : vector<2x32xf32>
    %266 = arith.divf %264, %265 : vector<2x32xf32>
    %267 = vector.extract_strided_slice %223 {offsets = [0, 32], sizes = [2, 32], strides = [1, 1]} : vector<2x96xf32> to vector<2x32xf32>
    %268 = vector.extract_strided_slice %257 {offsets = [0, 32], sizes = [2, 32], strides = [1, 1]} : vector<2x96xf32> to vector<2x32xf32>
    %269 = arith.addf %267, %268 : vector<2x32xf32>
    %270 = arith.negf %269 : vector<2x32xf32>
    %271 = math.exp %270 : vector<2x32xf32>
    %cst_173 = arith.constant 1.000000e+00 : f32
    %272 = vector.broadcast %cst_173 : f32 to vector<2x32xf32>
    %273 = arith.addf %272, %271 : vector<2x32xf32>
    %274 = arith.divf %272, %273 : vector<2x32xf32>
    %275 = vector.extract_strided_slice %223 {offsets = [0, 64], sizes = [2, 32], strides = [1, 1]} : vector<2x96xf32> to vector<2x32xf32>
    %276 = vector.extract_strided_slice %257 {offsets = [0, 64], sizes = [2, 32], strides = [1, 1]} : vector<2x96xf32> to vector<2x32xf32>
    %277 = arith.mulf %266, %276 : vector<2x32xf32>
    %278 = arith.addf %275, %277 : vector<2x32xf32>
    %279 = math.tanh %278 : vector<2x32xf32>
    %cst_174 = arith.constant 1.000000e+00 : f32
    %280 = vector.broadcast %cst_174 : f32 to vector<2x32xf32>
    %281 = arith.subf %280, %274 : vector<2x32xf32>
    %282 = arith.mulf %281, %279 : vector<2x32xf32>
    %283 = arith.mulf %274, %258 : vector<2x32xf32>
    %284 = arith.addf %282, %283 : vector<2x32xf32>
    %c16_175 = arith.constant 16 : index
    %c0_176 = arith.constant 0 : index
    %285 = vector.load %arg36[%c16_175, %c0_176] : memref<32x32xf32, #tpu.memory_space<vmem>>, vector<2x32xf32>
    tpu.vector_store %arg36[%c16_175, %c0_176], %256 {strides = array<i32>} : memref<32x32xf32, #tpu.memory_space<vmem>>, vector<2x32xf32>,
    %c8_177 = arith.constant 8 : index
    %c0_178 = arith.constant 0 : index
    %286 = vector.load %arg37[%c8_177, %c0_178] : memref<32x32xf32, #tpu.memory_space<vmem>>, vector<2x32xf32>
    tpu.vector_store %arg37[%c8_177, %c0_178], %284 {strides = array<i32>} : memref<32x32xf32, #tpu.memory_space<vmem>>, vector<2x32xf32>,
    %287 = tpu.concatenate %256, %284 in 1 : vector<2x32xf32>, vector<2x32xf32> -> vector<2x64xf32>
    %c24_179 = arith.constant 24 : index
    %c0_180 = arith.constant 0 : index
    %288 = vector.load %arg34[%c24_179, %c0_180] : memref<32x96xf32, #tpu.memory_space<vmem>>, vector<2x96xf32>
    %c0_181 = arith.constant 0 : index
    %c0_182 = arith.constant 0 : index
    %289 = vector.load %arg35[%c0_181, %c0_182] : memref<32x96xf32, #tpu.memory_space<vmem>>, vector<2x96xf32>
    %c0_183 = arith.constant 0 : index
    %c0_184 = arith.constant 0 : index
    %290 = vector.load %arg10[%c0_183, %c0_184] : memref<64x192xf32, #tpu.memory_space<vmem>>, vector<64x192xf32>
    %cst_185 = arith.constant dense<0.000000e+00> : vector<2x192xf32>
    %291 = tpu.matmul %287, %290, %cst_185 {dimension_numbers = #tpu.dot_dimension_numbers<[1], [0], [0], [1], [0, 0, 1, 1], [], []>} : vector<2x64xf32>, vector<64x192xf32>, vector<2x192xf32> -> vector<2x192xf32>
    %c0_186 = arith.constant 0 : index
    %c0_187 = arith.constant 0 : index
    %292 = vector.load %arg11[%c0_186, %c0_187] : memref<1x192xf32, #tpu.memory_space<vmem>>, vector<1x192xf32>
    %293 = vector.broadcast %292 : vector<1x192xf32> to vector<2x192xf32>
    %294 = arith.addf %291, %293 : vector<2x192xf32>
    %295 = vector.extract_strided_slice %294 {offsets = [0, 0], sizes = [2, 96], strides = [1, 1]} : vector<2x192xf32> to vector<2x96xf32>
    %296 = vector.extract_strided_slice %287 {offsets = [0, 0], sizes = [2, 32], strides = [1, 1]} : vector<2x64xf32> to vector<2x32xf32>
    %297 = vector.extract_strided_slice %288 {offsets = [0, 0], sizes = [2, 32], strides = [1, 1]} : vector<2x96xf32> to vector<2x32xf32>
    %298 = vector.extract_strided_slice %295 {offsets = [0, 0], sizes = [2, 32], strides = [1, 1]} : vector<2x96xf32> to vector<2x32xf32>
    %299 = arith.addf %297, %298 : vector<2x32xf32>
    %300 = arith.negf %299 : vector<2x32xf32>
    %301 = math.exp %300 : vector<2x32xf32>
    %cst_188 = arith.constant 1.000000e+00 : f32
    %302 = vector.broadcast %cst_188 : f32 to vector<2x32xf32>
    %303 = arith.addf %302, %301 : vector<2x32xf32>
    %304 = arith.divf %302, %303 : vector<2x32xf32>
    %305 = vector.extract_strided_slice %288 {offsets = [0, 32], sizes = [2, 32], strides = [1, 1]} : vector<2x96xf32> to vector<2x32xf32>
    %306 = vector.extract_strided_slice %295 {offsets = [0, 32], sizes = [2, 32], strides = [1, 1]} : vector<2x96xf32> to vector<2x32xf32>
    %307 = arith.addf %305, %306 : vector<2x32xf32>
    %308 = arith.negf %307 : vector<2x32xf32>
    %309 = math.exp %308 : vector<2x32xf32>
    %cst_189 = arith.constant 1.000000e+00 : f32
    %310 = vector.broadcast %cst_189 : f32 to vector<2x32xf32>
    %311 = arith.addf %310, %309 : vector<2x32xf32>
    %312 = arith.divf %310, %311 : vector<2x32xf32>
    %313 = vector.extract_strided_slice %288 {offsets = [0, 64], sizes = [2, 32], strides = [1, 1]} : vector<2x96xf32> to vector<2x32xf32>
    %314 = vector.extract_strided_slice %295 {offsets = [0, 64], sizes = [2, 32], strides = [1, 1]} : vector<2x96xf32> to vector<2x32xf32>
    %315 = arith.mulf %304, %314 : vector<2x32xf32>
    %316 = arith.addf %313, %315 : vector<2x32xf32>
    %317 = math.tanh %316 : vector<2x32xf32>
    %cst_190 = arith.constant 1.000000e+00 : f32
    %318 = vector.broadcast %cst_190 : f32 to vector<2x32xf32>
    %319 = arith.subf %318, %312 : vector<2x32xf32>
    %320 = arith.mulf %319, %317 : vector<2x32xf32>
    %321 = arith.mulf %312, %296 : vector<2x32xf32>
    %322 = arith.addf %320, %321 : vector<2x32xf32>
    %323 = vector.extract_strided_slice %294 {offsets = [0, 96], sizes = [2, 96], strides = [1, 1]} : vector<2x192xf32> to vector<2x96xf32>
    %324 = vector.extract_strided_slice %287 {offsets = [0, 32], sizes = [2, 32], strides = [1, 1]} : vector<2x64xf32> to vector<2x32xf32>
    %325 = vector.extract_strided_slice %289 {offsets = [0, 0], sizes = [2, 32], strides = [1, 1]} : vector<2x96xf32> to vector<2x32xf32>
    %326 = vector.extract_strided_slice %323 {offsets = [0, 0], sizes = [2, 32], strides = [1, 1]} : vector<2x96xf32> to vector<2x32xf32>
    %327 = arith.addf %325, %326 : vector<2x32xf32>
    %328 = arith.negf %327 : vector<2x32xf32>
    %329 = math.exp %328 : vector<2x32xf32>
    %cst_191 = arith.constant 1.000000e+00 : f32
    %330 = vector.broadcast %cst_191 : f32 to vector<2x32xf32>
    %331 = arith.addf %330, %329 : vector<2x32xf32>
    %332 = arith.divf %330, %331 : vector<2x32xf32>
    %333 = vector.extract_strided_slice %289 {offsets = [0, 32], sizes = [2, 32], strides = [1, 1]} : vector<2x96xf32> to vector<2x32xf32>
    %334 = vector.extract_strided_slice %323 {offsets = [0, 32], sizes = [2, 32], strides = [1, 1]} : vector<2x96xf32> to vector<2x32xf32>
    %335 = arith.addf %333, %334 : vector<2x32xf32>
    %336 = arith.negf %335 : vector<2x32xf32>
    %337 = math.exp %336 : vector<2x32xf32>
    %cst_192 = arith.constant 1.000000e+00 : f32
    %338 = vector.broadcast %cst_192 : f32 to vector<2x32xf32>
    %339 = arith.addf %338, %337 : vector<2x32xf32>
    %340 = arith.divf %338, %339 : vector<2x32xf32>
    %341 = vector.extract_strided_slice %289 {offsets = [0, 64], sizes = [2, 32], strides = [1, 1]} : vector<2x96xf32> to vector<2x32xf32>
    %342 = vector.extract_strided_slice %323 {offsets = [0, 64], sizes = [2, 32], strides = [1, 1]} : vector<2x96xf32> to vector<2x32xf32>
    %343 = arith.mulf %332, %342 : vector<2x32xf32>
    %344 = arith.addf %341, %343 : vector<2x32xf32>
    %345 = math.tanh %344 : vector<2x32xf32>
    %cst_193 = arith.constant 1.000000e+00 : f32
    %346 = vector.broadcast %cst_193 : f32 to vector<2x32xf32>
    %347 = arith.subf %346, %340 : vector<2x32xf32>
    %348 = arith.mulf %347, %345 : vector<2x32xf32>
    %349 = arith.mulf %340, %324 : vector<2x32xf32>
    %350 = arith.addf %348, %349 : vector<2x32xf32>
    %c24_194 = arith.constant 24 : index
    %c0_195 = arith.constant 0 : index
    %351 = vector.load %arg36[%c24_194, %c0_195] : memref<32x32xf32, #tpu.memory_space<vmem>>, vector<2x32xf32>
    tpu.vector_store %arg36[%c24_194, %c0_195], %322 {strides = array<i32>} : memref<32x32xf32, #tpu.memory_space<vmem>>, vector<2x32xf32>,
    %c0_196 = arith.constant 0 : index
    %c0_197 = arith.constant 0 : index
    %352 = vector.load %arg37[%c0_196, %c0_197] : memref<32x32xf32, #tpu.memory_space<vmem>>, vector<2x32xf32>
    tpu.vector_store %arg37[%c0_196, %c0_197], %350 {strides = array<i32>} : memref<32x32xf32, #tpu.memory_space<vmem>>, vector<2x32xf32>,
    %c0_198 = arith.constant 0 : index
    %c0_199 = arith.constant 0 : index
    %353 = vector.load %arg36[%c0_198, %c0_199] : memref<32x32xf32, #tpu.memory_space<vmem>>, vector<32x32xf32>
    %c0_200 = arith.constant 0 : index
    %c0_201 = arith.constant 0 : index
    %354 = vector.load %arg37[%c0_200, %c0_201] : memref<32x32xf32, #tpu.memory_space<vmem>>, vector<32x32xf32>
    %355 = tpu.concatenate %353, %354 in 1 : vector<32x32xf32>, vector<32x32xf32> -> vector<32x64xf32>
    %c0_202 = arith.constant 0 : index
    %c0_203 = arith.constant 0 : index
    %356 = vector.load %arg12[%c0_202, %c0_203] : memref<64x192xf32, #tpu.memory_space<vmem>>, vector<64x192xf32>
    %cst_204 = arith.constant dense<0.000000e+00> : vector<32x192xf32>
    %357 = tpu.matmul %355, %356, %cst_204 {dimension_numbers = #tpu.dot_dimension_numbers<[1], [0], [0], [1], [0, 0, 1, 1], [], []>} : vector<32x64xf32>, vector<64x192xf32>, vector<32x192xf32> -> vector<32x192xf32>
    %c0_205 = arith.constant 0 : index
    %c0_206 = arith.constant 0 : index
    %358 = vector.load %arg13[%c0_205, %c0_206] : memref<1x192xf32, #tpu.memory_space<vmem>>, vector<1x192xf32>
    %359 = vector.broadcast %358 : vector<1x192xf32> to vector<32x192xf32>
    %360 = arith.addf %357, %359 : vector<32x192xf32>
    %361 = vector.extract_strided_slice %360 {offsets = [0, 0], sizes = [32, 96], strides = [1, 1]} : vector<32x192xf32> to vector<32x96xf32>
    %c0_207 = arith.constant 0 : index
    %c0_208 = arith.constant 0 : index
    %362 = vector.load %arg38[%c0_207, %c0_208] : memref<32x96xf32, #tpu.memory_space<vmem>>, vector<32x96xf32>
    tpu.vector_store %arg38[%c0_207, %c0_208], %361 {strides = array<i32>} : memref<32x96xf32, #tpu.memory_space<vmem>>, vector<32x96xf32>,
    %363 = vector.extract_strided_slice %360 {offsets = [0, 96], sizes = [32, 96], strides = [1, 1]} : vector<32x192xf32> to vector<32x96xf32>
    %c0_209 = arith.constant 0 : index
    %c0_210 = arith.constant 0 : index
    %364 = vector.load %arg39[%c0_209, %c0_210] : memref<32x96xf32, #tpu.memory_space<vmem>>, vector<32x96xf32>
    tpu.vector_store %arg39[%c0_209, %c0_210], %363 {strides = array<i32>} : memref<32x96xf32, #tpu.memory_space<vmem>>, vector<32x96xf32>,
    %cst_211 = arith.constant 0.000000e+00 : f32
    %365 = vector.broadcast %cst_211 : f32 to vector<2x64xf32>
    %c0_212 = arith.constant 0 : index
    %c0_213 = arith.constant 0 : index
    %366 = vector.load %arg38[%c0_212, %c0_213] : memref<32x96xf32, #tpu.memory_space<vmem>>, vector<2x96xf32>
    %c24_214 = arith.constant 24 : index
    %c0_215 = arith.constant 0 : index
    %367 = vector.load %arg39[%c24_214, %c0_215] : memref<32x96xf32, #tpu.memory_space<vmem>>, vector<2x96xf32>
    %c0_216 = arith.constant 0 : index
    %c0_217 = arith.constant 0 : index
    %368 = vector.load %arg14[%c0_216, %c0_217] : memref<64x192xf32, #tpu.memory_space<vmem>>, vector<64x192xf32>
    %cst_218 = arith.constant dense<0.000000e+00> : vector<2x192xf32>
    %369 = tpu.matmul %365, %368, %cst_218 {dimension_numbers = #tpu.dot_dimension_numbers<[1], [0], [0], [1], [0, 0, 1, 1], [], []>} : vector<2x64xf32>, vector<64x192xf32>, vector<2x192xf32> -> vector<2x192xf32>
    %c0_219 = arith.constant 0 : index
    %c0_220 = arith.constant 0 : index
    %370 = vector.load %arg15[%c0_219, %c0_220] : memref<1x192xf32, #tpu.memory_space<vmem>>, vector<1x192xf32>
    %371 = vector.broadcast %370 : vector<1x192xf32> to vector<2x192xf32>
    %372 = arith.addf %369, %371 : vector<2x192xf32>
    %373 = vector.extract_strided_slice %372 {offsets = [0, 0], sizes = [2, 96], strides = [1, 1]} : vector<2x192xf32> to vector<2x96xf32>
    %374 = vector.extract_strided_slice %365 {offsets = [0, 0], sizes = [2, 32], strides = [1, 1]} : vector<2x64xf32> to vector<2x32xf32>
    %375 = vector.extract_strided_slice %366 {offsets = [0, 0], sizes = [2, 32], strides = [1, 1]} : vector<2x96xf32> to vector<2x32xf32>
    %376 = vector.extract_strided_slice %373 {offsets = [0, 0], sizes = [2, 32], strides = [1, 1]} : vector<2x96xf32> to vector<2x32xf32>
    %377 = arith.addf %375, %376 : vector<2x32xf32>
    %378 = arith.negf %377 : vector<2x32xf32>
    %379 = math.exp %378 : vector<2x32xf32>
    %cst_221 = arith.constant 1.000000e+00 : f32
    %380 = vector.broadcast %cst_221 : f32 to vector<2x32xf32>
    %381 = arith.addf %380, %379 : vector<2x32xf32>
    %382 = arith.divf %380, %381 : vector<2x32xf32>
    %383 = vector.extract_strided_slice %366 {offsets = [0, 32], sizes = [2, 32], strides = [1, 1]} : vector<2x96xf32> to vector<2x32xf32>
    %384 = vector.extract_strided_slice %373 {offsets = [0, 32], sizes = [2, 32], strides = [1, 1]} : vector<2x96xf32> to vector<2x32xf32>
    %385 = arith.addf %383, %384 : vector<2x32xf32>
    %386 = arith.negf %385 : vector<2x32xf32>
    %387 = math.exp %386 : vector<2x32xf32>
    %cst_222 = arith.constant 1.000000e+00 : f32
    %388 = vector.broadcast %cst_222 : f32 to vector<2x32xf32>
    %389 = arith.addf %388, %387 : vector<2x32xf32>
    %390 = arith.divf %388, %389 : vector<2x32xf32>
    %391 = vector.extract_strided_slice %366 {offsets = [0, 64], sizes = [2, 32], strides = [1, 1]} : vector<2x96xf32> to vector<2x32xf32>
    %392 = vector.extract_strided_slice %373 {offsets = [0, 64], sizes = [2, 32], strides = [1, 1]} : vector<2x96xf32> to vector<2x32xf32>
    %393 = arith.mulf %382, %392 : vector<2x32xf32>
    %394 = arith.addf %391, %393 : vector<2x32xf32>
    %395 = math.tanh %394 : vector<2x32xf32>
    %cst_223 = arith.constant 1.000000e+00 : f32
    %396 = vector.broadcast %cst_223 : f32 to vector<2x32xf32>
    %397 = arith.subf %396, %390 : vector<2x32xf32>
    %398 = arith.mulf %397, %395 : vector<2x32xf32>
    %399 = arith.mulf %390, %374 : vector<2x32xf32>
    %400 = arith.addf %398, %399 : vector<2x32xf32>
    %401 = vector.extract_strided_slice %372 {offsets = [0, 96], sizes = [2, 96], strides = [1, 1]} : vector<2x192xf32> to vector<2x96xf32>
    %402 = vector.extract_strided_slice %365 {offsets = [0, 32], sizes = [2, 32], strides = [1, 1]} : vector<2x64xf32> to vector<2x32xf32>
    %403 = vector.extract_strided_slice %367 {offsets = [0, 0], sizes = [2, 32], strides = [1, 1]} : vector<2x96xf32> to vector<2x32xf32>
    %404 = vector.extract_strided_slice %401 {offsets = [0, 0], sizes = [2, 32], strides = [1, 1]} : vector<2x96xf32> to vector<2x32xf32>
    %405 = arith.addf %403, %404 : vector<2x32xf32>
    %406 = arith.negf %405 : vector<2x32xf32>
    %407 = math.exp %406 : vector<2x32xf32>
    %cst_224 = arith.constant 1.000000e+00 : f32
    %408 = vector.broadcast %cst_224 : f32 to vector<2x32xf32>
    %409 = arith.addf %408, %407 : vector<2x32xf32>
    %410 = arith.divf %408, %409 : vector<2x32xf32>
    %411 = vector.extract_strided_slice %367 {offsets = [0, 32], sizes = [2, 32], strides = [1, 1]} : vector<2x96xf32> to vector<2x32xf32>
    %412 = vector.extract_strided_slice %401 {offsets = [0, 32], sizes = [2, 32], strides = [1, 1]} : vector<2x96xf32> to vector<2x32xf32>
    %413 = arith.addf %411, %412 : vector<2x32xf32>
    %414 = arith.negf %413 : vector<2x32xf32>
    %415 = math.exp %414 : vector<2x32xf32>
    %cst_225 = arith.constant 1.000000e+00 : f32
    %416 = vector.broadcast %cst_225 : f32 to vector<2x32xf32>
    %417 = arith.addf %416, %415 : vector<2x32xf32>
    %418 = arith.divf %416, %417 : vector<2x32xf32>
    %419 = vector.extract_strided_slice %367 {offsets = [0, 64], sizes = [2, 32], strides = [1, 1]} : vector<2x96xf32> to vector<2x32xf32>
    %420 = vector.extract_strided_slice %401 {offsets = [0, 64], sizes = [2, 32], strides = [1, 1]} : vector<2x96xf32> to vector<2x32xf32>
    %421 = arith.mulf %410, %420 : vector<2x32xf32>
    %422 = arith.addf %419, %421 : vector<2x32xf32>
    %423 = math.tanh %422 : vector<2x32xf32>
    %cst_226 = arith.constant 1.000000e+00 : f32
    %424 = vector.broadcast %cst_226 : f32 to vector<2x32xf32>
    %425 = arith.subf %424, %418 : vector<2x32xf32>
    %426 = arith.mulf %425, %423 : vector<2x32xf32>
    %427 = arith.mulf %418, %402 : vector<2x32xf32>
    %428 = arith.addf %426, %427 : vector<2x32xf32>
    %c0_227 = arith.constant 0 : index
    %c0_228 = arith.constant 0 : index
    %429 = vector.load %arg40[%c0_227, %c0_228] : memref<32x32xf32, #tpu.memory_space<vmem>>, vector<2x32xf32>
    tpu.vector_store %arg40[%c0_227, %c0_228], %400 {strides = array<i32>} : memref<32x32xf32, #tpu.memory_space<vmem>>, vector<2x32xf32>,
    %c24_229 = arith.constant 24 : index
    %c0_230 = arith.constant 0 : index
    %430 = vector.load %arg41[%c24_229, %c0_230] : memref<32x32xf32, #tpu.memory_space<vmem>>, vector<2x32xf32>
    tpu.vector_store %arg41[%c24_229, %c0_230], %428 {strides = array<i32>} : memref<32x32xf32, #tpu.memory_space<vmem>>, vector<2x32xf32>,
    %431 = tpu.concatenate %400, %428 in 1 : vector<2x32xf32>, vector<2x32xf32> -> vector<2x64xf32>
    %c8_231 = arith.constant 8 : index
    %c0_232 = arith.constant 0 : index
    %432 = vector.load %arg38[%c8_231, %c0_232] : memref<32x96xf32, #tpu.memory_space<vmem>>, vector<2x96xf32>
    %c16_233 = arith.constant 16 : index
    %c0_234 = arith.constant 0 : index
    %433 = vector.load %arg39[%c16_233, %c0_234] : memref<32x96xf32, #tpu.memory_space<vmem>>, vector<2x96xf32>
    %c0_235 = arith.constant 0 : index
    %c0_236 = arith.constant 0 : index
    %434 = vector.load %arg14[%c0_235, %c0_236] : memref<64x192xf32, #tpu.memory_space<vmem>>, vector<64x192xf32>
    %cst_237 = arith.constant dense<0.000000e+00> : vector<2x192xf32>
    %435 = tpu.matmul %431, %434, %cst_237 {dimension_numbers = #tpu.dot_dimension_numbers<[1], [0], [0], [1], [0, 0, 1, 1], [], []>} : vector<2x64xf32>, vector<64x192xf32>, vector<2x192xf32> -> vector<2x192xf32>
    %c0_238 = arith.constant 0 : index
    %c0_239 = arith.constant 0 : index
    %436 = vector.load %arg15[%c0_238, %c0_239] : memref<1x192xf32, #tpu.memory_space<vmem>>, vector<1x192xf32>
    %437 = vector.broadcast %436 : vector<1x192xf32> to vector<2x192xf32>
    %438 = arith.addf %435, %437 : vector<2x192xf32>
    %439 = vector.extract_strided_slice %438 {offsets = [0, 0], sizes = [2, 96], strides = [1, 1]} : vector<2x192xf32> to vector<2x96xf32>
    %440 = vector.extract_strided_slice %431 {offsets = [0, 0], sizes = [2, 32], strides = [1, 1]} : vector<2x64xf32> to vector<2x32xf32>
    %441 = vector.extract_strided_slice %432 {offsets = [0, 0], sizes = [2, 32], strides = [1, 1]} : vector<2x96xf32> to vector<2x32xf32>
    %442 = vector.extract_strided_slice %439 {offsets = [0, 0], sizes = [2, 32], strides = [1, 1]} : vector<2x96xf32> to vector<2x32xf32>
    %443 = arith.addf %441, %442 : vector<2x32xf32>
    %444 = arith.negf %443 : vector<2x32xf32>
    %445 = math.exp %444 : vector<2x32xf32>
    %cst_240 = arith.constant 1.000000e+00 : f32
    %446 = vector.broadcast %cst_240 : f32 to vector<2x32xf32>
    %447 = arith.addf %446, %445 : vector<2x32xf32>
    %448 = arith.divf %446, %447 : vector<2x32xf32>
    %449 = vector.extract_strided_slice %432 {offsets = [0, 32], sizes = [2, 32], strides = [1, 1]} : vector<2x96xf32> to vector<2x32xf32>
    %450 = vector.extract_strided_slice %439 {offsets = [0, 32], sizes = [2, 32], strides = [1, 1]} : vector<2x96xf32> to vector<2x32xf32>
    %451 = arith.addf %449, %450 : vector<2x32xf32>
    %452 = arith.negf %451 : vector<2x32xf32>
    %453 = math.exp %452 : vector<2x32xf32>
    %cst_241 = arith.constant 1.000000e+00 : f32
    %454 = vector.broadcast %cst_241 : f32 to vector<2x32xf32>
    %455 = arith.addf %454, %453 : vector<2x32xf32>
    %456 = arith.divf %454, %455 : vector<2x32xf32>
    %457 = vector.extract_strided_slice %432 {offsets = [0, 64], sizes = [2, 32], strides = [1, 1]} : vector<2x96xf32> to vector<2x32xf32>
    %458 = vector.extract_strided_slice %439 {offsets = [0, 64], sizes = [2, 32], strides = [1, 1]} : vector<2x96xf32> to vector<2x32xf32>
    %459 = arith.mulf %448, %458 : vector<2x32xf32>
    %460 = arith.addf %457, %459 : vector<2x32xf32>
    %461 = math.tanh %460 : vector<2x32xf32>
    %cst_242 = arith.constant 1.000000e+00 : f32
    %462 = vector.broadcast %cst_242 : f32 to vector<2x32xf32>
    %463 = arith.subf %462, %456 : vector<2x32xf32>
    %464 = arith.mulf %463, %461 : vector<2x32xf32>
    %465 = arith.mulf %456, %440 : vector<2x32xf32>
    %466 = arith.addf %464, %465 : vector<2x32xf32>
    %467 = vector.extract_strided_slice %438 {offsets = [0, 96], sizes = [2, 96], strides = [1, 1]} : vector<2x192xf32> to vector<2x96xf32>
    %468 = vector.extract_strided_slice %431 {offsets = [0, 32], sizes = [2, 32], strides = [1, 1]} : vector<2x64xf32> to vector<2x32xf32>
    %469 = vector.extract_strided_slice %433 {offsets = [0, 0], sizes = [2, 32], strides = [1, 1]} : vector<2x96xf32> to vector<2x32xf32>
    %470 = vector.extract_strided_slice %467 {offsets = [0, 0], sizes = [2, 32], strides = [1, 1]} : vector<2x96xf32> to vector<2x32xf32>
    %471 = arith.addf %469, %470 : vector<2x32xf32>
    %472 = arith.negf %471 : vector<2x32xf32>
    %473 = math.exp %472 : vector<2x32xf32>
    %cst_243 = arith.constant 1.000000e+00 : f32
    %474 = vector.broadcast %cst_243 : f32 to vector<2x32xf32>
    %475 = arith.addf %474, %473 : vector<2x32xf32>
    %476 = arith.divf %474, %475 : vector<2x32xf32>
    %477 = vector.extract_strided_slice %433 {offsets = [0, 32], sizes = [2, 32], strides = [1, 1]} : vector<2x96xf32> to vector<2x32xf32>
    %478 = vector.extract_strided_slice %467 {offsets = [0, 32], sizes = [2, 32], strides = [1, 1]} : vector<2x96xf32> to vector<2x32xf32>
    %479 = arith.addf %477, %478 : vector<2x32xf32>
    %480 = arith.negf %479 : vector<2x32xf32>
    %481 = math.exp %480 : vector<2x32xf32>
    %cst_244 = arith.constant 1.000000e+00 : f32
    %482 = vector.broadcast %cst_244 : f32 to vector<2x32xf32>
    %483 = arith.addf %482, %481 : vector<2x32xf32>
    %484 = arith.divf %482, %483 : vector<2x32xf32>
    %485 = vector.extract_strided_slice %433 {offsets = [0, 64], sizes = [2, 32], strides = [1, 1]} : vector<2x96xf32> to vector<2x32xf32>
    %486 = vector.extract_strided_slice %467 {offsets = [0, 64], sizes = [2, 32], strides = [1, 1]} : vector<2x96xf32> to vector<2x32xf32>
    %487 = arith.mulf %476, %486 : vector<2x32xf32>
    %488 = arith.addf %485, %487 : vector<2x32xf32>
    %489 = math.tanh %488 : vector<2x32xf32>
    %cst_245 = arith.constant 1.000000e+00 : f32
    %490 = vector.broadcast %cst_245 : f32 to vector<2x32xf32>
    %491 = arith.subf %490, %484 : vector<2x32xf32>
    %492 = arith.mulf %491, %489 : vector<2x32xf32>
    %493 = arith.mulf %484, %468 : vector<2x32xf32>
    %494 = arith.addf %492, %493 : vector<2x32xf32>
    %c8_246 = arith.constant 8 : index
    %c0_247 = arith.constant 0 : index
    %495 = vector.load %arg40[%c8_246, %c0_247] : memref<32x32xf32, #tpu.memory_space<vmem>>, vector<2x32xf32>
    tpu.vector_store %arg40[%c8_246, %c0_247], %466 {strides = array<i32>} : memref<32x32xf32, #tpu.memory_space<vmem>>, vector<2x32xf32>,
    %c16_248 = arith.constant 16 : index
    %c0_249 = arith.constant 0 : index
    %496 = vector.load %arg41[%c16_248, %c0_249] : memref<32x32xf32, #tpu.memory_space<vmem>>, vector<2x32xf32>
    tpu.vector_store %arg41[%c16_248, %c0_249], %494 {strides = array<i32>} : memref<32x32xf32, #tpu.memory_space<vmem>>, vector<2x32xf32>,
    %497 = tpu.concatenate %466, %494 in 1 : vector<2x32xf32>, vector<2x32xf32> -> vector<2x64xf32>
    %c16_250 = arith.constant 16 : index
    %c0_251 = arith.constant 0 : index
    %498 = vector.load %arg38[%c16_250, %c0_251] : memref<32x96xf32, #tpu.memory_space<vmem>>, vector<2x96xf32>
    %c8_252 = arith.constant 8 : index
    %c0_253 = arith.constant 0 : index
    %499 = vector.load %arg39[%c8_252, %c0_253] : memref<32x96xf32, #tpu.memory_space<vmem>>, vector<2x96xf32>
    %c0_254 = arith.constant 0 : index
    %c0_255 = arith.constant 0 : index
    %500 = vector.load %arg14[%c0_254, %c0_255] : memref<64x192xf32, #tpu.memory_space<vmem>>, vector<64x192xf32>
    %cst_256 = arith.constant dense<0.000000e+00> : vector<2x192xf32>
    %501 = tpu.matmul %497, %500, %cst_256 {dimension_numbers = #tpu.dot_dimension_numbers<[1], [0], [0], [1], [0, 0, 1, 1], [], []>} : vector<2x64xf32>, vector<64x192xf32>, vector<2x192xf32> -> vector<2x192xf32>
    %c0_257 = arith.constant 0 : index
    %c0_258 = arith.constant 0 : index
    %502 = vector.load %arg15[%c0_257, %c0_258] : memref<1x192xf32, #tpu.memory_space<vmem>>, vector<1x192xf32>
    %503 = vector.broadcast %502 : vector<1x192xf32> to vector<2x192xf32>
    %504 = arith.addf %501, %503 : vector<2x192xf32>
    %505 = vector.extract_strided_slice %504 {offsets = [0, 0], sizes = [2, 96], strides = [1, 1]} : vector<2x192xf32> to vector<2x96xf32>
    %506 = vector.extract_strided_slice %497 {offsets = [0, 0], sizes = [2, 32], strides = [1, 1]} : vector<2x64xf32> to vector<2x32xf32>
    %507 = vector.extract_strided_slice %498 {offsets = [0, 0], sizes = [2, 32], strides = [1, 1]} : vector<2x96xf32> to vector<2x32xf32>
    %508 = vector.extract_strided_slice %505 {offsets = [0, 0], sizes = [2, 32], strides = [1, 1]} : vector<2x96xf32> to vector<2x32xf32>
    %509 = arith.addf %507, %508 : vector<2x32xf32>
    %510 = arith.negf %509 : vector<2x32xf32>
    %511 = math.exp %510 : vector<2x32xf32>
    %cst_259 = arith.constant 1.000000e+00 : f32
    %512 = vector.broadcast %cst_259 : f32 to vector<2x32xf32>
    %513 = arith.addf %512, %511 : vector<2x32xf32>
    %514 = arith.divf %512, %513 : vector<2x32xf32>
    %515 = vector.extract_strided_slice %498 {offsets = [0, 32], sizes = [2, 32], strides = [1, 1]} : vector<2x96xf32> to vector<2x32xf32>
    %516 = vector.extract_strided_slice %505 {offsets = [0, 32], sizes = [2, 32], strides = [1, 1]} : vector<2x96xf32> to vector<2x32xf32>
    %517 = arith.addf %515, %516 : vector<2x32xf32>
    %518 = arith.negf %517 : vector<2x32xf32>
    %519 = math.exp %518 : vector<2x32xf32>
    %cst_260 = arith.constant 1.000000e+00 : f32
    %520 = vector.broadcast %cst_260 : f32 to vector<2x32xf32>
    %521 = arith.addf %520, %519 : vector<2x32xf32>
    %522 = arith.divf %520, %521 : vector<2x32xf32>
    %523 = vector.extract_strided_slice %498 {offsets = [0, 64], sizes = [2, 32], strides = [1, 1]} : vector<2x96xf32> to vector<2x32xf32>
    %524 = vector.extract_strided_slice %505 {offsets = [0, 64], sizes = [2, 32], strides = [1, 1]} : vector<2x96xf32> to vector<2x32xf32>
    %525 = arith.mulf %514, %524 : vector<2x32xf32>
    %526 = arith.addf %523, %525 : vector<2x32xf32>
    %527 = math.tanh %526 : vector<2x32xf32>
    %cst_261 = arith.constant 1.000000e+00 : f32
    %528 = vector.broadcast %cst_261 : f32 to vector<2x32xf32>
    %529 = arith.subf %528, %522 : vector<2x32xf32>
    %530 = arith.mulf %529, %527 : vector<2x32xf32>
    %531 = arith.mulf %522, %506 : vector<2x32xf32>
    %532 = arith.addf %530, %531 : vector<2x32xf32>
    %533 = vector.extract_strided_slice %504 {offsets = [0, 96], sizes = [2, 96], strides = [1, 1]} : vector<2x192xf32> to vector<2x96xf32>
    %534 = vector.extract_strided_slice %497 {offsets = [0, 32], sizes = [2, 32], strides = [1, 1]} : vector<2x64xf32> to vector<2x32xf32>
    %535 = vector.extract_strided_slice %499 {offsets = [0, 0], sizes = [2, 32], strides = [1, 1]} : vector<2x96xf32> to vector<2x32xf32>
    %536 = vector.extract_strided_slice %533 {offsets = [0, 0], sizes = [2, 32], strides = [1, 1]} : vector<2x96xf32> to vector<2x32xf32>
    %537 = arith.addf %535, %536 : vector<2x32xf32>
    %538 = arith.negf %537 : vector<2x32xf32>
    %539 = math.exp %538 : vector<2x32xf32>
    %cst_262 = arith.constant 1.000000e+00 : f32
    %540 = vector.broadcast %cst_262 : f32 to vector<2x32xf32>
    %541 = arith.addf %540, %539 : vector<2x32xf32>
    %542 = arith.divf %540, %541 : vector<2x32xf32>
    %543 = vector.extract_strided_slice %499 {offsets = [0, 32], sizes = [2, 32], strides = [1, 1]} : vector<2x96xf32> to vector<2x32xf32>
    %544 = vector.extract_strided_slice %533 {offsets = [0, 32], sizes = [2, 32], strides = [1, 1]} : vector<2x96xf32> to vector<2x32xf32>
    %545 = arith.addf %543, %544 : vector<2x32xf32>
    %546 = arith.negf %545 : vector<2x32xf32>
    %547 = math.exp %546 : vector<2x32xf32>
    %cst_263 = arith.constant 1.000000e+00 : f32
    %548 = vector.broadcast %cst_263 : f32 to vector<2x32xf32>
    %549 = arith.addf %548, %547 : vector<2x32xf32>
    %550 = arith.divf %548, %549 : vector<2x32xf32>
    %551 = vector.extract_strided_slice %499 {offsets = [0, 64], sizes = [2, 32], strides = [1, 1]} : vector<2x96xf32> to vector<2x32xf32>
    %552 = vector.extract_strided_slice %533 {offsets = [0, 64], sizes = [2, 32], strides = [1, 1]} : vector<2x96xf32> to vector<2x32xf32>
    %553 = arith.mulf %542, %552 : vector<2x32xf32>
    %554 = arith.addf %551, %553 : vector<2x32xf32>
    %555 = math.tanh %554 : vector<2x32xf32>
    %cst_264 = arith.constant 1.000000e+00 : f32
    %556 = vector.broadcast %cst_264 : f32 to vector<2x32xf32>
    %557 = arith.subf %556, %550 : vector<2x32xf32>
    %558 = arith.mulf %557, %555 : vector<2x32xf32>
    %559 = arith.mulf %550, %534 : vector<2x32xf32>
    %560 = arith.addf %558, %559 : vector<2x32xf32>
    %c16_265 = arith.constant 16 : index
    %c0_266 = arith.constant 0 : index
    %561 = vector.load %arg40[%c16_265, %c0_266] : memref<32x32xf32, #tpu.memory_space<vmem>>, vector<2x32xf32>
    tpu.vector_store %arg40[%c16_265, %c0_266], %532 {strides = array<i32>} : memref<32x32xf32, #tpu.memory_space<vmem>>, vector<2x32xf32>,
    %c8_267 = arith.constant 8 : index
    %c0_268 = arith.constant 0 : index
    %562 = vector.load %arg41[%c8_267, %c0_268] : memref<32x32xf32, #tpu.memory_space<vmem>>, vector<2x32xf32>
    tpu.vector_store %arg41[%c8_267, %c0_268], %560 {strides = array<i32>} : memref<32x32xf32, #tpu.memory_space<vmem>>, vector<2x32xf32>,
    %563 = tpu.concatenate %532, %560 in 1 : vector<2x32xf32>, vector<2x32xf32> -> vector<2x64xf32>
    %c24_269 = arith.constant 24 : index
    %c0_270 = arith.constant 0 : index
    %564 = vector.load %arg38[%c24_269, %c0_270] : memref<32x96xf32, #tpu.memory_space<vmem>>, vector<2x96xf32>
    %c0_271 = arith.constant 0 : index
    %c0_272 = arith.constant 0 : index
    %565 = vector.load %arg39[%c0_271, %c0_272] : memref<32x96xf32, #tpu.memory_space<vmem>>, vector<2x96xf32>
    %c0_273 = arith.constant 0 : index
    %c0_274 = arith.constant 0 : index
    %566 = vector.load %arg14[%c0_273, %c0_274] : memref<64x192xf32, #tpu.memory_space<vmem>>, vector<64x192xf32>
    %cst_275 = arith.constant dense<0.000000e+00> : vector<2x192xf32>
    %567 = tpu.matmul %563, %566, %cst_275 {dimension_numbers = #tpu.dot_dimension_numbers<[1], [0], [0], [1], [0, 0, 1, 1], [], []>} : vector<2x64xf32>, vector<64x192xf32>, vector<2x192xf32> -> vector<2x192xf32>
    %c0_276 = arith.constant 0 : index
    %c0_277 = arith.constant 0 : index
    %568 = vector.load %arg15[%c0_276, %c0_277] : memref<1x192xf32, #tpu.memory_space<vmem>>, vector<1x192xf32>
    %569 = vector.broadcast %568 : vector<1x192xf32> to vector<2x192xf32>
    %570 = arith.addf %567, %569 : vector<2x192xf32>
    %571 = vector.extract_strided_slice %570 {offsets = [0, 0], sizes = [2, 96], strides = [1, 1]} : vector<2x192xf32> to vector<2x96xf32>
    %572 = vector.extract_strided_slice %563 {offsets = [0, 0], sizes = [2, 32], strides = [1, 1]} : vector<2x64xf32> to vector<2x32xf32>
    %573 = vector.extract_strided_slice %564 {offsets = [0, 0], sizes = [2, 32], strides = [1, 1]} : vector<2x96xf32> to vector<2x32xf32>
    %574 = vector.extract_strided_slice %571 {offsets = [0, 0], sizes = [2, 32], strides = [1, 1]} : vector<2x96xf32> to vector<2x32xf32>
    %575 = arith.addf %573, %574 : vector<2x32xf32>
    %576 = arith.negf %575 : vector<2x32xf32>
    %577 = math.exp %576 : vector<2x32xf32>
    %cst_278 = arith.constant 1.000000e+00 : f32
    %578 = vector.broadcast %cst_278 : f32 to vector<2x32xf32>
    %579 = arith.addf %578, %577 : vector<2x32xf32>
    %580 = arith.divf %578, %579 : vector<2x32xf32>
    %581 = vector.extract_strided_slice %564 {offsets = [0, 32], sizes = [2, 32], strides = [1, 1]} : vector<2x96xf32> to vector<2x32xf32>
    %582 = vector.extract_strided_slice %571 {offsets = [0, 32], sizes = [2, 32], strides = [1, 1]} : vector<2x96xf32> to vector<2x32xf32>
    %583 = arith.addf %581, %582 : vector<2x32xf32>
    %584 = arith.negf %583 : vector<2x32xf32>
    %585 = math.exp %584 : vector<2x32xf32>
    %cst_279 = arith.constant 1.000000e+00 : f32
    %586 = vector.broadcast %cst_279 : f32 to vector<2x32xf32>
    %587 = arith.addf %586, %585 : vector<2x32xf32>
    %588 = arith.divf %586, %587 : vector<2x32xf32>
    %589 = vector.extract_strided_slice %564 {offsets = [0, 64], sizes = [2, 32], strides = [1, 1]} : vector<2x96xf32> to vector<2x32xf32>
    %590 = vector.extract_strided_slice %571 {offsets = [0, 64], sizes = [2, 32], strides = [1, 1]} : vector<2x96xf32> to vector<2x32xf32>
    %591 = arith.mulf %580, %590 : vector<2x32xf32>
    %592 = arith.addf %589, %591 : vector<2x32xf32>
    %593 = math.tanh %592 : vector<2x32xf32>
    %cst_280 = arith.constant 1.000000e+00 : f32
    %594 = vector.broadcast %cst_280 : f32 to vector<2x32xf32>
    %595 = arith.subf %594, %588 : vector<2x32xf32>
    %596 = arith.mulf %595, %593 : vector<2x32xf32>
    %597 = arith.mulf %588, %572 : vector<2x32xf32>
    %598 = arith.addf %596, %597 : vector<2x32xf32>
    %599 = vector.extract_strided_slice %570 {offsets = [0, 96], sizes = [2, 96], strides = [1, 1]} : vector<2x192xf32> to vector<2x96xf32>
    %600 = vector.extract_strided_slice %563 {offsets = [0, 32], sizes = [2, 32], strides = [1, 1]} : vector<2x64xf32> to vector<2x32xf32>
    %601 = vector.extract_strided_slice %565 {offsets = [0, 0], sizes = [2, 32], strides = [1, 1]} : vector<2x96xf32> to vector<2x32xf32>
    %602 = vector.extract_strided_slice %599 {offsets = [0, 0], sizes = [2, 32], strides = [1, 1]} : vector<2x96xf32> to vector<2x32xf32>
    %603 = arith.addf %601, %602 : vector<2x32xf32>
    %604 = arith.negf %603 : vector<2x32xf32>
    %605 = math.exp %604 : vector<2x32xf32>
    %cst_281 = arith.constant 1.000000e+00 : f32
    %606 = vector.broadcast %cst_281 : f32 to vector<2x32xf32>
    %607 = arith.addf %606, %605 : vector<2x32xf32>
    %608 = arith.divf %606, %607 : vector<2x32xf32>
    %609 = vector.extract_strided_slice %565 {offsets = [0, 32], sizes = [2, 32], strides = [1, 1]} : vector<2x96xf32> to vector<2x32xf32>
    %610 = vector.extract_strided_slice %599 {offsets = [0, 32], sizes = [2, 32], strides = [1, 1]} : vector<2x96xf32> to vector<2x32xf32>
    %611 = arith.addf %609, %610 : vector<2x32xf32>
    %612 = arith.negf %611 : vector<2x32xf32>
    %613 = math.exp %612 : vector<2x32xf32>
    %cst_282 = arith.constant 1.000000e+00 : f32
    %614 = vector.broadcast %cst_282 : f32 to vector<2x32xf32>
    %615 = arith.addf %614, %613 : vector<2x32xf32>
    %616 = arith.divf %614, %615 : vector<2x32xf32>
    %617 = vector.extract_strided_slice %565 {offsets = [0, 64], sizes = [2, 32], strides = [1, 1]} : vector<2x96xf32> to vector<2x32xf32>
    %618 = vector.extract_strided_slice %599 {offsets = [0, 64], sizes = [2, 32], strides = [1, 1]} : vector<2x96xf32> to vector<2x32xf32>
    %619 = arith.mulf %608, %618 : vector<2x32xf32>
    %620 = arith.addf %617, %619 : vector<2x32xf32>
    %621 = math.tanh %620 : vector<2x32xf32>
    %cst_283 = arith.constant 1.000000e+00 : f32
    %622 = vector.broadcast %cst_283 : f32 to vector<2x32xf32>
    %623 = arith.subf %622, %616 : vector<2x32xf32>
    %624 = arith.mulf %623, %621 : vector<2x32xf32>
    %625 = arith.mulf %616, %600 : vector<2x32xf32>
    %626 = arith.addf %624, %625 : vector<2x32xf32>
    %c24_284 = arith.constant 24 : index
    %c0_285 = arith.constant 0 : index
    %627 = vector.load %arg40[%c24_284, %c0_285] : memref<32x32xf32, #tpu.memory_space<vmem>>, vector<2x32xf32>
    tpu.vector_store %arg40[%c24_284, %c0_285], %598 {strides = array<i32>} : memref<32x32xf32, #tpu.memory_space<vmem>>, vector<2x32xf32>,
    %c0_286 = arith.constant 0 : index
    %c0_287 = arith.constant 0 : index
    %628 = vector.load %arg41[%c0_286, %c0_287] : memref<32x32xf32, #tpu.memory_space<vmem>>, vector<2x32xf32>
    tpu.vector_store %arg41[%c0_286, %c0_287], %626 {strides = array<i32>} : memref<32x32xf32, #tpu.memory_space<vmem>>, vector<2x32xf32>,
    %c0_288 = arith.constant 0 : index
    %c0_289 = arith.constant 0 : index
    %629 = vector.load %arg40[%c0_288, %c0_289] : memref<32x32xf32, #tpu.memory_space<vmem>>, vector<32x32xf32>
    %c0_290 = arith.constant 0 : index
    %c0_291 = arith.constant 0 : index
    %630 = vector.load %arg41[%c0_290, %c0_291] : memref<32x32xf32, #tpu.memory_space<vmem>>, vector<32x32xf32>
    %631 = tpu.concatenate %629, %630 in 1 : vector<32x32xf32>, vector<32x32xf32> -> vector<32x64xf32>
    %c0_292 = arith.constant 0 : index
    %c0_293 = arith.constant 0 : index
    %632 = vector.load %arg16[%c0_292, %c0_293] : memref<64x64xf32, #tpu.memory_space<vmem>>, vector<64x64xf32>
    %cst_294 = arith.constant dense<0.000000e+00> : vector<32x64xf32>
    %633 = tpu.matmul %631, %632, %cst_294 {dimension_numbers = #tpu.dot_dimension_numbers<[1], [0], [0], [1], [0, 0, 1, 1], [], []>} : vector<32x64xf32>, vector<64x64xf32>, vector<32x64xf32> -> vector<32x64xf32>
    %c0_295 = arith.constant 0 : index
    %c0_296 = arith.constant 0 : index
    %634 = vector.load %arg17[%c0_295, %c0_296] : memref<1x64xf32, #tpu.memory_space<vmem>>, vector<1x64xf32>
    %635 = vector.broadcast %634 : vector<1x64xf32> to vector<32x64xf32>
    %636 = arith.addf %633, %635 : vector<32x64xf32>
    %637 = math.tanh %636 : vector<32x64xf32>
    %c0_297 = arith.constant 0 : index
    %c0_298 = arith.constant 0 : index
    %638 = vector.load %arg18[%c0_297, %c0_298] : memref<1x64xf32, #tpu.memory_space<vmem>>, vector<1x64xf32>
    %639 = vector.broadcast %638 : vector<1x64xf32> to vector<32x64xf32>
    %640 = arith.mulf %637, %639 : vector<32x64xf32>
    %cst_299 = arith.constant dense<0.000000e+00> : vector<32xf32>
    %641 = vector.multi_reduction <add>, %640, %cst_299 [1] : vector<32x64xf32> to vector<32xf32>
    %642 = vector.shape_cast %641 : vector<32xf32> to vector<32x1xf32>
    %c0_300 = arith.constant 0 : index
    %c0_301 = arith.constant 0 : index
    %643 = vector.load %arg19[%c0_300, %c0_301] : memref<1x1xf32, #tpu.memory_space<vmem>>, vector<1x1xf32>
    %644 = vector.broadcast %643 : vector<1x1xf32> to vector<32x1xf32>
    %645 = arith.addf %642, %644 : vector<32x1xf32>
    %646 = vector.extract_strided_slice %645 {offsets = [0, 0], sizes = [2, 1], strides = [1, 1]} : vector<32x1xf32> to vector<2x1xf32>
    %647 = vector.extract_strided_slice %645 {offsets = [8, 0], sizes = [2, 1], strides = [1, 1]} : vector<32x1xf32> to vector<2x1xf32>
    %648 = vector.extract_strided_slice %645 {offsets = [16, 0], sizes = [2, 1], strides = [1, 1]} : vector<32x1xf32> to vector<2x1xf32>
    %649 = vector.extract_strided_slice %645 {offsets = [24, 0], sizes = [2, 1], strides = [1, 1]} : vector<32x1xf32> to vector<2x1xf32>
    %650 = tpu.concatenate %646, %647, %648, %649 in 1 : vector<2x1xf32>, vector<2x1xf32>, vector<2x1xf32>, vector<2x1xf32> -> vector<2x4xf32>
    %cst_302 = arith.constant dense<0xFF800000> : vector<2xf32>
    %651 = vector.multi_reduction <maximumf>, %650, %cst_302 [1] : vector<2x4xf32> to vector<2xf32>
    %652 = vector.shape_cast %651 : vector<2xf32> to vector<2x1xf32>
    %653 = vector.broadcast %652 : vector<2x1xf32> to vector<2x4xf32>
    %654 = arith.subf %650, %653 : vector<2x4xf32>
    %655 = math.exp %654 : vector<2x4xf32>
    %cst_303 = arith.constant dense<0.000000e+00> : vector<2xf32>
    %656 = vector.multi_reduction <add>, %655, %cst_303 [1] : vector<2x4xf32> to vector<2xf32>
    %657 = vector.shape_cast %656 : vector<2xf32> to vector<2x1xf32>
    %658 = tpu.reciprocal %657 {approx = true} : vector<2x1xf32> -> vector<2x1xf32>
    %659 = vector.broadcast %658 : vector<2x1xf32> to vector<2x4xf32>
    %660 = arith.mulf %655, %659 : vector<2x4xf32>
    %cst_304 = arith.constant 0.000000e+00 : f32
    %661 = vector.broadcast %cst_304 : f32 to vector<2x64xf32>
    %662 = vector.extract_strided_slice %660 {offsets = [0, 0], sizes = [2, 1], strides = [1, 1]} : vector<2x4xf32> to vector<2x1xf32>
    %663 = vector.extract_strided_slice %631 {offsets = [0, 0], sizes = [2, 64], strides = [1, 1]} : vector<32x64xf32> to vector<2x64xf32>
    %664 = vector.broadcast %662 : vector<2x1xf32> to vector<2x64xf32>
    %665 = arith.mulf %664, %663 : vector<2x64xf32>
    %666 = arith.addf %661, %665 : vector<2x64xf32>
    %667 = vector.extract_strided_slice %660 {offsets = [0, 1], sizes = [2, 1], strides = [1, 1]} : vector<2x4xf32> to vector<2x1xf32>
    %668 = vector.extract_strided_slice %631 {offsets = [8, 0], sizes = [2, 64], strides = [1, 1]} : vector<32x64xf32> to vector<2x64xf32>
    %669 = vector.broadcast %667 : vector<2x1xf32> to vector<2x64xf32>
    %670 = arith.mulf %669, %668 : vector<2x64xf32>
    %671 = arith.addf %666, %670 : vector<2x64xf32>
    %672 = vector.extract_strided_slice %660 {offsets = [0, 2], sizes = [2, 1], strides = [1, 1]} : vector<2x4xf32> to vector<2x1xf32>
    %673 = vector.extract_strided_slice %631 {offsets = [16, 0], sizes = [2, 64], strides = [1, 1]} : vector<32x64xf32> to vector<2x64xf32>
    %674 = vector.broadcast %672 : vector<2x1xf32> to vector<2x64xf32>
    %675 = arith.mulf %674, %673 : vector<2x64xf32>
    %676 = arith.addf %671, %675 : vector<2x64xf32>
    %677 = vector.extract_strided_slice %660 {offsets = [0, 3], sizes = [2, 1], strides = [1, 1]} : vector<2x4xf32> to vector<2x1xf32>
    %678 = vector.extract_strided_slice %631 {offsets = [24, 0], sizes = [2, 64], strides = [1, 1]} : vector<32x64xf32> to vector<2x64xf32>
    %679 = vector.broadcast %677 : vector<2x1xf32> to vector<2x64xf32>
    %680 = arith.mulf %679, %678 : vector<2x64xf32>
    %681 = arith.addf %676, %680 : vector<2x64xf32>
    %c0_305 = arith.constant 0 : index
    %c0_306 = arith.constant 0 : index
    %682 = vector.load %arg20[%c0_305, %c0_306] : memref<64x256xf32, #tpu.memory_space<vmem>>, vector<64x256xf32>
    %cst_307 = arith.constant dense<0.000000e+00> : vector<2x256xf32>
    %683 = tpu.matmul %681, %682, %cst_307 {dimension_numbers = #tpu.dot_dimension_numbers<[1], [0], [0], [1], [0, 0, 1, 1], [], []>} : vector<2x64xf32>, vector<64x256xf32>, vector<2x256xf32> -> vector<2x256xf32>
    %c0_308 = arith.constant 0 : index
    %c0_309 = arith.constant 0 : index
    %684 = vector.load %arg21[%c0_308, %c0_309] : memref<1x256xf32, #tpu.memory_space<vmem>>, vector<1x256xf32>
    %685 = vector.broadcast %684 : vector<1x256xf32> to vector<2x256xf32>
    %686 = arith.addf %683, %685 : vector<2x256xf32>
    %cst_310 = arith.constant 0.000000e+00 : f32
    %687 = vector.broadcast %cst_310 : f32 to vector<2x256xf32>
    %688 = arith.maximumf %686, %687 : vector<2x256xf32>
    %c0_311 = arith.constant 0 : index
    %c0_312 = arith.constant 0 : index
    %689 = vector.load %arg22[%c0_311, %c0_312] : memref<256x128xf32, #tpu.memory_space<vmem>>, vector<256x128xf32>
    %cst_313 = arith.constant dense<0.000000e+00> : vector<2x128xf32>
    %690 = tpu.matmul %688, %689, %cst_313 {dimension_numbers = #tpu.dot_dimension_numbers<[1], [0], [0], [1], [0, 0, 1, 1], [], []>} : vector<2x256xf32>, vector<256x128xf32>, vector<2x128xf32> -> vector<2x128xf32>
    %c0_314 = arith.constant 0 : index
    %c0_315 = arith.constant 0 : index
    %691 = vector.load %arg23[%c0_314, %c0_315] : memref<1x128xf32, #tpu.memory_space<vmem>>, vector<1x128xf32>
    %692 = vector.broadcast %691 : vector<1x128xf32> to vector<2x128xf32>
    %693 = arith.addf %690, %692 : vector<2x128xf32>
    %cst_316 = arith.constant 0.000000e+00 : f32
    %694 = vector.broadcast %cst_316 : f32 to vector<2x128xf32>
    %695 = arith.maximumf %693, %694 : vector<2x128xf32>
    %c0_317 = arith.constant 0 : index
    %c0_318 = arith.constant 0 : index
    %696 = vector.load %arg24[%c0_317, %c0_318] : memref<128x128xf32, #tpu.memory_space<vmem>>, vector<128x128xf32>
    %cst_319 = arith.constant dense<0.000000e+00> : vector<2x128xf32>
    %697 = tpu.matmul %695, %696, %cst_319 {dimension_numbers = #tpu.dot_dimension_numbers<[1], [0], [0], [1], [0, 0, 1, 1], [], []>} : vector<2x128xf32>, vector<128x128xf32>, vector<2x128xf32> -> vector<2x128xf32>
    %c0_320 = arith.constant 0 : index
    %c0_321 = arith.constant 0 : index
    %698 = vector.load %arg25[%c0_320, %c0_321] : memref<1x128xf32, #tpu.memory_space<vmem>>, vector<1x128xf32>
    %699 = vector.broadcast %698 : vector<1x128xf32> to vector<2x128xf32>
    %700 = arith.addf %697, %699 : vector<2x128xf32>
    %c0_322 = arith.constant 0 : index
    %c0_323 = arith.constant 0 : index
    %701 = vector.load %arg26[%c0_322, %c0_323] : memref<2x128xf32, #tpu.memory_space<vmem>>, vector<2x128xf32>
    tpu.vector_store %arg26[%c0_322, %c0_323], %700 {strides = array<i32>} : memref<2x128xf32, #tpu.memory_space<vmem>>, vector<2x128xf32>,
    return
  }
  func.func @transform_0(%arg0: i32) -> (i32, i32, i32) {
    %c0_i32 = arith.constant 0 : i32
    %c0_i32_0 = arith.constant 0 : i32
    %c0_i32_1 = arith.constant 0 : i32
    return %arg0, %c0_i32, %c0_i32_0 : i32, i32, i32
  }
  func.func @transform_1(%arg0: i32) -> (i32, i32) {
    %c0_i32 = arith.constant 0 : i32
    %c0_i32_0 = arith.constant 0 : i32
    %c0_i32_1 = arith.constant 0 : i32
    return %c0_i32, %c0_i32_0 : i32, i32
  }
  func.func @transform_2(%arg0: i32) -> (i32, i32) {
    %c0_i32 = arith.constant 0 : i32
    %c0_i32_0 = arith.constant 0 : i32
    %c0_i32_1 = arith.constant 0 : i32
    return %c0_i32, %c0_i32_0 : i32, i32
  }
  func.func @transform_3(%arg0: i32) -> (i32, i32) {
    %c0_i32 = arith.constant 0 : i32
    %c0_i32_0 = arith.constant 0 : i32
    %c0_i32_1 = arith.constant 0 : i32
    return %c0_i32, %c0_i32_0 : i32, i32
  }
  func.func @transform_4(%arg0: i32) -> (i32, i32) {
    %c0_i32 = arith.constant 0 : i32
    %c0_i32_0 = arith.constant 0 : i32
    %c0_i32_1 = arith.constant 0 : i32
    return %c0_i32, %c0_i32_0 : i32, i32
  }
  func.func @transform_5(%arg0: i32) -> (i32, i32) {
    %c0_i32 = arith.constant 0 : i32
    %c0_i32_0 = arith.constant 0 : i32
    %c0_i32_1 = arith.constant 0 : i32
    return %c0_i32, %c0_i32_0 : i32, i32
  }
  func.func @transform_6(%arg0: i32) -> (i32, i32) {
    %c0_i32 = arith.constant 0 : i32
    %c0_i32_0 = arith.constant 0 : i32
    %c0_i32_1 = arith.constant 0 : i32
    return %c0_i32, %c0_i32_0 : i32, i32
  }
  func.func @transform_7(%arg0: i32) -> (i32, i32) {
    %c0_i32 = arith.constant 0 : i32
    %c0_i32_0 = arith.constant 0 : i32
    %c0_i32_1 = arith.constant 0 : i32
    return %c0_i32, %c0_i32_0 : i32, i32
  }
  func.func @transform_8(%arg0: i32) -> (i32, i32) {
    %c0_i32 = arith.constant 0 : i32
    %c0_i32_0 = arith.constant 0 : i32
    %c0_i32_1 = arith.constant 0 : i32
    return %c0_i32, %c0_i32_0 : i32, i32
  }
  func.func @transform_9(%arg0: i32) -> (i32, i32) {
    %c0_i32 = arith.constant 0 : i32
    %c0_i32_0 = arith.constant 0 : i32
    %c0_i32_1 = arith.constant 0 : i32
    return %c0_i32, %c0_i32_0 : i32, i32
  }
  func.func @transform_10(%arg0: i32) -> (i32, i32) {
    %c0_i32 = arith.constant 0 : i32
    %c0_i32_0 = arith.constant 0 : i32
    %c0_i32_1 = arith.constant 0 : i32
    return %c0_i32, %c0_i32_0 : i32, i32
  }
  func.func @transform_11(%arg0: i32) -> (i32, i32) {
    %c0_i32 = arith.constant 0 : i32
    %c0_i32_0 = arith.constant 0 : i32
    %c0_i32_1 = arith.constant 0 : i32
    return %c0_i32, %c0_i32_0 : i32, i32
  }
  func.func @transform_12(%arg0: i32) -> (i32, i32) {
    %c0_i32 = arith.constant 0 : i32
    %c0_i32_0 = arith.constant 0 : i32
    %c0_i32_1 = arith.constant 0 : i32
    return %c0_i32, %c0_i32_0 : i32, i32
  }
  func.func @transform_13(%arg0: i32) -> (i32, i32) {
    %c0_i32 = arith.constant 0 : i32
    %c0_i32_0 = arith.constant 0 : i32
    %c0_i32_1 = arith.constant 0 : i32
    return %c0_i32, %c0_i32_0 : i32, i32
  }
  func.func @transform_14(%arg0: i32) -> (i32, i32) {
    %c0_i32 = arith.constant 0 : i32
    %c0_i32_0 = arith.constant 0 : i32
    %c0_i32_1 = arith.constant 0 : i32
    return %c0_i32, %c0_i32_0 : i32, i32
  }
  func.func @transform_15(%arg0: i32) -> (i32, i32) {
    %c0_i32 = arith.constant 0 : i32
    %c0_i32_0 = arith.constant 0 : i32
    %c0_i32_1 = arith.constant 0 : i32
    return %c0_i32, %c0_i32_0 : i32, i32
  }
  func.func @transform_16(%arg0: i32) -> (i32, i32) {
    %c0_i32 = arith.constant 0 : i32
    %c0_i32_0 = arith.constant 0 : i32
    %c0_i32_1 = arith.constant 0 : i32
    return %c0_i32, %c0_i32_0 : i32, i32
  }
  func.func @transform_17(%arg0: i32) -> (i32, i32) {
    %c0_i32 = arith.constant 0 : i32
    %c0_i32_0 = arith.constant 0 : i32
    %c0_i32_1 = arith.constant 0 : i32
    return %c0_i32, %c0_i32_0 : i32, i32
  }
  func.func @transform_18(%arg0: i32) -> (i32, i32) {
    %c0_i32 = arith.constant 0 : i32
    %c0_i32_0 = arith.constant 0 : i32
    %c0_i32_1 = arith.constant 0 : i32
    return %c0_i32, %c0_i32_0 : i32, i32
  }
  func.func @transform_19(%arg0: i32) -> (i32, i32) {
    %c0_i32 = arith.constant 0 : i32
    %c0_i32_0 = arith.constant 0 : i32
    %c0_i32_1 = arith.constant 0 : i32
    return %c0_i32, %c0_i32_0 : i32, i32
  }
  func.func @transform_20(%arg0: i32) -> (i32, i32) {
    %c0_i32 = arith.constant 0 : i32
    %c0_i32_0 = arith.constant 0 : i32
    %c0_i32_1 = arith.constant 0 : i32
    return %c0_i32, %c0_i32_0 : i32, i32
  }
  func.func @transform_21(%arg0: i32) -> (i32, i32) {
    %c0_i32 = arith.constant 0 : i32
    %c0_i32_0 = arith.constant 0 : i32
    %c0_i32_1 = arith.constant 0 : i32
    return %c0_i32, %c0_i32_0 : i32, i32
  }
  func.func @transform_22(%arg0: i32) -> (i32, i32) {
    %c0_i32 = arith.constant 0 : i32
    %c0_i32_0 = arith.constant 0 : i32
    %c0_i32_1 = arith.constant 0 : i32
    return %c0_i32, %c0_i32_0 : i32, i32
  }
  func.func @transform_23(%arg0: i32) -> (i32, i32) {
    %c0_i32 = arith.constant 0 : i32
    %c0_i32_0 = arith.constant 0 : i32
    %c0_i32_1 = arith.constant 0 : i32
    return %c0_i32, %c0_i32_0 : i32, i32
  }
  func.func @transform_24(%arg0: i32) -> (i32, i32) {
    %c0_i32 = arith.constant 0 : i32
    %c0_i32_0 = arith.constant 0 : i32
    %c0_i32_1 = arith.constant 0 : i32
    return %c0_i32, %c0_i32_0 : i32, i32
  }
  func.func @transform_25(%arg0: i32) -> (i32, i32) {
    %c0_i32 = arith.constant 0 : i32
    %c0_i32_0 = arith.constant 0 : i32
    return %arg0, %c0_i32 : i32, i32
  }
}

</mosaic_0001>

<llo_original>
// kernel: tpu_custom_call.1
$region0: #{tpu_custom_call.1}
  #allocation0 [shape = 'u32[]', space=smem, size = 0x4, offset = 0x4, fixed_abs, tag = 'smem constant byte address 0x4 - core index']
  #allocation1 [shape = 'u32[72,128]{1,0:T(1,128)}', space=vmem, size = 0x9000, scoped, tag = 'internal scratch']
  #allocation2 [shape = 'f32[2,42,20]{2,1,0:T(8,128)}', space=vmem, size = 0xc000, scoped, tag = 'scratch operand']
  #allocation3 [shape = 'f32[64,32]{1,0:T(8,128)}', space=vmem, size = 0x8000, scoped, tag = 'scratch operand']
  #allocation4 [shape = 'f32[2,26,160]{2,1,0:T(8,128)}', space=vmem, size = 0x10000, scoped, tag = 'scratch operand']
  #allocation5 [shape = 'f32[32,64]{1,0:T(8,128)}', space=vmem, size = 0x4000, scoped, tag = 'scratch operand']
  #allocation6 [shape = 'f32[2,18,320]{2,1,0:T(8,128)}', space=vmem, size = 0x12000, scoped, tag = 'scratch operand']
  #allocation7 [shape = 'f32[16,128]{1,0:T(8,128)}', space=vmem, size = 0x2000, scoped, tag = 'scratch operand']
  #allocation8 [shape = 'f32[32,128]{1,0:T(8,128)}', space=vmem, size = 0x4000, scoped, tag = 'scratch operand']
  #allocation9 [shape = 'f32[32,96]{1,0:T(8,128)}', space=vmem, size = 0x4000, scoped, tag = 'scratch operand']
  #allocation10 [shape = 'f32[32,96]{1,0:T(8,128)}', space=vmem, size = 0x4000, scoped, tag = 'scratch operand']
  #allocation11 [shape = 'f32[32,32]{1,0:T(8,128)}', space=vmem, size = 0x4000, scoped, tag = 'scratch operand']
  #allocation12 [shape = 'f32[32,32]{1,0:T(8,128)}', space=vmem, size = 0x4000, scoped, tag = 'scratch operand']
  #allocation13 [shape = 'f32[32,96]{1,0:T(8,128)}', space=vmem, size = 0x4000, scoped, tag = 'scratch operand']
  #allocation14 [shape = 'f32[32,96]{1,0:T(8,128)}', space=vmem, size = 0x4000, scoped, tag = 'scratch operand']
  #allocation15 [shape = 'f32[32,32]{1,0:T(8,128)}', space=vmem, size = 0x4000, scoped, tag = 'scratch operand']
  #allocation16 [shape = 'f32[32,32]{1,0:T(8,128)}', space=vmem, size = 0x4000, scoped, tag = 'scratch operand']
  #allocation17 [shape = 'f32[1,1]{1,0:T(1,128)S(1)}', space=vmem, size = 0x200, scoped, tag = 'scoped memory for tpu_custom_call.1']
  %s0 = inlined_call_operand.vmem [shape: f32[2,32,4], index: 0, kind: input, shape index: {}]
  %s1 = inlined_call_operand.vmem [shape: f32[20,32], index: 1, kind: input, shape index: {}]
  %s2 = inlined_call_operand.vmem [shape: f32[1,32], index: 2, kind: input, shape index: {}]
  %s3 = inlined_call_operand.vmem [shape: f32[160,64], index: 3, kind: input, shape index: {}]
  %s4 = inlined_call_operand.vmem [shape: f32[1,64], index: 4, kind: input, shape index: {}]
  %s5 = inlined_call_operand.vmem [shape: f32[320,128], index: 5, kind: input, shape index: {}]
  %s6 = inlined_call_operand.vmem [shape: f32[1,128], index: 6, kind: input, shape index: {}]
  %s7 = inlined_call_operand.vmem [shape: f32[128,192], index: 7, kind: input, shape index: {}]
  %s8 = inlined_call_operand.vmem [shape: f32[1,192], index: 8, kind: input, shape index: {}]
  %s9 = inlined_call_operand.hbm [shape: f32[64,192], index: 9, kind: input, shape index: {}]
  %s10 = inlined_call_operand.vmem [shape: f32[1,192], index: 10, kind: input, shape index: {}]
  %s11 = inlined_call_operand.hbm [shape: f32[64,192], index: 11, kind: input, shape index: {}]
  %s12 = inlined_call_operand.vmem [shape: f32[1,192], index: 12, kind: input, shape index: {}]
  %s13 = inlined_call_operand.hbm [shape: f32[64,192], index: 13, kind: input, shape index: {}]
  %s14 = inlined_call_operand.vmem [shape: f32[1,192], index: 14, kind: input, shape index: {}]
  %s15 = inlined_call_operand.hbm [shape: f32[64,64], index: 15, kind: input, shape index: {}]
  %s16 = inlined_call_operand.vmem [shape: f32[1,64], index: 16, kind: input, shape index: {}]
  %s17 = inlined_call_operand.vmem [shape: f32[1,64], index: 17, kind: input, shape index: {}]
  %s18 = inlined_call_operand.<no memory space> [shape: f32[1,1], index: 18, kind: input, shape index: {}]
  %s19 = inlined_call_operand.hbm [shape: f32[64,256], index: 19, kind: input, shape index: {}]
  %s20 = inlined_call_operand.vmem [shape: f32[1,256], index: 20, kind: input, shape index: {}]
  %s21 = inlined_call_operand.vmem [shape: f32[256,128], index: 21, kind: input, shape index: {}]
  %s22 = inlined_call_operand.vmem [shape: f32[1,128], index: 22, kind: input, shape index: {}]
  %s23 = inlined_call_operand.hbm [shape: f32[128,128], index: 23, kind: input, shape index: {}]
  %s24 = inlined_call_operand.vmem [shape: f32[1,128], index: 24, kind: input, shape index: {}]
  %s25 = inlined_call_operand.hbm [shape: f32[2,128], index: 25, kind: output, shape index: {}]
  %s26 = sld [smem:[#allocation0]]
  $region134: #{tpu_custom_call.1} parent=0
    _
  %s28 = ssub.s32 1, %s26
  %s29 = scalar_select 0, %s28, %s26
  %v30 = vstv %s18
  %31 = vst [vmem:[#allocation17] sm:$0x1] %v30
  $region1: #{tpu_custom_call.1} parent=0
    #allocation18 [shape = 'u8[65536]{0}', space=vmem, size = 0x10000, scoped, tag = 'input window, operand 9, single buffered']
    #allocation19 [shape = 's32[1]{0}', space=sflag, size = 0x4, scoped, tag = 'scoped memory for tpu_custom_call.1']
    #allocation20 [shape = 's32[1]{0}', space=sflag, size = 0x4, scoped, tag = 'scoped memory for tpu_custom_call.1']
    #allocation21 [shape = 'u8[65536]{0}', space=vmem, size = 0x10000, scoped, tag = 'input window, operand 11, single buffered']
    #allocation22 [shape = 's32[1]{0}', space=sflag, size = 0x4, scoped, tag = 'scoped memory for tpu_custom_call.1']
    #allocation23 [shape = 'u8[65536]{0}', space=vmem, size = 0x10000, scoped, tag = 'input window, operand 13, single buffered']
    #allocation24 [shape = 'u8[32768]{0}', space=vmem, size = 0x8000, scoped, tag = 'input window, operand 15, single buffered']
    #allocation25 [shape = 's32[1]{0}', space=sflag, size = 0x4, scoped, tag = 'scoped memory for tpu_custom_call.1']
    #allocation26 [shape = 'u8[65536]{0}', space=vmem, size = 0x10000, scoped, tag = 'input window, operand 19, single buffered']
    #allocation27 [shape = 'u8[65536]{0}', space=vmem, size = 0x10000, scoped, tag = 'input window, operand 23, single buffered']
    #allocation28 [shape = 's32[1]{0}', space=sflag, size = 0x4, scoped, tag = 'scoped memory for tpu_custom_call.1']
    #allocation29 [shape = 'u8[1024]{0}', space=vmem, size = 0x400, scoped, tag = 'output window, operand 0, single buffered']
    %32 = vsyncpa [#allocation19], 0
    %33 = vsyncpa [#allocation22], 0
    %34 = vsyncpa [#allocation25], 0
    %35 = vsyncpa [#allocation28], 0
    %36 = vsyncpa [#allocation20], 0
    // Predicated region
    $region2: #{tpu_custom_call.1} parent=1 // pred_check
      _
    $region3: #{tpu_custom_call.1} parent=1 // pred_check_branch
      %38 = sbr.rel (0) target = $region5
    $region4: #{tpu_custom_call.1} parent=1 // pred_region
      _
    $region5: #{tpu_custom_call.1} parent=1 // pred_fallthru
      _
    // Predicated region
    $region6: #{tpu_custom_call.1} parent=1 // pred_check
      _
    $region7: #{tpu_custom_call.1} parent=1 // pred_check_branch
      %40 = sbr.rel (0) target = $region9
    $region8: #{tpu_custom_call.1} parent=1 // pred_region
      _
    $region9: #{tpu_custom_call.1} parent=1 // pred_fallthru
      _
    // Predicated region
    $region10: #{tpu_custom_call.1} parent=1 // pred_check
      _
    $region11: #{tpu_custom_call.1} parent=1 // pred_check_branch
      %42 = sbr.rel (0) target = $region13
    $region12: #{tpu_custom_call.1} parent=1 // pred_region
      _
    $region13: #{tpu_custom_call.1} parent=1 // pred_fallthru
      _
    // Predicated region
    $region14: #{tpu_custom_call.1} parent=1 // pred_check
      _
    $region15: #{tpu_custom_call.1} parent=1 // pred_check_branch
      %44 = sbr.rel (0) target = $region17
    $region16: #{tpu_custom_call.1} parent=1 // pred_region
      _
    $region17: #{tpu_custom_call.1} parent=1 // pred_fallthru
      _
    // Predicated region
    $region18: #{tpu_custom_call.1} parent=1 // pred_check
      _
    $region19: #{tpu_custom_call.1} parent=1 // pred_check_branch
      %46 = sbr.rel (0) target = $region21
    $region20: #{tpu_custom_call.1} parent=1 // pred_region
      _
    $region21: #{tpu_custom_call.1} parent=1 // pred_fallthru
      _
    // Predicated region
    $region22: #{tpu_custom_call.1} parent=1 // pred_check
      _
    $region23: #{tpu_custom_call.1} parent=1 // pred_check_branch
      %48 = sbr.rel (0) target = $region25
    $region24: #{tpu_custom_call.1} parent=1 // pred_region
      _
    $region25: #{tpu_custom_call.1} parent=1 // pred_fallthru
      _
    // Predicated region
    $region26: #{tpu_custom_call.1} parent=1 // pred_check
      _
    $region27: #{tpu_custom_call.1} parent=1 // pred_check_branch
      %50 = sbr.rel (0) target = $region29
    $region28: #{tpu_custom_call.1} parent=1 // pred_region
      _
    $region29: #{tpu_custom_call.1} parent=1 // pred_fallthru
      _
    // Predicated region
    $region30: #{tpu_custom_call.1} parent=1 // pred_check
      _
    $region31: #{tpu_custom_call.1} parent=1 // pred_check_branch
      %52 = sbr.rel (0) target = $region33
    $region32: #{tpu_custom_call.1} parent=1 // pred_region
      _
    $region33: #{tpu_custom_call.1} parent=1 // pred_fallthru
      _
    // Predicated region
    $region34: #{tpu_custom_call.1} parent=1 // pred_check
      _
    $region35: #{tpu_custom_call.1} parent=1 // pred_check_branch
      %54 = sbr.rel (0) target = $region37
    $region36: #{tpu_custom_call.1} parent=1 // pred_region
      _
    $region37: #{tpu_custom_call.1} parent=1 // pred_fallthru
      _
    // Predicated region
    $region38: #{tpu_custom_call.1} parent=1 // pred_check
      _
    $region39: #{tpu_custom_call.1} parent=1 // pred_check_branch
      %56 = sbr.rel (0) target = $region41
    $region40: #{tpu_custom_call.1} parent=1 // pred_region
      %58 = vsyncadd [#allocation19], 0
      %s59 = sshll.u32 %s9, 4
      %s60 = int_to_ptr.hbm [resolvable:$true] %s59
      %s61 = sshll.u32 [#allocation18], 4
      %s62 = int_to_ptr.vmem [resolvable:$true] %s61
      %67 = dma.hbm_to_vmem [thread:$0]  %s60, 2048, %s62, [#allocation19], 256, 256, 16
    $region41: #{tpu_custom_call.1} parent=1 // pred_fallthru
      _
    // Predicated region
    $region42: #{tpu_custom_call.1} parent=1 // pred_check
      _
    $region43: #{tpu_custom_call.1} parent=1 // pred_check_branch
      %69 = sbr.rel (0) target = $region45
    $region44: #{tpu_custom_call.1} parent=1 // pred_region
      _
    $region45: #{tpu_custom_call.1} parent=1 // pred_fallthru
      _
    // Predicated region
    $region46: #{tpu_custom_call.1} parent=1 // pred_check
      _
    $region47: #{tpu_custom_call.1} parent=1 // pred_check_branch
      %71 = sbr.rel (0) target = $region49
    $region48: #{tpu_custom_call.1} parent=1 // pred_region
      %73 = vsyncadd [#allocation22], 0
      %s74 = sshll.u32 %s11, 4
      %s75 = int_to_ptr.hbm [resolvable:$true] %s74
      %s76 = sshll.u32 [#allocation21], 4
      %s77 = int_to_ptr.vmem [resolvable:$true] %s76
      %82 = dma.hbm_to_vmem [thread:$0]  %s75, 2048, %s77, [#allocation22], 256, 256, 16
    $region49: #{tpu_custom_call.1} parent=1 // pred_fallthru
      _
    // Predicated region
    $region50: #{tpu_custom_call.1} parent=1 // pred_check
      _
    $region51: #{tpu_custom_call.1} parent=1 // pred_check_branch
      %84 = sbr.rel (0) target = $region53
    $region52: #{tpu_custom_call.1} parent=1 // pred_region
      _
    $region53: #{tpu_custom_call.1} parent=1 // pred_fallthru
      _
    // Predicated region
    $region54: #{tpu_custom_call.1} parent=1 // pred_check
      _
    $region55: #{tpu_custom_call.1} parent=1 // pred_check_branch
      %86 = sbr.rel (0) target = $region57
    $region56: #{tpu_custom_call.1} parent=1 // pred_region
      %88 = vsyncadd [#allocation22], 0
      %s89 = sshll.u32 %s13, 4
      %s90 = int_to_ptr.hbm [resolvable:$true] %s89
      %s91 = sshll.u32 [#allocation23], 4
      %s92 = int_to_ptr.vmem [resolvable:$true] %s91
      %97 = dma.hbm_to_vmem [thread:$0]  %s90, 2048, %s92, [#allocation22], 256, 256, 16
    $region57: #{tpu_custom_call.1} parent=1 // pred_fallthru
      _
    // Predicated region
    $region58: #{tpu_custom_call.1} parent=1 // pred_check
      _
    $region59: #{tpu_custom_call.1} parent=1 // pred_check_branch
      %99 = sbr.rel (0) target = $region61
    $region60: #{tpu_custom_call.1} parent=1 // pred_region
      _
    $region61: #{tpu_custom_call.1} parent=1 // pred_fallthru
      _
    // Predicated region
    $region62: #{tpu_custom_call.1} parent=1 // pred_check
      _
    $region63: #{tpu_custom_call.1} parent=1 // pred_check_branch
      %101 = sbr.rel (0) target = $region65
    $region64: #{tpu_custom_call.1} parent=1 // pred_region
      %103 = vsyncadd [#allocation25], 0
      %s104 = sshll.u32 %s15, 4
      %s105 = int_to_ptr.hbm [resolvable:$true] %s104
      %s106 = sshll.u32 [#allocation24], 4
      %s107 = int_to_ptr.vmem [resolvable:$true] %s106
      %112 = dma.hbm_to_vmem [thread:$0]  %s105, 1024, %s107, [#allocation25], 128, 128, 8
    $region65: #{tpu_custom_call.1} parent=1 // pred_fallthru
      _
    // Predicated region
    $region66: #{tpu_custom_call.1} parent=1 // pred_check
      _
    $region67: #{tpu_custom_call.1} parent=1 // pred_check_branch
      %114 = sbr.rel (0) target = $region69
    $region68: #{tpu_custom_call.1} parent=1 // pred_region
      _
    $region69: #{tpu_custom_call.1} parent=1 // pred_fallthru
      _
    // Predicated region
    $region70: #{tpu_custom_call.1} parent=1 // pred_check
      _
    $region71: #{tpu_custom_call.1} parent=1 // pred_check_branch
      %116 = sbr.rel (0) target = $region73
    $region72: #{tpu_custom_call.1} parent=1 // pred_region
      _
    $region73: #{tpu_custom_call.1} parent=1 // pred_fallthru
      _
    // Predicated region
    $region74: #{tpu_custom_call.1} parent=1 // pred_check
      _
    $region75: #{tpu_custom_call.1} parent=1 // pred_check_branch
      %118 = sbr.rel (0) target = $region77
    $region76: #{tpu_custom_call.1} parent=1 // pred_region
      _
    $region77: #{tpu_custom_call.1} parent=1 // pred_fallthru
      _
    // Predicated region
    $region78: #{tpu_custom_call.1} parent=1 // pred_check
      _
    $region79: #{tpu_custom_call.1} parent=1 // pred_check_branch
      %120 = sbr.rel (0) target = $region81
    $region80: #{tpu_custom_call.1} parent=1 // pred_region
      %122 = vsyncadd [#allocation25], 0
      %s123 = sshll.u32 %s19, 4
      %s124 = int_to_ptr.hbm [resolvable:$true] %s123
      %s125 = sshll.u32 [#allocation26], 4
      %s126 = int_to_ptr.vmem [resolvable:$true] %s125
      %131 = dma.hbm_to_vmem [thread:$0]  %s124, 2048, %s126, [#allocation25], 256, 256, 16
    $region81: #{tpu_custom_call.1} parent=1 // pred_fallthru
      _
    // Predicated region
    $region82: #{tpu_custom_call.1} parent=1 // pred_check
      _
    $region83: #{tpu_custom_call.1} parent=1 // pred_check_branch
      %133 = sbr.rel (0) target = $region85
    $region84: #{tpu_custom_call.1} parent=1 // pred_region
      _
    $region85: #{tpu_custom_call.1} parent=1 // pred_fallthru
      _
    // Predicated region
    $region86: #{tpu_custom_call.1} parent=1 // pred_check
      _
    $region87: #{tpu_custom_call.1} parent=1 // pred_check_branch
      %135 = sbr.rel (0) target = $region89
    $region88: #{tpu_custom_call.1} parent=1 // pred_region
      _
    $region89: #{tpu_custom_call.1} parent=1 // pred_fallthru
      _
    // Predicated region
    $region90: #{tpu_custom_call.1} parent=1 // pred_check
      _
    $region91: #{tpu_custom_call.1} parent=1 // pred_check_branch
      %137 = sbr.rel (0) target = $region93
    $region92: #{tpu_custom_call.1} parent=1 // pred_region
      _
    $region93: #{tpu_custom_call.1} parent=1 // pred_fallthru
      _
    // Predicated region
    $region94: #{tpu_custom_call.1} parent=1 // pred_check
      _
    $region95: #{tpu_custom_call.1} parent=1 // pred_check_branch
      %139 = sbr.rel (0) target = $region97
    $region96: #{tpu_custom_call.1} parent=1 // pred_region
      %141 = vsyncadd [#allocation28], 0
      %s142 = sshll.u32 %s23, 4
      %s143 = int_to_ptr.hbm [resolvable:$true] %s142
      %s144 = sshll.u32 [#allocation27], 4
      %s145 = int_to_ptr.vmem [resolvable:$true] %s144
      %150 = dma.hbm_to_vmem [thread:$0]  %s143, 2048, %s145, [#allocation28], 128, 128, 8
    $region97: #{tpu_custom_call.1} parent=1 // pred_fallthru
      _
    // Predicated region
    $region98: #{tpu_custom_call.1} parent=1 // pred_check
      _
    $region99: #{tpu_custom_call.1} parent=1 // pred_check_branch
      %152 = sbr.rel (0) target = $region101
    $region100: #{tpu_custom_call.1} parent=1 // pred_region
      _
    $region101: #{tpu_custom_call.1} parent=1 // pred_fallthru
      _
    // Predicated region
    $region102: #{tpu_custom_call.1} parent=1 // pred_check
      _
    $region103: #{tpu_custom_call.1} parent=1 // pred_check_branch
      %154 = sbr.rel (0) target = $region105
    $region104: #{tpu_custom_call.1} parent=1 // pred_region
      %156 = dma.done [#allocation19], 2048
    $region105: #{tpu_custom_call.1} parent=1 // pred_fallthru
      _
    // Predicated region
    $region106: #{tpu_custom_call.1} parent=1 // pred_check
      _
    $region107: #{tpu_custom_call.1} parent=1 // pred_check_branch
      %158 = sbr.rel (0) target = $region109
    $region108: #{tpu_custom_call.1} parent=1 // pred_region
      %160 = dma.done [#allocation22], 2048
    $region109: #{tpu_custom_call.1} parent=1 // pred_fallthru
      _
    // Predicated region
    $region110: #{tpu_custom_call.1} parent=1 // pred_check
      _
    $region111: #{tpu_custom_call.1} parent=1 // pred_check_branch
      %162 = sbr.rel (0) target = $region113
    $region112: #{tpu_custom_call.1} parent=1 // pred_region
      %164 = dma.done [#allocation22], 2048
    $region113: #{tpu_custom_call.1} parent=1 // pred_fallthru
      _
    // Predicated region
    $region114: #{tpu_custom_call.1} parent=1 // pred_check
      _
    $region115: #{tpu_custom_call.1} parent=1 // pred_check_branch
      %166 = sbr.rel (0) target = $region117
    $region116: #{tpu_custom_call.1} parent=1 // pred_region
      %168 = dma.done [#allocation25], 1024
    $region117: #{tpu_custom_call.1} parent=1 // pred_fallthru
      _
    // Predicated region
    $region118: #{tpu_custom_call.1} parent=1 // pred_check
      _
    $region119: #{tpu_custom_call.1} parent=1 // pred_check_branch
      %170 = sbr.rel (0) target = $region121
    $region120: #{tpu_custom_call.1} parent=1 // pred_region
      %172 = dma.done [#allocation25], 2048
    $region121: #{tpu_custom_call.1} parent=1 // pred_fallthru
      _
    // Predicated region
    $region122: #{tpu_custom_call.1} parent=1 // pred_check
      _
    $region123: #{tpu_custom_call.1} parent=1 // pred_check_branch
      %174 = sbr.rel (0) target = $region125
    $region124: #{tpu_custom_call.1} parent=1 // pred_region
      %176 = dma.done [#allocation28], 2048
    $region125: #{tpu_custom_call.1} parent=1 // pred_fallthru
      _
    %v177 = vld [vmem:[%s0] sm:$0xff]
    %v178 = vld [vmem:[%s0 + $0x8] sm:$0xff]
    %v179 = vld [vmem:[%s0 + $0x10] sm:$0xff]
    %v180 = vld [vmem:[%s0 + $0x18] sm:$0xff]
    %v181 = vld [vmem:[%s0 + $0x20] sm:$0xff]
    %v182 = vld [vmem:[%s0 + $0x28] sm:$0xff]
    %v183 = vld [vmem:[%s0 + $0x30] sm:$0xff]
    %v184 = vld [vmem:[%s0 + $0x38] sm:$0xff]
    %vm185 = vcmask 156672
    %186 = vst.msk [vmem:[#allocation2 + $0x8] sm:$0x3] %vm185, 0.0
    %187 = vst.msk [vmem:[#allocation2 + $0x38] sm:$0x3] %vm185, 0.0
    %188 = vst.msk [vmem:[#allocation2 + $0x26] sm:$0x3] %vm185, 0.0
    %189 = vst.msk [vmem:[#allocation2 + $0x56] sm:$0x3] %vm185, 0.0
    %vm190 = vcmask 31744
    %191 = vst.msk [vmem:[#allocation2 + $0xa] sm:$0xff] %vm190, %v177
    %192 = vst.msk [vmem:[#allocation2 + $0x12] sm:$0xff] %vm190, %v178
    %193 = vst.msk [vmem:[#allocation2 + $0x1a] sm:$0xff] %vm190, %v179
    %194 = vst.msk [vmem:[#allocation2 + $0x22] sm:$0xff] %vm190, %v180
    %195 = vst.msk [vmem:[#allocation2 + $0x3a] sm:$0xff] %vm190, %v181
    %196 = vst.msk [vmem:[#allocation2 + $0x42] sm:$0xff] %vm190, %v182
    %197 = vst.msk [vmem:[#allocation2 + $0x4a] sm:$0xff] %vm190, %v183
    %198 = vst.msk [vmem:[#allocation2 + $0x52] sm:$0xff] %vm190, %v184
    %207 = vrot.lane.b32.xlu0 %v177, 4
    %v208 = vpop.permute.xlu0 %207
    %209 = vrot.lane.b32.xlu0 %v178, 4
    %v210 = vpop.permute.xlu0 %209
    %211 = vrot.lane.b32.xlu0 %v179, 4
    %v212 = vpop.permute.xlu0 %211
    %213 = vrot.lane.b32.xlu0 %v180, 4
    %v214 = vpop.permute.xlu0 %213
    %215 = vrot.lane.b32.xlu0 %v181, 4
    %v216 = vpop.permute.xlu0 %215
    %217 = vrot.lane.b32.xlu0 %v182, 4
    %v218 = vpop.permute.xlu0 %217
    %219 = vrot.lane.b32.xlu0 %v183, 4
    %v220 = vpop.permute.xlu0 %219
    %221 = vrot.lane.b32.xlu0 %v184, 4
    %v222 = vpop.permute.xlu0 %221
    %vm231 = vcmask 64544
    %232 = vst.msk [vmem:[#allocation2 + $0x9] sm:$0xff] %vm231, %v208
    %233 = vst.msk [vmem:[#allocation2 + $0x11] sm:$0xff] %vm231, %v210
    %234 = vst.msk [vmem:[#allocation2 + $0x19] sm:$0xff] %vm231, %v212
    %235 = vst.msk [vmem:[#allocation2 + $0x21] sm:$0xff] %vm231, %v214
    %236 = vst.msk [vmem:[#allocation2 + $0x39] sm:$0xff] %vm231, %v216
    %237 = vst.msk [vmem:[#allocation2 + $0x41] sm:$0xff] %vm231, %v218
    %238 = vst.msk [vmem:[#allocation2 + $0x49] sm:$0xff] %vm231, %v220
    %239 = vst.msk [vmem:[#allocation2 + $0x51] sm:$0xff] %vm231, %v222
    %240 = vrot.lane.b32.xlu0 %v177, 8
    %v241 = vpop.permute.xlu0 %240
    %242 = vrot.lane.b32.xlu0 %v178, 8
    %v243 = vpop.permute.xlu0 %242
    %244 = vrot.lane.b32.xlu0 %v179, 8
    %v245 = vpop.permute.xlu0 %244
    %246 = vrot.lane.b32.xlu0 %v180, 8
    %v247 = vpop.permute.xlu0 %246
    %248 = vrot.lane.b32.xlu0 %v181, 8
    %v249 = vpop.permute.xlu0 %248
    %250 = vrot.lane.b32.xlu0 %v182, 8
    %v251 = vpop.permute.xlu0 %250
    %252 = vrot.lane.b32.xlu0 %v183, 8
    %v253 = vpop.permute.xlu0 %252
    %254 = vrot.lane.b32.xlu0 %v184, 8
    %v255 = vpop.permute.xlu0 %254
    %vm264 = vcmask 97344
    %265 = vst.msk [vmem:[#allocation2 + $0x8] sm:$0xff] %vm264, %v241
    %266 = vst.msk [vmem:[#allocation2 + $0x10] sm:$0xff] %vm264, %v243
    %267 = vst.msk [vmem:[#allocation2 + $0x18] sm:$0xff] %vm264, %v245
    %268 = vst.msk [vmem:[#allocation2 + $0x20] sm:$0xff] %vm264, %v247
    %269 = vst.msk [vmem:[#allocation2 + $0x38] sm:$0xff] %vm264, %v249
    %270 = vst.msk [vmem:[#allocation2 + $0x40] sm:$0xff] %vm264, %v251
    %271 = vst.msk [vmem:[#allocation2 + $0x48] sm:$0xff] %vm264, %v253
    %272 = vst.msk [vmem:[#allocation2 + $0x50] sm:$0xff] %vm264, %v255
    %273 = vrot.lane.b32.xlu0 %v177, 12
    %v274 = vpop.permute.xlu0 %273
    %275 = vrot.lane.b32.xlu0 %v178, 12
    %v276 = vpop.permute.xlu0 %275
    %277 = vrot.lane.b32.xlu0 %v179, 12
    %v278 = vpop.permute.xlu0 %277
    %279 = vrot.lane.b32.xlu0 %v180, 12
    %v280 = vpop.permute.xlu0 %279
    %281 = vrot.lane.b32.xlu0 %v181, 12
    %v282 = vpop.permute.xlu0 %281
    %283 = vrot.lane.b32.xlu0 %v182, 12
    %v284 = vpop.permute.xlu0 %283
    %285 = vrot.lane.b32.xlu0 %v183, 12
    %v286 = vpop.permute.xlu0 %285
    %287 = vrot.lane.b32.xlu0 %v184, 12
    %v288 = vpop.permute.xlu0 %287
    %vm297 = vcmask 130144
    %298 = vst.msk [vmem:[#allocation2 + $0x7] sm:$0xff] %vm297, %v274
    %299 = vst.msk [vmem:[#allocation2 + $0xf] sm:$0xff] %vm297, %v276
    %300 = vst.msk [vmem:[#allocation2 + $0x17] sm:$0xff] %vm297, %v278
    %301 = vst.msk [vmem:[#allocation2 + $0x1f] sm:$0xff] %vm297, %v280
    %302 = vst.msk [vmem:[#allocation2 + $0x37] sm:$0xff] %vm297, %v282
    %303 = vst.msk [vmem:[#allocation2 + $0x3f] sm:$0xff] %vm297, %v284
    %304 = vst.msk [vmem:[#allocation2 + $0x47] sm:$0xff] %vm297, %v286
    %305 = vst.msk [vmem:[#allocation2 + $0x4f] sm:$0xff] %vm297, %v288
    %306 = vrot.lane.b32.xlu0 %v177, 16
    %v307 = vpop.permute.xlu0 %306
    %308 = vrot.lane.b32.xlu0 %v178, 16
    %v309 = vpop.permute.xlu0 %308
    %310 = vrot.lane.b32.xlu0 %v179, 16
    %v311 = vpop.permute.xlu0 %310
    %312 = vrot.lane.b32.xlu0 %v180, 16
    %v313 = vpop.permute.xlu0 %312
    %314 = vrot.lane.b32.xlu0 %v181, 16
    %v315 = vpop.permute.xlu0 %314
    %316 = vrot.lane.b32.xlu0 %v182, 16
    %v317 = vpop.permute.xlu0 %316
    %318 = vrot.lane.b32.xlu0 %v183, 16
    %v319 = vpop.permute.xlu0 %318
    %320 = vrot.lane.b32.xlu0 %v184, 16
    %v321 = vpop.permute.xlu0 %320
    %vm330 = vcmask 162944
    %331 = vst.msk [vmem:[#allocation2 + $0x6] sm:$0xff] %vm330, %v307
    %332 = vst.msk [vmem:[#allocation2 + $0xe] sm:$0xff] %vm330, %v309
    %333 = vst.msk [vmem:[#allocation2 + $0x16] sm:$0xff] %vm330, %v311
    %334 = vst.msk [vmem:[#allocation2 + $0x1e] sm:$0xff] %vm330, %v313
    %335 = vst.msk [vmem:[#allocation2 + $0x36] sm:$0xff] %vm330, %v315
    %336 = vst.msk [vmem:[#allocation2 + $0x3e] sm:$0xff] %vm330, %v317
    %337 = vst.msk [vmem:[#allocation2 + $0x46] sm:$0xff] %vm330, %v319
    %338 = vst.msk [vmem:[#allocation2 + $0x4e] sm:$0xff] %vm330, %v321
    %v339 = vld [vmem:[#allocation2 + $0x8] sm:$0xff]
    %v340 = vld [vmem:[#allocation2 + $0x10] sm:$0xff]
    %v341 = vld [vmem:[#allocation2 + $0x18] sm:$0xff]
    %v342 = vld [vmem:[#allocation2 + $0x20] sm:$0xff]
    %v343 = vld [vmem:[#allocation2 + $0x38] sm:$0xff]
    %v344 = vld [vmem:[#allocation2 + $0x40] sm:$0xff]
    %v345 = vld [vmem:[#allocation2 + $0x48] sm:$0xff]
    %v346 = vld [vmem:[#allocation2 + $0x50] sm:$0xff]
    %v347 = vld [vmem:[%s1] sm:$0xff]
    %v348 = vld [vmem:[%s1 + $0x8] sm:$0xff]
    %v349 = vld [vmem:[%s1 + $0x10] sm:$0xf]
    %v350 = vld [vmem:[%s2] sm:$0x1]
    %v352 = vperm.slane %v350, 0
    %vm354 = vcmask 162816
    %v356 = vsel %vm354, %v339, 0
    %v359 = vsel %vm354, %v340, 0
    %v362 = vsel %vm354, %v341, 0
    %v365 = vsel %vm354, %v342, 0
    %v368 = vsel %vm354, %v343, 0
    %v371 = vsel %vm354, %v344, 0
    %v374 = vsel %vm354, %v345, 0
    %v377 = vsel %vm354, %v346, 0
    %vm379 = vcmask 1043456
    %v381 = vsel %vm379, %v349, 0
    %383 = vmatpush.msra.mxu0 0.0
    %384 = vmatpush.msra.mxu0 0.0
    %385 = vmatpush.msra.mxu0 0.0
    %386 = vmatpush.msra.mxu0 0.0
    %387 = vmatpush.msra.mxu0 0.0
    %388 = vmatpush.msra.mxu0 0.0
    %389 = vmatpush.msra.mxu0 0.0
    %390 = vmatpush.msra.mxu0 0.0
    %391 = vmatpush.msra.mxu0 0.0
    %392 = vmatpush.msra.mxu0 0.0
    %393 = vmatpush.msra.mxu0 0.0
    %394 = vmatpush.msra.mxu0 0.0
    %395 = vmatpush.msra.mxu0 0.0
    %396 = vmatpush.msra.mxu0 %v381
    %397 = vmatpush.msra.mxu0 %v348
    %398 = vmatpush.msra.mxu0 %v347
    %399 = vmatmul.f32.gmra.mxu0 %v356
    %v400 = vpop.f32.mrf.mxu0
    %v401 = vadd.f32 %v352, %v400
    %402 = vmatmul.f32.gmra.mxu0 %v359
    %v403 = vpop.f32.mrf.mxu0
    %v404 = vadd.f32 %v352, %v403
    %405 = vmatmul.f32.gmra.mxu0 %v362
    %v406 = vpop.f32.mrf.mxu0
    %v407 = vadd.f32 %v352, %v406
    %408 = vmatmul.f32.gmra.mxu0 %v365
    %v409 = vpop.f32.mrf.mxu0
    %v410 = vadd.f32 %v352, %v409
    %411 = vmatmul.f32.gmra.mxu0 %v368
    %v412 = vpop.f32.mrf.mxu0
    %v413 = vadd.f32 %v352, %v412
    %414 = vmatmul.f32.gmra.mxu0 %v371
    %v415 = vpop.f32.mrf.mxu0
    %v416 = vadd.f32 %v352, %v415
    %417 = vmatmul.f32.gmra.mxu0 %v374
    %v418 = vpop.f32.mrf.mxu0
    %v419 = vadd.f32 %v352, %v418
    %420 = vmatmul.f32.gmra.mxu0 %v377
    %v421 = vpop.f32.mrf.mxu0
    %v422 = vadd.f32 %v352, %v421
    %423 = vdwg.mxu0
    %v424 = vmax.f32 %v401, 0.0
    %v425 = vmax.f32 %v404, 0.0
    %v426 = vmax.f32 %v407, 0.0
    %v427 = vmax.f32 %v410, 0.0
    %v428 = vmax.f32 %v413, 0.0
    %v429 = vmax.f32 %v416, 0.0
    %v430 = vmax.f32 %v419, 0.0
    %v431 = vmax.f32 %v422, 0.0
    %vm432 = vcmask 261120
    %433 = vst.msk [vmem:[#allocation3] sm:$0xff] %vm432, %v424
    %434 = vst.msk [vmem:[#allocation3 + $0x8] sm:$0xff] %vm432, %v425
    %435 = vst.msk [vmem:[#allocation3 + $0x10] sm:$0xff] %vm432, %v426
    %436 = vst.msk [vmem:[#allocation3 + $0x18] sm:$0xff] %vm432, %v427
    %437 = vst.msk [vmem:[#allocation3 + $0x20] sm:$0xff] %vm432, %v428
    %438 = vst.msk [vmem:[#allocation3 + $0x28] sm:$0xff] %vm432, %v429
    %439 = vst.msk [vmem:[#allocation3 + $0x30] sm:$0xff] %vm432, %v430
    %440 = vst.msk [vmem:[#allocation3 + $0x38] sm:$0xff] %vm432, %v431
    %v441 = vld [vmem:[#allocation3] ss:$2 sm:$0xff]
    %s442 = scalar_lea.vmem [#allocation3], 16
    %v443 = vld [vmem:[%s442] ss:$2 sm:$0xff]
    %s444 = scalar_lea.vmem [#allocation3], 32
    %v445 = vld [vmem:[%s444] ss:$2 sm:$0xff]
    %s446 = scalar_lea.vmem [#allocation3], 48
    %v447 = vld [vmem:[%s446] ss:$2 sm:$0xff]
    %s448 = scalar_lea.vmem [#allocation3], 1
    %v449 = vld [vmem:[%s448] ss:$2 sm:$0xff]
    %s450 = scalar_lea.vmem [#allocation3], 17
    %v451 = vld [vmem:[%s450] ss:$2 sm:$0xff]
    %s452 = scalar_lea.vmem [#allocation3], 33
    %v453 = vld [vmem:[%s452] ss:$2 sm:$0xff]
    %s454 = scalar_lea.vmem [#allocation3], 49
    %v455 = vld [vmem:[%s454] ss:$2 sm:$0xff]
    %v456 = vmax.f32 %v441, %v449
    %v457 = vmax.f32 %v443, %v451
    %v458 = vmax.f32 %v445, %v453
    %v459 = vmax.f32 %v447, %v455
    %460 = vst [vmem:[#allocation4 + $0x10] sm:$0x3] 0.0
    %vm461 = vcmask 254976
    %462 = vst.msk [vmem:[#allocation4 + $0x18] sm:$0x3] %vm461, 0.0
    %463 = vst [vmem:[#allocation4 + $0x50] sm:$0x3] 0.0
    %464 = vst.msk [vmem:[#allocation4 + $0x58] sm:$0x3] %vm461, 0.0
    %465 = vst [vmem:[#allocation4 + $0x20] sm:$0xc0] 0.0
    %vm466 = vcmask 261126
    %467 = vst.msk [vmem:[#allocation4 + $0x28] sm:$0xc0] %vm466, 0.0
    %468 = vst [vmem:[#allocation4 + $0x60] sm:$0xc0] 0.0
    %469 = vst.msk [vmem:[#allocation4 + $0x68] sm:$0xc0] %vm466, 0.0
    %vm474 = vcmask 1041408
    %v475 = vrot.slane %v456, 6
    %v476 = vrot.slane %v457, 6
    %v477 = vsel %vm474, %v475, %v476
    %v478 = vrot.slane %v458, 6
    %v479 = vrot.slane %v459, 6
    %v480 = vsel %vm474, %v478, %v479
    %vm487 = vcmask 261122
    %488 = vst.msk [vmem:[#allocation4 + $0x10] sm:$0xfc] %vm487, %v475
    %489 = vst.msk [vmem:[#allocation4 + $0x20] sm:$0xff] %vm432, %v477
    %490 = vst.msk [vmem:[#allocation4 + $0x30] sm:$0x3] %vm461, %v476
    %491 = vst.msk [vmem:[#allocation4 + $0x50] sm:$0xfc] %vm487, %v478
    %492 = vst.msk [vmem:[#allocation4 + $0x60] sm:$0xff] %vm432, %v480
    %493 = vst.msk [vmem:[#allocation4 + $0x70] sm:$0x3] %vm461, %v479
    %vm494 = vcmask 1040384
    %v495 = vrot.slane %v456, 7
    %v496 = vrot.slane %v457, 7
    %v497 = vsel %vm494, %v495, %v496
    %v498 = vrot.slane %v458, 7
    %v499 = vrot.slane %v459, 7
    %v500 = vsel %vm494, %v498, %v499
    %501 = vrot.lane.b32.xlu0 %v495, 32
    %v502 = vpop.permute.xlu0 %501
    %503 = vrot.lane.b32.xlu0 %v497, 32
    %v504 = vpop.permute.xlu0 %503
    %505 = vrot.lane.b32.xlu0 %v496, 32
    %v506 = vpop.permute.xlu0 %505
    %507 = vrot.lane.b32.xlu0 %v498, 32
    %v508 = vpop.permute.xlu0 %507
    %509 = vrot.lane.b32.xlu0 %v500, 32
    %v510 = vpop.permute.xlu0 %509
    %511 = vrot.lane.b32.xlu0 %v499, 32
    %v512 = vpop.permute.xlu0 %511
    %vm519 = vcmask 523521
    %520 = vst.msk [vmem:[#allocation4 + $0x10] sm:$0xfe] %vm519, %v502
    %vm521 = vcmask 523520
    %522 = vst.msk [vmem:[#allocation4 + $0x20] sm:$0xff] %vm521, %v504
    %vm523 = vcmask 516352
    %524 = vst.msk [vmem:[#allocation4 + $0x30] sm:$0x1] %vm523, %v506
    %525 = vst.msk [vmem:[#allocation4 + $0x50] sm:$0xfe] %vm519, %v508
    %526 = vst.msk [vmem:[#allocation4 + $0x60] sm:$0xff] %vm521, %v510
    %527 = vst.msk [vmem:[#allocation4 + $0x70] sm:$0x1] %vm523, %v512
    %528 = vrot.lane.b32.xlu0 %v456, 64
    %v529 = vpop.permute.xlu0 %528
    %530 = vrot.lane.b32.xlu0 %v457, 64
    %v531 = vpop.permute.xlu0 %530
    %532 = vrot.lane.b32.xlu0 %v458, 64
    %v533 = vpop.permute.xlu0 %532
    %534 = vrot.lane.b32.xlu0 %v459, 64
    %v535 = vpop.permute.xlu0 %534
    %vm540 = vcmask 785920
    %541 = vst.msk [vmem:[#allocation4 + $0x10] sm:$0xff] %vm540, %v529
    %542 = vst.msk [vmem:[#allocation4 + $0x20] sm:$0xff] %vm540, %v531
    %543 = vst.msk [vmem:[#allocation4 + $0x50] sm:$0xff] %vm540, %v533
    %544 = vst.msk [vmem:[#allocation4 + $0x60] sm:$0xff] %vm540, %v535
    %vm545 = vcmask 1046528
    %v546 = vrot.slane %v456, 1
    %v547 = vrot.slane %v457, 1
    %v548 = vsel %vm545, %v546, %v547
    %v549 = vrot.slane %v458, 1
    %v550 = vrot.slane %v459, 1
    %v551 = vsel %vm545, %v549, %v550
    %552 = vrot.lane.b32.xlu0 %v546, 96
    %v553 = vpop.permute.xlu0 %552
    %554 = vrot.lane.b32.xlu0 %v548, 96
    %v555 = vpop.permute.xlu0 %554
    %556 = vrot.lane.b32.xlu0 %v547, 96
    %v557 = vpop.permute.xlu0 %556
    %558 = vrot.lane.b32.xlu0 %v549, 96
    %v559 = vpop.permute.xlu0 %558
    %560 = vrot.lane.b32.xlu0 %v551, 96
    %v561 = vpop.permute.xlu0 %560
    %562 = vrot.lane.b32.xlu0 %v550, 96
    %v563 = vpop.permute.xlu0 %562
    %vm570 = vcmask 1048327
    %571 = vst.msk [vmem:[#allocation4] sm:$0x80] %vm570, %v553
    %vm572 = vcmask 1048320
    %573 = vst.msk [vmem:[#allocation4 + $0x10] sm:$0xff] %vm572, %v555
    %vm574 = vcmask 1047296
    %575 = vst.msk [vmem:[#allocation4 + $0x20] sm:$0x7f] %vm574, %v557
    %576 = vst.msk [vmem:[#allocation4 + $0x40] sm:$0x80] %vm570, %v559
    %577 = vst.msk [vmem:[#allocation4 + $0x50] sm:$0xff] %vm572, %v561
    %578 = vst.msk [vmem:[#allocation4 + $0x60] sm:$0x7f] %vm574, %v563
    %vm579 = vcmask 1045504
    %v580 = vrot.slane %v456, 2
    %v581 = vrot.slane %v457, 2
    %v582 = vsel %vm579, %v580, %v581
    %v583 = vrot.slane %v458, 2
    %v584 = vrot.slane %v459, 2
    %v585 = vsel %vm579, %v583, %v584
    %592 = vst.msk [vmem:[#allocation4 + $0x8] sm:$0xc0] %vm466, %v580
    %593 = vst.msk [vmem:[#allocation4 + $0x18] sm:$0xff] %vm432, %v582
    %vm594 = vcmask 259072
    %595 = vst.msk [vmem:[#allocation4 + $0x28] sm:$0x3f] %vm594, %v581
    %596 = vst.msk [vmem:[#allocation4 + $0x48] sm:$0xc0] %vm466, %v583
    %597 = vst.msk [vmem:[#allocation4 + $0x58] sm:$0xff] %vm432, %v585
    %598 = vst.msk [vmem:[#allocation4 + $0x68] sm:$0x3f] %vm594, %v584
    %v599 = vld [vmem:[#allocation4 + $0x10] sm:$0xff]
    %v600 = vld [vmem:[#allocation4 + $0x18] sm:$0xff]
    %v601 = vld [vmem:[#allocation4 + $0x20] sm:$0xff]
    %v602 = vld [vmem:[#allocation4 + $0x28] sm:$0xff]
    %v603 = vld [vmem:[#allocation4 + $0x50] sm:$0xff]
    %v604 = vld [vmem:[#allocation4 + $0x58] sm:$0xff]
    %v605 = vld [vmem:[#allocation4 + $0x60] sm:$0xff]
    %v606 = vld [vmem:[#allocation4 + $0x68] sm:$0xff]
    %v607 = vld [vmem:[%s3] sm:$0xff]
    %v608 = vld [vmem:[%s3 + $0x8] sm:$0xff]
    %v609 = vld [vmem:[%s3 + $0x10] sm:$0xff]
    %v610 = vld [vmem:[%s3 + $0x18] sm:$0xff]
    %v611 = vld [vmem:[%s3 + $0x20] sm:$0xff]
    %v612 = vld [vmem:[%s3 + $0x28] sm:$0xff]
    %v613 = vld [vmem:[%s3 + $0x30] sm:$0xff]
    %v614 = vld [vmem:[%s3 + $0x38] sm:$0xff]
    %v615 = vld [vmem:[%s3 + $0x40] sm:$0xff]
    %v616 = vld [vmem:[%s3 + $0x48] sm:$0xff]
    %v617 = vld [vmem:[%s3 + $0x50] sm:$0xff]
    %v618 = vld [vmem:[%s3 + $0x58] sm:$0xff]
    %v619 = vld [vmem:[%s3 + $0x60] sm:$0xff]
    %v620 = vld [vmem:[%s3 + $0x68] sm:$0xff]
    %v621 = vld [vmem:[%s3 + $0x70] sm:$0xff]
    %v622 = vld [vmem:[%s3 + $0x78] sm:$0xff]
    %v623 = vld [vmem:[%s3 + $0x80] sm:$0xff]
    %v624 = vld [vmem:[%s3 + $0x88] sm:$0xff]
    %v625 = vld [vmem:[%s3 + $0x90] sm:$0xff]
    %v626 = vld [vmem:[%s3 + $0x98] sm:$0xff]
    %v627 = vld [vmem:[%s4] sm:$0x1]
    %v629 = vperm.slane %v627, 0
    %v632 = vsel %vm432, %v600, 0
    %v635 = vsel %vm432, %v602, 0
    %v638 = vsel %vm432, %v604, 0
    %v641 = vsel %vm432, %v606, 0
    %643 = vmatpush.msra.mxu0 %v622
    %644 = vmatpush.msra.mxu0 %v621
    %645 = vmatpush.msra.mxu0 %v620
    %646 = vmatpush.msra.mxu0 %v619
    %647 = vmatpush.msra.mxu0 %v618
    %648 = vmatpush.msra.mxu0 %v617
    %649 = vmatpush.msra.mxu0 %v616
    %650 = vmatpush.msra.mxu0 %v615
    %651 = vmatpush.msra.mxu0 %v614
    %652 = vmatpush.msra.mxu0 %v613
    %653 = vmatpush.msra.mxu0 %v612
    %654 = vmatpush.msra.mxu0 %v611
    %655 = vmatpush.msra.mxu0 %v610
    %656 = vmatpush.msra.mxu0 %v609
    %657 = vmatpush.msra.mxu0 %v608
    %658 = vmatpush.msra.mxu0 %v607
    %659 = vmatmul.f32.gmra.mxu0 %v599
    %v660 = vpop.f32.mrf.mxu0
    %v661 = vadd.f32 %v629, %v660
    %662 = vmatmul.f32.gmra.mxu0 %v601
    %v663 = vpop.f32.mrf.mxu0
    %v664 = vadd.f32 %v629, %v663
    %665 = vmatmul.f32.gmra.mxu0 %v603
    %v666 = vpop.f32.mrf.mxu0
    %v667 = vadd.f32 %v629, %v666
    %668 = vmatmul.f32.gmra.mxu0 %v605
    %v669 = vpop.f32.mrf.mxu0
    %v670 = vadd.f32 %v629, %v669
    %671 = vdwg.mxu0
    %672 = vmatpush.msra.mxu0 0.0
    %673 = vmatpush.msra.mxu0 0.0
    %674 = vmatpush.msra.mxu0 0.0
    %675 = vmatpush.msra.mxu0 0.0
    %676 = vmatpush.msra.mxu0 0.0
    %677 = vmatpush.msra.mxu0 0.0
    %678 = vmatpush.msra.mxu0 0.0
    %679 = vmatpush.msra.mxu0 0.0
    %680 = vmatpush.msra.mxu0 0.0
    %681 = vmatpush.msra.mxu0 0.0
    %682 = vmatpush.msra.mxu0 0.0
    %683 = vmatpush.msra.mxu0 0.0
    %684 = vmatpush.msra.mxu0 %v626
    %685 = vmatpush.msra.mxu0 %v625
    %686 = vmatpush.msra.mxu0 %v624
    %687 = vmatpush.msra.mxu0 %v623
    %688 = vmatmul.f32.gmra.mxu0 %v632
    %v689 = vpop.f32.mrf.mxu0
    %v690 = vadd.f32 %v661, %v689
    %691 = vmatmul.f32.gmra.mxu0 %v635
    %v692 = vpop.f32.mrf.mxu0
    %v693 = vadd.f32 %v664, %v692
    %694 = vmatmul.f32.gmra.mxu0 %v638
    %v695 = vpop.f32.mrf.mxu0
    %v696 = vadd.f32 %v667, %v695
    %697 = vmatmul.f32.gmra.mxu0 %v641
    %v698 = vpop.f32.mrf.mxu0
    %v699 = vadd.f32 %v670, %v698
    %700 = vdwg.mxu0
    %v701 = vmax.f32 %v690, 0.0
    %v702 = vmax.f32 %v693, 0.0
    %v703 = vmax.f32 %v696, 0.0
    %v704 = vmax.f32 %v699, 0.0
    %vm705 = vcmask 523264
    %706 = vst.msk [vmem:[#allocation5] sm:$0xff] %vm705, %v701
    %707 = vst.msk [vmem:[#allocation5 + $0x8] sm:$0xff] %vm705, %v702
    %708 = vst.msk [vmem:[#allocation5 + $0x10] sm:$0xff] %vm705, %v703
    %709 = vst.msk [vmem:[#allocation5 + $0x18] sm:$0xff] %vm705, %v704
    %v710 = vld [vmem:[#allocation5] ss:$2 sm:$0xff]
    %s711 = scalar_lea.vmem [#allocation5], 16
    %v712 = vld [vmem:[%s711] ss:$2 sm:$0xff]
    %s713 = scalar_lea.vmem [#allocation5], 1
    %v714 = vld [vmem:[%s713] ss:$2 sm:$0xff]
    %s715 = scalar_lea.vmem [#allocation5], 17
    %v716 = vld [vmem:[%s715] ss:$2 sm:$0xff]
    %v717 = vmax.f32 %v710, %v714
    %v718 = vmax.f32 %v712, %v716
    %719 = vst [vmem:[#allocation6 + $0x18] sm:$0x3] 0.0
    %720 = vst [vmem:[#allocation6 + $0x20] sm:$0x3] 0.0
    %vm721 = vcmask 517120
    %722 = vst.msk [vmem:[#allocation6 + $0x28] sm:$0x3] %vm721, 0.0
    %723 = vst [vmem:[#allocation6 + $0x60] sm:$0x3] 0.0
    %724 = vst [vmem:[#allocation6 + $0x68] sm:$0x3] 0.0
    %725 = vst.msk [vmem:[#allocation6 + $0x70] sm:$0x3] %vm721, 0.0
    %726 = vst [vmem:[#allocation6 + $0x18] sm:$0xc0] 0.0
    %727 = vst [vmem:[#allocation6 + $0x20] sm:$0xc0] 0.0
    %vm728 = vcmask 523270
    %729 = vst.msk [vmem:[#allocation6 + $0x28] sm:$0xc0] %vm728, 0.0
    %730 = vst [vmem:[#allocation6 + $0x60] sm:$0xc0] 0.0
    %731 = vst [vmem:[#allocation6 + $0x68] sm:$0xc0] 0.0
    %732 = vst.msk [vmem:[#allocation6 + $0x70] sm:$0xc0] %vm728, 0.0
    %v735 = vrot.slane %v717, 6
    %v736 = vrot.slane %v718, 6
    %vm739 = vcmask 523266
    %740 = vst.msk [vmem:[#allocation6 + $0x18] sm:$0xfc] %vm739, %v735
    %741 = vst.msk [vmem:[#allocation6 + $0x30] sm:$0x3] %vm721, %v735
    %742 = vst.msk [vmem:[#allocation6 + $0x60] sm:$0xfc] %vm739, %v736
    %743 = vst.msk [vmem:[#allocation6 + $0x78] sm:$0x3] %vm721, %v736
    %v744 = vrot.slane %v717, 7
    %v745 = vrot.slane %v718, 7
    %746 = vrot.lane.b32.xlu0 %v744, 64
    %v747 = vpop.permute.xlu0 %746
    %748 = vrot.lane.b32.xlu0 %v745, 64
    %v749 = vpop.permute.xlu0 %748
    %vm752 = vcmask 1048065
    %753 = vst.msk [vmem:[#allocation6 + $0x18] sm:$0xfe] %vm752, %v747
    %vm754 = vcmask 1040896
    %755 = vst.msk [vmem:[#allocation6 + $0x30] sm:$0x1] %vm754, %v747
    %756 = vst.msk [vmem:[#allocation6 + $0x60] sm:$0xfe] %vm752, %v749
    %757 = vst.msk [vmem:[#allocation6 + $0x78] sm:$0x1] %vm754, %v749
    %758 = vst.msk [vmem:[#allocation6 + $0x20] sm:$0xff] %vm705, %v717
    %759 = vst.msk [vmem:[#allocation6 + $0x68] sm:$0xff] %vm705, %v718
    %v760 = vrot.slane %v717, 1
    %v761 = vrot.slane %v718, 1
    %762 = vrot.lane.b32.xlu0 %v760, 64
    %v763 = vpop.permute.xlu0 %762
    %764 = vrot.lane.b32.xlu0 %v761, 64
    %v765 = vpop.permute.xlu0 %764
    %vm768 = vcmask 1048071
    %769 = vst.msk [vmem:[#allocation6 + $0x8] sm:$0x80] %vm768, %v763
    %vm770 = vcmask 1047040
    %771 = vst.msk [vmem:[#allocation6 + $0x20] sm:$0x7f] %vm770, %v763
    %772 = vst.msk [vmem:[#allocation6 + $0x50] sm:$0x80] %vm768, %v765
    %773 = vst.msk [vmem:[#allocation6 + $0x68] sm:$0x7f] %vm770, %v765
    %v774 = vrot.slane %v717, 2
    %v775 = vrot.slane %v718, 2
    %778 = vst.msk [vmem:[#allocation6 + $0x10] sm:$0xc0] %vm728, %v774
    %vm779 = vcmask 521216
    %780 = vst.msk [vmem:[#allocation6 + $0x28] sm:$0x3f] %vm779, %v774
    %781 = vst.msk [vmem:[#allocation6 + $0x58] sm:$0xc0] %vm728, %v775
    %782 = vst.msk [vmem:[#allocation6 + $0x70] sm:$0x3f] %vm779, %v775
    %v783 = vld [vmem:[#allocation6 + $0x18] sm:$0xff]
    %v784 = vld [vmem:[#allocation6 + $0x20] sm:$0xff]
    %v785 = vld [vmem:[#allocation6 + $0x28] sm:$0xff]
    %v786 = vld [vmem:[#allocation6 + $0x60] sm:$0xff]
    %v787 = vld [vmem:[#allocation6 + $0x68] sm:$0xff]
    %v788 = vld [vmem:[#allocation6 + $0x70] sm:$0xff]
    %v789 = vld [vmem:[%s5] sm:$0xff]
    %v790 = vld [vmem:[%s5 + $0x8] sm:$0xff]
    %v791 = vld [vmem:[%s5 + $0x10] sm:$0xff]
    %v792 = vld [vmem:[%s5 + $0x18] sm:$0xff]
    %v793 = vld [vmem:[%s5 + $0x20] sm:$0xff]
    %v794 = vld [vmem:[%s5 + $0x28] sm:$0xff]
    %v795 = vld [vmem:[%s5 + $0x30] sm:$0xff]
    %v796 = vld [vmem:[%s5 + $0x38] sm:$0xff]
    %v797 = vld [vmem:[%s5 + $0x40] sm:$0xff]
    %v798 = vld [vmem:[%s5 + $0x48] sm:$0xff]
    %v799 = vld [vmem:[%s5 + $0x50] sm:$0xff]
    %v800 = vld [vmem:[%s5 + $0x58] sm:$0xff]
    %v801 = vld [vmem:[%s5 + $0x60] sm:$0xff]
    %v802 = vld [vmem:[%s5 + $0x68] sm:$0xff]
    %v803 = vld [vmem:[%s5 + $0x70] sm:$0xff]
    %v804 = vld [vmem:[%s5 + $0x78] sm:$0xff]
    %v805 = vld [vmem:[%s5 + $0x80] sm:$0xff]
    %v806 = vld [vmem:[%s5 + $0x88] sm:$0xff]
    %v807 = vld [vmem:[%s5 + $0x90] sm:$0xff]
    %v808 = vld [vmem:[%s5 + $0x98] sm:$0xff]
    %v809 = vld [vmem:[%s5 + $0xa0] sm:$0xff]
    %v810 = vld [vmem:[%s5 + $0xa8] sm:$0xff]
    %v811 = vld [vmem:[%s5 + $0xb0] sm:$0xff]
    %v812 = vld [vmem:[%s5 + $0xb8] sm:$0xff]
    %v813 = vld [vmem:[%s5 + $0xc0] sm:$0xff]
    %v814 = vld [vmem:[%s5 + $0xc8] sm:$0xff]
    %v815 = vld [vmem:[%s5 + $0xd0] sm:$0xff]
    %v816 = vld [vmem:[%s5 + $0xd8] sm:$0xff]
    %v817 = vld [vmem:[%s5 + $0xe0] sm:$0xff]
    %v818 = vld [vmem:[%s5 + $0xe8] sm:$0xff]
    %v819 = vld [vmem:[%s5 + $0xf0] sm:$0xff]
    %v820 = vld [vmem:[%s5 + $0xf8] sm:$0xff]
    %v821 = vld [vmem:[%s5 + $0x100] sm:$0xff]
    %v822 = vld [vmem:[%s5 + $0x108] sm:$0xff]
    %v823 = vld [vmem:[%s5 + $0x110] sm:$0xff]
    %v824 = vld [vmem:[%s5 + $0x118] sm:$0xff]
    %v825 = vld [vmem:[%s5 + $0x120] sm:$0xff]
    %v826 = vld [vmem:[%s5 + $0x128] sm:$0xff]
    %v827 = vld [vmem:[%s5 + $0x130] sm:$0xff]
    %v828 = vld [vmem:[%s5 + $0x138] sm:$0xff]
    %v829 = vld [vmem:[%s6] sm:$0x1]
    %v831 = vperm.slane %v829, 0
    %v834 = vsel %vm705, %v785, 0
    %v837 = vsel %vm705, %v788, 0
    %839 = vmatpush.msra.mxu0 %v804
    %840 = vmatpush.msra.mxu0 %v803
    %841 = vmatpush.msra.mxu0 %v802
    %842 = vmatpush.msra.mxu0 %v801
    %843 = vmatpush.msra.mxu0 %v800
    %844 = vmatpush.msra.mxu0 %v799
    %845 = vmatpush.msra.mxu0 %v798
    %846 = vmatpush.msra.mxu0 %v797
    %847 = vmatpush.msra.mxu0 %v796
    %848 = vmatpush.msra.mxu0 %v795
    %849 = vmatpush.msra.mxu0 %v794
    %850 = vmatpush.msra.mxu0 %v793
    %851 = vmatpush.msra.mxu0 %v792
    %852 = vmatpush.msra.mxu0 %v791
    %853 = vmatpush.msra.mxu0 %v790
    %854 = vmatpush.msra.mxu0 %v789
    %855 = vmatmul.f32.gmra.mxu0 %v783
    %v856 = vpop.f32.mrf.mxu0
    %v857 = vadd.f32 %v831, %v856
    %858 = vmatmul.f32.gmra.mxu0 %v786
    %v859 = vpop.f32.mrf.mxu0
    %v860 = vadd.f32 %v831, %v859
    %861 = vdwg.mxu0
    %862 = vmatpush.msra.mxu0 %v820
    %863 = vmatpush.msra.mxu0 %v819
    %864 = vmatpush.msra.mxu0 %v818
    %865 = vmatpush.msra.mxu0 %v817
    %866 = vmatpush.msra.mxu0 %v816
    %867 = vmatpush.msra.mxu0 %v815
    %868 = vmatpush.msra.mxu0 %v814
    %869 = vmatpush.msra.mxu0 %v813
    %870 = vmatpush.msra.mxu0 %v812
    %871 = vmatpush.msra.mxu0 %v811
    %872 = vmatpush.msra.mxu0 %v810
    %873 = vmatpush.msra.mxu0 %v809
    %874 = vmatpush.msra.mxu0 %v808
    %875 = vmatpush.msra.mxu0 %v807
    %876 = vmatpush.msra.mxu0 %v806
    %877 = vmatpush.msra.mxu0 %v805
    %878 = vmatmul.f32.gmra.mxu0 %v784
    %v879 = vpop.f32.mrf.mxu0
    %v880 = vadd.f32 %v857, %v879
    %881 = vmatmul.f32.gmra.mxu0 %v787
    %v882 = vpop.f32.mrf.mxu0
    %v883 = vadd.f32 %v860, %v882
    %884 = vdwg.mxu0
    %885 = vmatpush.msra.mxu0 0.0
    %886 = vmatpush.msra.mxu0 0.0
    %887 = vmatpush.msra.mxu0 0.0
    %888 = vmatpush.msra.mxu0 0.0
    %889 = vmatpush.msra.mxu0 0.0
    %890 = vmatpush.msra.mxu0 0.0
    %891 = vmatpush.msra.mxu0 0.0
    %892 = vmatpush.msra.mxu0 0.0
    %893 = vmatpush.msra.mxu0 %v828
    %894 = vmatpush.msra.mxu0 %v827
    %895 = vmatpush.msra.mxu0 %v826
    %896 = vmatpush.msra.mxu0 %v825
    %897 = vmatpush.msra.mxu0 %v824
    %898 = vmatpush.msra.mxu0 %v823
    %899 = vmatpush.msra.mxu0 %v822
    %900 = vmatpush.msra.mxu0 %v821
    %901 = vmatmul.f32.gmra.mxu0 %v834
    %v902 = vpop.f32.mrf.mxu0
    %v903 = vadd.f32 %v880, %v902
    %904 = vmatmul.f32.gmra.mxu0 %v837
    %v905 = vpop.f32.mrf.mxu0
    %v906 = vadd.f32 %v883, %v905
    %907 = vdwg.mxu0
    %v908 = vmax.f32 %v903, 0.0
    %v909 = vmax.f32 %v906, 0.0
    %910 = vst [vmem:[#allocation7] sm:$0xff] %v908
    %911 = vst [vmem:[#allocation7 + $0x8] sm:$0xff] %v909
    %v912 = vld [vmem:[#allocation7] ss:$8 sm:$0x3]
    %s913 = scalar_lea.vmem [#allocation7], 1
    %v914 = vld [vmem:[%s913] ss:$8 sm:$0x3]
    %v915 = vmax.f32 %v912, %v914
    %916 = vst [vmem:[#allocation8] sm:$0x3] %v915
    %s917 = scalar_lea.vmem [#allocation7], 2
    %v918 = vld [vmem:[%s917] ss:$8 sm:$0x3]
    %s919 = scalar_lea.vmem [#allocation7], 3
    %v920 = vld [vmem:[%s919] ss:$8 sm:$0x3]
    %v921 = vmax.f32 %v918, %v920
    %922 = vst [vmem:[#allocation8 + $0x8] sm:$0x3] %v921
    %s923 = scalar_lea.vmem [#allocation7], 4
    %v924 = vld [vmem:[%s923] ss:$8 sm:$0x3]
    %s925 = scalar_lea.vmem [#allocation7], 5
    %v926 = vld [vmem:[%s925] ss:$8 sm:$0x3]
    %v927 = vmax.f32 %v924, %v926
    %928 = vst [vmem:[#allocation8 + $0x10] sm:$0x3] %v927
    %s929 = scalar_lea.vmem [#allocation7], 6
    %v930 = vld [vmem:[%s929] ss:$8 sm:$0x3]
    %s931 = scalar_lea.vmem [#allocation7], 7
    %v932 = vld [vmem:[%s931] ss:$8 sm:$0x3]
    %v933 = vmax.f32 %v930, %v932
    %934 = vst [vmem:[#allocation8 + $0x18] sm:$0x3] %v933
    %v935 = vld [vmem:[#allocation8] sm:$0xff]
    %v936 = vld [vmem:[#allocation8 + $0x8] sm:$0xff]
    %v937 = vld [vmem:[#allocation8 + $0x10] sm:$0xff]
    %v938 = vld [vmem:[#allocation8 + $0x18] sm:$0xff]
    %v939 = vld [vmem:[%s7] sm:$0xff]
    %v940 = vld [vmem:[%s7 + $0x8] sm:$0xff]
    %v941 = vld [vmem:[%s7 + $0x10] sm:$0xff]
    %v942 = vld [vmem:[%s7 + $0x18] sm:$0xff]
    %v943 = vld [vmem:[%s7 + $0x20] sm:$0xff]
    %v944 = vld [vmem:[%s7 + $0x28] sm:$0xff]
    %v945 = vld [vmem:[%s7 + $0x30] sm:$0xff]
    %v946 = vld [vmem:[%s7 + $0x38] sm:$0xff]
    %v947 = vld [vmem:[%s7 + $0x40] sm:$0xff]
    %v948 = vld [vmem:[%s7 + $0x48] sm:$0xff]
    %v949 = vld [vmem:[%s7 + $0x50] sm:$0xff]
    %v950 = vld [vmem:[%s7 + $0x58] sm:$0xff]
    %v951 = vld [vmem:[%s7 + $0x60] sm:$0xff]
    %v952 = vld [vmem:[%s7 + $0x68] sm:$0xff]
    %v953 = vld [vmem:[%s7 + $0x70] sm:$0xff]
    %v954 = vld [vmem:[%s7 + $0x78] sm:$0xff]
    %v955 = vld [vmem:[%s7 + $0x80] sm:$0xff]
    %v956 = vld [vmem:[%s7 + $0x88] sm:$0xff]
    %v957 = vld [vmem:[%s7 + $0x90] sm:$0xff]
    %v958 = vld [vmem:[%s7 + $0x98] sm:$0xff]
    %v959 = vld [vmem:[%s7 + $0xa0] sm:$0xff]
    %v960 = vld [vmem:[%s7 + $0xa8] sm:$0xff]
    %v961 = vld [vmem:[%s7 + $0xb0] sm:$0xff]
    %v962 = vld [vmem:[%s7 + $0xb8] sm:$0xff]
    %v963 = vld [vmem:[%s7 + $0xc0] sm:$0xff]
    %v964 = vld [vmem:[%s7 + $0xc8] sm:$0xff]
    %v965 = vld [vmem:[%s7 + $0xd0] sm:$0xff]
    %v966 = vld [vmem:[%s7 + $0xd8] sm:$0xff]
    %v967 = vld [vmem:[%s7 + $0xe0] sm:$0xff]
    %v968 = vld [vmem:[%s7 + $0xe8] sm:$0xff]
    %v969 = vld [vmem:[%s7 + $0xf0] sm:$0xff]
    %v970 = vld [vmem:[%s7 + $0xf8] sm:$0xff]
    %v971 = vld [vmem:[%s8] sm:$0x3]
    %v973 = vperm.slane %v971, 0
    %v974 = vperm.slane %v971, 1
    %977 = vmatpush.msra.mxu0 %v969
    %978 = vmatpush.msra.mxu0 %v967
    %979 = vmatpush.msra.mxu0 %v965
    %980 = vmatpush.msra.mxu0 %v963
    %981 = vmatpush.msra.mxu0 %v961
    %982 = vmatpush.msra.mxu0 %v959
    %983 = vmatpush.msra.mxu0 %v957
    %984 = vmatpush.msra.mxu0 %v955
    %985 = vmatpush.msra.mxu0 %v953
    %986 = vmatpush.msra.mxu0 %v951
    %987 = vmatpush.msra.mxu0 %v949
    %988 = vmatpush.msra.mxu0 %v947
    %989 = vmatpush.msra.mxu0 %v945
    %990 = vmatpush.msra.mxu0 %v943
    %991 = vmatpush.msra.mxu0 %v941
    %992 = vmatpush.msra.mxu0 %v939
    %993 = vmatmul.f32.gmra.mxu0 %v935
    %v994 = vpop.f32.mrf.mxu0
    %v995 = vadd.f32 %v973, %v994
    %996 = vmatmul.f32.gmra.mxu0 %v936
    %v997 = vpop.f32.mrf.mxu0
    %v998 = vadd.f32 %v973, %v997
    %999 = vmatmul.f32.gmra.mxu0 %v937
    %v1000 = vpop.f32.mrf.mxu0
    %v1001 = vadd.f32 %v973, %v1000
    %1002 = vmatmul.f32.gmra.mxu0 %v938
    %v1003 = vpop.f32.mrf.mxu0
    %v1004 = vadd.f32 %v973, %v1003
    %1005 = vdwg.mxu0
    %1006 = vmatpush.msra.mxu0 %v970
    %1007 = vmatpush.msra.mxu0 %v968
    %1008 = vmatpush.msra.mxu0 %v966
    %1009 = vmatpush.msra.mxu0 %v964
    %1010 = vmatpush.msra.mxu0 %v962
    %1011 = vmatpush.msra.mxu0 %v960
    %1012 = vmatpush.msra.mxu0 %v958
    %1013 = vmatpush.msra.mxu0 %v956
    %1014 = vmatpush.msra.mxu0 %v954
    %1015 = vmatpush.msra.mxu0 %v952
    %1016 = vmatpush.msra.mxu0 %v950
    %1017 = vmatpush.msra.mxu0 %v948
    %1018 = vmatpush.msra.mxu0 %v946
    %1019 = vmatpush.msra.mxu0 %v944
    %1020 = vmatpush.msra.mxu0 %v942
    %1021 = vmatpush.msra.mxu0 %v940
    %1022 = vmatmul.f32.gmra.mxu0 %v935
    %v1023 = vpop.f32.mrf.mxu0
    %v1024 = vadd.f32 %v974, %v1023
    %1025 = vmatmul.f32.gmra.mxu0 %v936
    %v1026 = vpop.f32.mrf.mxu0
    %v1027 = vadd.f32 %v974, %v1026
    %1028 = vmatmul.f32.gmra.mxu0 %v937
    %v1029 = vpop.f32.mrf.mxu0
    %v1030 = vadd.f32 %v974, %v1029
    %1031 = vmatmul.f32.gmra.mxu0 %v938
    %v1032 = vpop.f32.mrf.mxu0
    %v1033 = vadd.f32 %v974, %v1032
    %1034 = vdwg.mxu0
    %vm1035 = vcmask 785408
    %1036 = vst.msk [vmem:[#allocation9] sm:$0xff] %vm1035, %v995
    %1037 = vst.msk [vmem:[#allocation9 + $0x8] sm:$0xff] %vm1035, %v998
    %1038 = vst.msk [vmem:[#allocation9 + $0x10] sm:$0xff] %vm1035, %v1001
    %1039 = vst.msk [vmem:[#allocation9 + $0x18] sm:$0xff] %vm1035, %v1004
    %1048 = vrot.lane.b32.xlu0 %v995, 32
    %v1049 = vpop.permute.xlu0 %1048
    %1050 = vrot.lane.b32.xlu0 %v1024, 32
    %v1051 = vpop.permute.xlu0 %1050
    %1052 = vrot.lane.b32.xlu0 %v998, 32
    %v1053 = vpop.permute.xlu0 %1052
    %1054 = vrot.lane.b32.xlu0 %v1027, 32
    %v1055 = vpop.permute.xlu0 %1054
    %1056 = vrot.lane.b32.xlu0 %v1001, 32
    %v1057 = vpop.permute.xlu0 %1056
    %1058 = vrot.lane.b32.xlu0 %v1030, 32
    %v1059 = vpop.permute.xlu0 %1058
    %1060 = vrot.lane.b32.xlu0 %v1004, 32
    %v1061 = vpop.permute.xlu0 %1060
    %1062 = vrot.lane.b32.xlu0 %v1033, 32
    %v1063 = vpop.permute.xlu0 %1062
    %v1064 = vsel %vm432, %v1049, %v1051
    %v1065 = vsel %vm432, %v1053, %v1055
    %v1066 = vsel %vm432, %v1057, %v1059
    %v1067 = vsel %vm432, %v1061, %v1063
    %1072 = vst.msk [vmem:[#allocation10] sm:$0xff] %vm1035, %v1064
    %1073 = vst.msk [vmem:[#allocation10 + $0x8] sm:$0xff] %vm1035, %v1065
    %1074 = vst.msk [vmem:[#allocation10 + $0x10] sm:$0xff] %vm1035, %v1066
    %1075 = vst.msk [vmem:[#allocation10 + $0x18] sm:$0xff] %vm1035, %v1067
    %v1076 = vld [vmem:[#allocation9] sm:$0x3]
    %v1077 = vld [vmem:[#allocation10 + $0x18] sm:$0x3]
    %v1078 = vld [vmem:[#allocation18] sm:$0xff]
    %v1079 = vld [vmem:[#allocation18 + $0x8] sm:$0xff]
    %v1080 = vld [vmem:[#allocation18 + $0x10] sm:$0xff]
    %v1081 = vld [vmem:[#allocation18 + $0x18] sm:$0xff]
    %v1082 = vld [vmem:[#allocation18 + $0x20] sm:$0xff]
    %v1083 = vld [vmem:[#allocation18 + $0x28] sm:$0xff]
    %v1084 = vld [vmem:[#allocation18 + $0x30] sm:$0xff]
    %v1085 = vld [vmem:[#allocation18 + $0x38] sm:$0xff]
    %v1086 = vld [vmem:[#allocation18 + $0x40] sm:$0xff]
    %v1087 = vld [vmem:[#allocation18 + $0x48] sm:$0xff]
    %v1088 = vld [vmem:[#allocation18 + $0x50] sm:$0xff]
    %v1089 = vld [vmem:[#allocation18 + $0x58] sm:$0xff]
    %v1090 = vld [vmem:[#allocation18 + $0x60] sm:$0xff]
    %v1091 = vld [vmem:[#allocation18 + $0x68] sm:$0xff]
    %v1092 = vld [vmem:[#allocation18 + $0x70] sm:$0xff]
    %v1093 = vld [vmem:[#allocation18 + $0x78] sm:$0xff]
    %v1094 = vld [vmem:[%s10] sm:$0x3]
    %v1096 = vperm.slane %v1094, 0
    %v1097 = vperm.slane %v1094, 1
    %v1101 = vsel %vm705, 0.0, 0
    %1103 = vmatpush.msra.mxu0 0.0
    %1104 = vmatpush.msra.mxu0 0.0
    %1105 = vmatpush.msra.mxu0 0.0
    %1106 = vmatpush.msra.mxu0 0.0
    %1107 = vmatpush.msra.mxu0 0.0
    %1108 = vmatpush.msra.mxu0 0.0
    %1109 = vmatpush.msra.mxu0 0.0
    %1110 = vmatpush.msra.mxu0 0.0
    %1111 = vmatpush.msra.mxu0 %v1092
    %1112 = vmatpush.msra.mxu0 %v1090
    %1113 = vmatpush.msra.mxu0 %v1088
    %1114 = vmatpush.msra.mxu0 %v1086
    %1115 = vmatpush.msra.mxu0 %v1084
    %1116 = vmatpush.msra.mxu0 %v1082
    %1117 = vmatpush.msra.mxu0 %v1080
    %1118 = vmatpush.msra.mxu0 %v1078
    %1119 = vmatmul.f32.gmra.mxu0 %v1101
    %v1120 = vpop.f32.mrf.mxu0
    %v1121 = vadd.f32 %v1096, %v1120
    %1122 = vdwg.mxu0
    %1123 = vmatpush.msra.mxu0 0.0
    %1124 = vmatpush.msra.mxu0 0.0
    %1125 = vmatpush.msra.mxu0 0.0
    %1126 = vmatpush.msra.mxu0 0.0
    %1127 = vmatpush.msra.mxu0 0.0
    %1128 = vmatpush.msra.mxu0 0.0
    %1129 = vmatpush.msra.mxu0 0.0
    %1130 = vmatpush.msra.mxu0 0.0
    %1131 = vmatpush.msra.mxu0 %v1093
    %1132 = vmatpush.msra.mxu0 %v1091
    %1133 = vmatpush.msra.mxu0 %v1089
    %1134 = vmatpush.msra.mxu0 %v1087
    %1135 = vmatpush.msra.mxu0 %v1085
    %1136 = vmatpush.msra.mxu0 %v1083
    %1137 = vmatpush.msra.mxu0 %v1081
    %1138 = vmatpush.msra.mxu0 %v1079
    %1139 = vmatmul.f32.gmra.mxu0 %v1101
    %v1140 = vpop.f32.mrf.mxu0
    %v1141 = vadd.f32 %v1097, %v1140
    %1142 = vdwg.mxu0
    %v1143 = vadd.f32 %v1076, %v1121
    %v1144 = vxor.u32 %v1143, 2147483648
    %v1145 = vmul.f32 %v1144, 1.442695
    %v1146 = vpow.pop %v1145
    %v1147 = vadd.f32 %v1146, 1.0
    %v1148 = vrcp.pop %v1147
    %v1149 = vmul.f32 %v1147, %v1148
    %v1150 = vsub.f32 1.0, %v1149
    %v1151 = vmul.f32 %v1148, %v1150
    %v1152 = vadd.f32 %v1148, %v1151
    %vm1153 = vweird.f32 %v1147
    %vm1154 = vweird.f32 %v1148
    %vm1155 = vmor %vm1153, %vm1154
    %v1156 = vsel %vm1155, %v1148, %v1152
    %v1157 = vand.u32 2147483647, %v1147
    %vm1158 = vcmp.eq.f32.partialorder %v1157, 8.507059e+37
    %v1159 = vand.u32 %v1147, 2147483648
    %v1160 = vor.u32 1.1754944e-38, %v1159
    %v1161 = vsel %vm1158, %v1160, %v1156
    %v1162 = vmul.f32 1.0, %v1161
    %1164 = vrot.lane.b32.xlu0 %v1121, 64
    %v1165 = vpop.permute.xlu0 %1164
    %v1167 = vmul.f32 %v1162, %v1165
    %1169 = vrot.lane.b32.xlu0 %v1167, 64
    %v1170 = vpop.permute.xlu0 %1169
    %v1172 = vadd.f32 %v1076, %v1170
    %v1173 = vtanh.pop %v1172
    %v1174 = vsub.f32 1.0, %v1162
    %1176 = vrot.lane.b32.xlu0 %v1173, 96
    %v1177 = vpop.permute.xlu0 %1176
    %v1179 = vmul.f32 %v1174, %v1177
    %v1180 = vmul.f32 %v1162, 0.0
    %v1181 = vadd.f32 %v1179, %v1180
    %1182 = vrot.lane.b32.xlu0 %v1121, 32
    %v1183 = vpop.permute.xlu0 %1182
    %v1185 = vadd.f32 %v1077, %v1183
    %v1186 = vxor.u32 %v1185, 2147483648
    %v1187 = vmul.f32 %v1186, 1.442695
    %v1188 = vpow.pop %v1187
    %v1189 = vadd.f32 %v1188, 1.0
    %v1190 = vrcp.pop %v1189
    %v1191 = vmul.f32 %v1189, %v1190
    %v1192 = vsub.f32 1.0, %v1191
    %v1193 = vmul.f32 %v1190, %v1192
    %v1194 = vadd.f32 %v1190, %v1193
    %vm1195 = vweird.f32 %v1189
    %vm1196 = vweird.f32 %v1190
    %vm1197 = vmor %vm1195, %vm1196
    %v1198 = vsel %vm1197, %v1190, %v1194
    %v1199 = vand.u32 2147483647, %v1189
    %vm1200 = vcmp.eq.f32.partialorder %v1199, 8.507059e+37
    %v1201 = vand.u32 %v1189, 2147483648
    %v1202 = vor.u32 1.1754944e-38, %v1201
    %v1203 = vsel %vm1200, %v1202, %v1198
    %v1204 = vmul.f32 1.0, %v1203
    %1206 = vrot.lane.b32.xlu0 %v1141, 32
    %v1207 = vpop.permute.xlu0 %1206
    %v1209 = vadd.f32 %v1077, %v1207
    %v1210 = vxor.u32 %v1209, 2147483648
    %v1211 = vmul.f32 %v1210, 1.442695
    %v1212 = vpow.pop %v1211
    %v1213 = vadd.f32 %v1212, 1.0
    %v1214 = vrcp.pop %v1213
    %v1215 = vmul.f32 %v1213, %v1214
    %v1216 = vsub.f32 1.0, %v1215
    %v1217 = vmul.f32 %v1214, %v1216
    %v1218 = vadd.f32 %v1214, %v1217
    %vm1219 = vweird.f32 %v1213
    %vm1220 = vweird.f32 %v1214
    %vm1221 = vmor %vm1219, %vm1220
    %v1222 = vsel %vm1221, %v1214, %v1218
    %v1223 = vand.u32 2147483647, %v1213
    %vm1224 = vcmp.eq.f32.partialorder %v1223, 8.507059e+37
    %v1225 = vand.u32 %v1213, 2147483648
    %v1226 = vor.u32 1.1754944e-38, %v1225
    %v1227 = vsel %vm1224, %v1226, %v1222
    %v1228 = vmul.f32 1.0, %v1227
    %1229 = vrot.lane.b32.xlu0 %v1141, 96
    %v1230 = vpop.permute.xlu0 %1229
    %v1232 = vmul.f32 %v1204, %v1230
    %1234 = vrot.lane.b32.xlu0 %v1232, 64
    %v1235 = vpop.permute.xlu0 %1234
    %v1237 = vadd.f32 %v1077, %v1235
    %v1238 = vtanh.pop %v1237
    %v1239 = vsub.f32 1.0, %v1228
    %1241 = vrot.lane.b32.xlu0 %v1238, 96
    %v1242 = vpop.permute.xlu0 %1241
    %v1244 = vmul.f32 %v1239, %v1242
    %v1245 = vmul.f32 %v1228, 0.0
    %v1246 = vadd.f32 %v1244, %v1245
    %1248 = vrot.lane.b32.xlu0 %v1181, 96
    %v1249 = vpop.permute.xlu0 %1248
    %1251 = vst.msk [vmem:[#allocation11] sm:$0x3] %vm461, %v1249
    %1253 = vrot.lane.b32.xlu0 %v1246, 96
    %v1254 = vpop.permute.xlu0 %1253
    %1256 = vst.msk [vmem:[#allocation12 + $0x18] sm:$0x3] %vm461, %v1254
    %v1257 = vsel %vm432, %v1249, %v1246
    %v1258 = vld [vmem:[#allocation9 + $0x8] sm:$0x3]
    %v1259 = vld [vmem:[#allocation10 + $0x10] sm:$0x3]
    %v1260 = vld [vmem:[#allocation18] sm:$0xff]
    %v1261 = vld [vmem:[#allocation18 + $0x8] sm:$0xff]
    %v1262 = vld [vmem:[#allocation18 + $0x10] sm:$0xff]
    %v1263 = vld [vmem:[#allocation18 + $0x18] sm:$0xff]
    %v1264 = vld [vmem:[#allocation18 + $0x20] sm:$0xff]
    %v1265 = vld [vmem:[#allocation18 + $0x28] sm:$0xff]
    %v1266 = vld [vmem:[#allocation18 + $0x30] sm:$0xff]
    %v1267 = vld [vmem:[#allocation18 + $0x38] sm:$0xff]
    %v1268 = vld [vmem:[#allocation18 + $0x40] sm:$0xff]
    %v1269 = vld [vmem:[#allocation18 + $0x48] sm:$0xff]
    %v1270 = vld [vmem:[#allocation18 + $0x50] sm:$0xff]
    %v1271 = vld [vmem:[#allocation18 + $0x58] sm:$0xff]
    %v1272 = vld [vmem:[#allocation18 + $0x60] sm:$0xff]
    %v1273 = vld [vmem:[#allocation18 + $0x68] sm:$0xff]
    %v1274 = vld [vmem:[#allocation18 + $0x70] sm:$0xff]
    %v1275 = vld [vmem:[#allocation18 + $0x78] sm:$0xff]
    %v1276 = vld [vmem:[%s10] sm:$0x3]
    %v1278 = vperm.slane %v1276, 0
    %v1279 = vperm.slane %v1276, 1
    %v1283 = vsel %vm705, %v1257, 0
    %1285 = vmatpush.msra.mxu0 0.0
    %1286 = vmatpush.msra.mxu0 0.0
    %1287 = vmatpush.msra.mxu0 0.0
    %1288 = vmatpush.msra.mxu0 0.0
    %1289 = vmatpush.msra.mxu0 0.0
    %1290 = vmatpush.msra.mxu0 0.0
    %1291 = vmatpush.msra.mxu0 0.0
    %1292 = vmatpush.msra.mxu0 0.0
    %1293 = vmatpush.msra.mxu0 %v1274
    %1294 = vmatpush.msra.mxu0 %v1272
    %1295 = vmatpush.msra.mxu0 %v1270
    %1296 = vmatpush.msra.mxu0 %v1268
    %1297 = vmatpush.msra.mxu0 %v1266
    %1298 = vmatpush.msra.mxu0 %v1264
    %1299 = vmatpush.msra.mxu0 %v1262
    %1300 = vmatpush.msra.mxu0 %v1260
    %1301 = vmatmul.f32.gmra.mxu0 %v1283
    %v1302 = vpop.f32.mrf.mxu0
    %v1303 = vadd.f32 %v1278, %v1302
    %1304 = vdwg.mxu0
    %1305 = vmatpush.msra.mxu0 0.0
    %1306 = vmatpush.msra.mxu0 0.0
    %1307 = vmatpush.msra.mxu0 0.0
    %1308 = vmatpush.msra.mxu0 0.0
    %1309 = vmatpush.msra.mxu0 0.0
    %1310 = vmatpush.msra.mxu0 0.0
    %1311 = vmatpush.msra.mxu0 0.0
    %1312 = vmatpush.msra.mxu0 0.0
    %1313 = vmatpush.msra.mxu0 %v1275
    %1314 = vmatpush.msra.mxu0 %v1273
    %1315 = vmatpush.msra.mxu0 %v1271
    %1316 = vmatpush.msra.mxu0 %v1269
    %1317 = vmatpush.msra.mxu0 %v1267
    %1318 = vmatpush.msra.mxu0 %v1265
    %1319 = vmatpush.msra.mxu0 %v1263
    %1320 = vmatpush.msra.mxu0 %v1261
    %1321 = vmatmul.f32.gmra.mxu0 %v1283
    %v1322 = vpop.f32.mrf.mxu0
    %v1323 = vadd.f32 %v1279, %v1322
    %1324 = vdwg.mxu0
    %v1325 = vadd.f32 %v1258, %v1303
    %v1326 = vxor.u32 %v1325, 2147483648
    %v1327 = vmul.f32 %v1326, 1.442695
    %v1328 = vpow.pop %v1327
    %v1329 = vadd.f32 %v1328, 1.0
    %v1330 = vrcp.pop %v1329
    %v1331 = vmul.f32 %v1329, %v1330
    %v1332 = vsub.f32 1.0, %v1331
    %v1333 = vmul.f32 %v1330, %v1332
    %v1334 = vadd.f32 %v1330, %v1333
    %vm1335 = vweird.f32 %v1329
    %vm1336 = vweird.f32 %v1330
    %vm1337 = vmor %vm1335, %vm1336
    %v1338 = vsel %vm1337, %v1330, %v1334
    %v1339 = vand.u32 2147483647, %v1329
    %vm1340 = vcmp.eq.f32.partialorder %v1339, 8.507059e+37
    %v1341 = vand.u32 %v1329, 2147483648
    %v1342 = vor.u32 1.1754944e-38, %v1341
    %v1343 = vsel %vm1340, %v1342, %v1338
    %v1344 = vmul.f32 1.0, %v1343
    %1346 = vrot.lane.b32.xlu0 %v1303, 64
    %v1347 = vpop.permute.xlu0 %1346
    %v1349 = vmul.f32 %v1344, %v1347
    %1351 = vrot.lane.b32.xlu0 %v1349, 64
    %v1352 = vpop.permute.xlu0 %1351
    %v1354 = vadd.f32 %v1258, %v1352
    %v1355 = vtanh.pop %v1354
    %v1356 = vsub.f32 1.0, %v1344
    %1358 = vrot.lane.b32.xlu0 %v1355, 96
    %v1359 = vpop.permute.xlu0 %1358
    %v1361 = vmul.f32 %v1356, %v1359
    %1362 = vrot.lane.b32.xlu0 %v1257, 32
    %v1363 = vpop.permute.xlu0 %1362
    %v1365 = vmul.f32 %v1344, %v1363
    %v1366 = vadd.f32 %v1361, %v1365
    %1367 = vrot.lane.b32.xlu0 %v1303, 32
    %v1368 = vpop.permute.xlu0 %1367
    %v1370 = vadd.f32 %v1259, %v1368
    %v1371 = vxor.u32 %v1370, 2147483648
    %v1372 = vmul.f32 %v1371, 1.442695
    %v1373 = vpow.pop %v1372
    %v1374 = vadd.f32 %v1373, 1.0
    %v1375 = vrcp.pop %v1374
    %v1376 = vmul.f32 %v1374, %v1375
    %v1377 = vsub.f32 1.0, %v1376
    %v1378 = vmul.f32 %v1375, %v1377
    %v1379 = vadd.f32 %v1375, %v1378
    %vm1380 = vweird.f32 %v1374
    %vm1381 = vweird.f32 %v1375
    %vm1382 = vmor %vm1380, %vm1381
    %v1383 = vsel %vm1382, %v1375, %v1379
    %v1384 = vand.u32 2147483647, %v1374
    %vm1385 = vcmp.eq.f32.partialorder %v1384, 8.507059e+37
    %v1386 = vand.u32 %v1374, 2147483648
    %v1387 = vor.u32 1.1754944e-38, %v1386
    %v1388 = vsel %vm1385, %v1387, %v1383
    %v1389 = vmul.f32 1.0, %v1388
    %1391 = vrot.lane.b32.xlu0 %v1323, 32
    %v1392 = vpop.permute.xlu0 %1391
    %v1394 = vadd.f32 %v1259, %v1392
    %v1395 = vxor.u32 %v1394, 2147483648
    %v1396 = vmul.f32 %v1395, 1.442695
    %v1397 = vpow.pop %v1396
    %v1398 = vadd.f32 %v1397, 1.0
    %v1399 = vrcp.pop %v1398
    %v1400 = vmul.f32 %v1398, %v1399
    %v1401 = vsub.f32 1.0, %v1400
    %v1402 = vmul.f32 %v1399, %v1401
    %v1403 = vadd.f32 %v1399, %v1402
    %vm1404 = vweird.f32 %v1398
    %vm1405 = vweird.f32 %v1399
    %vm1406 = vmor %vm1404, %vm1405
    %v1407 = vsel %vm1406, %v1399, %v1403
    %v1408 = vand.u32 2147483647, %v1398
    %vm1409 = vcmp.eq.f32.partialorder %v1408, 8.507059e+37
    %v1410 = vand.u32 %v1398, 2147483648
    %v1411 = vor.u32 1.1754944e-38, %v1410
    %v1412 = vsel %vm1409, %v1411, %v1407
    %v1413 = vmul.f32 1.0, %v1412
    %1414 = vrot.lane.b32.xlu0 %v1323, 96
    %v1415 = vpop.permute.xlu0 %1414
    %v1417 = vmul.f32 %v1389, %v1415
    %1419 = vrot.lane.b32.xlu0 %v1417, 64
    %v1420 = vpop.permute.xlu0 %1419
    %v1422 = vadd.f32 %v1259, %v1420
    %v1423 = vtanh.pop %v1422
    %v1424 = vsub.f32 1.0, %v1413
    %1426 = vrot.lane.b32.xlu0 %v1423, 96
    %v1427 = vpop.permute.xlu0 %1426
    %v1429 = vmul.f32 %v1424, %v1427
    %v1430 = vmul.f32 %v1413, %v1257
    %v1431 = vadd.f32 %v1429, %v1430
    %1433 = vrot.lane.b32.xlu0 %v1366, 96
    %v1434 = vpop.permute.xlu0 %1433
    %1436 = vst.msk [vmem:[#allocation11 + $0x8] sm:$0x3] %vm461, %v1434
    %1438 = vrot.lane.b32.xlu0 %v1431, 96
    %v1439 = vpop.permute.xlu0 %1438
    %1441 = vst.msk [vmem:[#allocation12 + $0x10] sm:$0x3] %vm461, %v1439
    %v1442 = vsel %vm432, %v1434, %v1431
    %v1443 = vld [vmem:[#allocation9 + $0x10] sm:$0x3]
    %v1444 = vld [vmem:[#allocation10 + $0x8] sm:$0x3]
    %v1445 = vld [vmem:[#allocation18] sm:$0xff]
    %v1446 = vld [vmem:[#allocation18 + $0x8] sm:$0xff]
    %v1447 = vld [vmem:[#allocation18 + $0x10] sm:$0xff]
    %v1448 = vld [vmem:[#allocation18 + $0x18] sm:$0xff]
    %v1449 = vld [vmem:[#allocation18 + $0x20] sm:$0xff]
    %v1450 = vld [vmem:[#allocation18 + $0x28] sm:$0xff]
    %v1451 = vld [vmem:[#allocation18 + $0x30] sm:$0xff]
    %v1452 = vld [vmem:[#allocation18 + $0x38] sm:$0xff]
    %v1453 = vld [vmem:[#allocation18 + $0x40] sm:$0xff]
    %v1454 = vld [vmem:[#allocation18 + $0x48] sm:$0xff]
    %v1455 = vld [vmem:[#allocation18 + $0x50] sm:$0xff]
    %v1456 = vld [vmem:[#allocation18 + $0x58] sm:$0xff]
    %v1457 = vld [vmem:[#allocation18 + $0x60] sm:$0xff]
    %v1458 = vld [vmem:[#allocation18 + $0x68] sm:$0xff]
    %v1459 = vld [vmem:[#allocation18 + $0x70] sm:$0xff]
    %v1460 = vld [vmem:[#allocation18 + $0x78] sm:$0xff]
    %v1461 = vld [vmem:[%s10] sm:$0x3]
    %v1463 = vperm.slane %v1461, 0
    %v1464 = vperm.slane %v1461, 1
    %v1468 = vsel %vm705, %v1442, 0
    %1470 = vmatpush.msra.mxu0 0.0
    %1471 = vmatpush.msra.mxu0 0.0
    %1472 = vmatpush.msra.mxu0 0.0
    %1473 = vmatpush.msra.mxu0 0.0
    %1474 = vmatpush.msra.mxu0 0.0
    %1475 = vmatpush.msra.mxu0 0.0
    %1476 = vmatpush.msra.mxu0 0.0
    %1477 = vmatpush.msra.mxu0 0.0
    %1478 = vmatpush.msra.mxu0 %v1459
    %1479 = vmatpush.msra.mxu0 %v1457
    %1480 = vmatpush.msra.mxu0 %v1455
    %1481 = vmatpush.msra.mxu0 %v1453
    %1482 = vmatpush.msra.mxu0 %v1451
    %1483 = vmatpush.msra.mxu0 %v1449
    %1484 = vmatpush.msra.mxu0 %v1447
    %1485 = vmatpush.msra.mxu0 %v1445
    %1486 = vmatmul.f32.gmra.mxu0 %v1468
    %v1487 = vpop.f32.mrf.mxu0
    %v1488 = vadd.f32 %v1463, %v1487
    %1489 = vdwg.mxu0
    %1490 = vmatpush.msra.mxu0 0.0
    %1491 = vmatpush.msra.mxu0 0.0
    %1492 = vmatpush.msra.mxu0 0.0
    %1493 = vmatpush.msra.mxu0 0.0
    %1494 = vmatpush.msra.mxu0 0.0
    %1495 = vmatpush.msra.mxu0 0.0
    %1496 = vmatpush.msra.mxu0 0.0
    %1497 = vmatpush.msra.mxu0 0.0
    %1498 = vmatpush.msra.mxu0 %v1460
    %1499 = vmatpush.msra.mxu0 %v1458
    %1500 = vmatpush.msra.mxu0 %v1456
    %1501 = vmatpush.msra.mxu0 %v1454
    %1502 = vmatpush.msra.mxu0 %v1452
    %1503 = vmatpush.msra.mxu0 %v1450
    %1504 = vmatpush.msra.mxu0 %v1448
    %1505 = vmatpush.msra.mxu0 %v1446
    %1506 = vmatmul.f32.gmra.mxu0 %v1468
    %v1507 = vpop.f32.mrf.mxu0
    %v1508 = vadd.f32 %v1464, %v1507
    %1509 = vdwg.mxu0
    %v1510 = vadd.f32 %v1443, %v1488
    %v1511 = vxor.u32 %v1510, 2147483648
    %v1512 = vmul.f32 %v1511, 1.442695
    %v1513 = vpow.pop %v1512
    %v1514 = vadd.f32 %v1513, 1.0
    %v1515 = vrcp.pop %v1514
    %v1516 = vmul.f32 %v1514, %v1515
    %v1517 = vsub.f32 1.0, %v1516
    %v1518 = vmul.f32 %v1515, %v1517
    %v1519 = vadd.f32 %v1515, %v1518
    %vm1520 = vweird.f32 %v1514
    %vm1521 = vweird.f32 %v1515
    %vm1522 = vmor %vm1520, %vm1521
    %v1523 = vsel %vm1522, %v1515, %v1519
    %v1524 = vand.u32 2147483647, %v1514
    %vm1525 = vcmp.eq.f32.partialorder %v1524, 8.507059e+37
    %v1526 = vand.u32 %v1514, 2147483648
    %v1527 = vor.u32 1.1754944e-38, %v1526
    %v1528 = vsel %vm1525, %v1527, %v1523
    %v1529 = vmul.f32 1.0, %v1528
    %1531 = vrot.lane.b32.xlu0 %v1488, 64
    %v1532 = vpop.permute.xlu0 %1531
    %v1534 = vmul.f32 %v1529, %v1532
    %1536 = vrot.lane.b32.xlu0 %v1534, 64
    %v1537 = vpop.permute.xlu0 %1536
    %v1539 = vadd.f32 %v1443, %v1537
    %v1540 = vtanh.pop %v1539
    %v1541 = vsub.f32 1.0, %v1529
    %1543 = vrot.lane.b32.xlu0 %v1540, 96
    %v1544 = vpop.permute.xlu0 %1543
    %v1546 = vmul.f32 %v1541, %v1544
    %1547 = vrot.lane.b32.xlu0 %v1442, 32
    %v1548 = vpop.permute.xlu0 %1547
    %v1550 = vmul.f32 %v1529, %v1548
    %v1551 = vadd.f32 %v1546, %v1550
    %1552 = vrot.lane.b32.xlu0 %v1488, 32
    %v1553 = vpop.permute.xlu0 %1552
    %v1555 = vadd.f32 %v1444, %v1553
    %v1556 = vxor.u32 %v1555, 2147483648
    %v1557 = vmul.f32 %v1556, 1.442695
    %v1558 = vpow.pop %v1557
    %v1559 = vadd.f32 %v1558, 1.0
    %v1560 = vrcp.pop %v1559
    %v1561 = vmul.f32 %v1559, %v1560
    %v1562 = vsub.f32 1.0, %v1561
    %v1563 = vmul.f32 %v1560, %v1562
    %v1564 = vadd.f32 %v1560, %v1563
    %vm1565 = vweird.f32 %v1559
    %vm1566 = vweird.f32 %v1560
    %vm1567 = vmor %vm1565, %vm1566
    %v1568 = vsel %vm1567, %v1560, %v1564
    %v1569 = vand.u32 2147483647, %v1559
    %vm1570 = vcmp.eq.f32.partialorder %v1569, 8.507059e+37
    %v1571 = vand.u32 %v1559, 2147483648
    %v1572 = vor.u32 1.1754944e-38, %v1571
    %v1573 = vsel %vm1570, %v1572, %v1568
    %v1574 = vmul.f32 1.0, %v1573
    %1576 = vrot.lane.b32.xlu0 %v1508, 32
    %v1577 = vpop.permute.xlu0 %1576
    %v1579 = vadd.f32 %v1444, %v1577
    %v1580 = vxor.u32 %v1579, 2147483648
    %v1581 = vmul.f32 %v1580, 1.442695
    %v1582 = vpow.pop %v1581
    %v1583 = vadd.f32 %v1582, 1.0
    %v1584 = vrcp.pop %v1583
    %v1585 = vmul.f32 %v1583, %v1584
    %v1586 = vsub.f32 1.0, %v1585
    %v1587 = vmul.f32 %v1584, %v1586
    %v1588 = vadd.f32 %v1584, %v1587
    %vm1589 = vweird.f32 %v1583
    %vm1590 = vweird.f32 %v1584
    %vm1591 = vmor %vm1589, %vm1590
    %v1592 = vsel %vm1591, %v1584, %v1588
    %v1593 = vand.u32 2147483647, %v1583
    %vm1594 = vcmp.eq.f32.partialorder %v1593, 8.507059e+37
    %v1595 = vand.u32 %v1583, 2147483648
    %v1596 = vor.u32 1.1754944e-38, %v1595
    %v1597 = vsel %vm1594, %v1596, %v1592
    %v1598 = vmul.f32 1.0, %v1597
    %1599 = vrot.lane.b32.xlu0 %v1508, 96
    %v1600 = vpop.permute.xlu0 %1599
    %v1602 = vmul.f32 %v1574, %v1600
    %1604 = vrot.lane.b32.xlu0 %v1602, 64
    %v1605 = vpop.permute.xlu0 %1604
    %v1607 = vadd.f32 %v1444, %v1605
    %v1608 = vtanh.pop %v1607
    %v1609 = vsub.f32 1.0, %v1598
    %1611 = vrot.lane.b32.xlu0 %v1608, 96
    %v1612 = vpop.permute.xlu0 %1611
    %v1614 = vmul.f32 %v1609, %v1612
    %v1615 = vmul.f32 %v1598, %v1442
    %v1616 = vadd.f32 %v1614, %v1615
    %1618 = vrot.lane.b32.xlu0 %v1551, 96
    %v1619 = vpop.permute.xlu0 %1618
    %1621 = vst.msk [vmem:[#allocation11 + $0x10] sm:$0x3] %vm461, %v1619
    %1623 = vrot.lane.b32.xlu0 %v1616, 96
    %v1624 = vpop.permute.xlu0 %1623
    %1626 = vst.msk [vmem:[#allocation12 + $0x8] sm:$0x3] %vm461, %v1624
    %v1627 = vsel %vm432, %v1619, %v1616
    %v1628 = vld [vmem:[#allocation9 + $0x18] sm:$0x3]
    %v1629 = vld [vmem:[#allocation10] sm:$0x3]
    %v1630 = vld [vmem:[#allocation18] sm:$0xff]
    %v1631 = vld [vmem:[#allocation18 + $0x8] sm:$0xff]
    %v1632 = vld [vmem:[#allocation18 + $0x10] sm:$0xff]
    %v1633 = vld [vmem:[#allocation18 + $0x18] sm:$0xff]
    %v1634 = vld [vmem:[#allocation18 + $0x20] sm:$0xff]
    %v1635 = vld [vmem:[#allocation18 + $0x28] sm:$0xff]
    %v1636 = vld [vmem:[#allocation18 + $0x30] sm:$0xff]
    %v1637 = vld [vmem:[#allocation18 + $0x38] sm:$0xff]
    %v1638 = vld [vmem:[#allocation18 + $0x40] sm:$0xff]
    %v1639 = vld [vmem:[#allocation18 + $0x48] sm:$0xff]
    %v1640 = vld [vmem:[#allocation18 + $0x50] sm:$0xff]
    %v1641 = vld [vmem:[#allocation18 + $0x58] sm:$0xff]
    %v1642 = vld [vmem:[#allocation18 + $0x60] sm:$0xff]
    %v1643 = vld [vmem:[#allocation18 + $0x68] sm:$0xff]
    %v1644 = vld [vmem:[#allocation18 + $0x70] sm:$0xff]
    %v1645 = vld [vmem:[#allocation18 + $0x78] sm:$0xff]
    %v1646 = vld [vmem:[%s10] sm:$0x3]
    %v1648 = vperm.slane %v1646, 0
    %v1649 = vperm.slane %v1646, 1
    %v1653 = vsel %vm705, %v1627, 0
    %1655 = vmatpush.msra.mxu0 0.0
    %1656 = vmatpush.msra.mxu0 0.0
    %1657 = vmatpush.msra.mxu0 0.0
    %1658 = vmatpush.msra.mxu0 0.0
    %1659 = vmatpush.msra.mxu0 0.0
    %1660 = vmatpush.msra.mxu0 0.0
    %1661 = vmatpush.msra.mxu0 0.0
    %1662 = vmatpush.msra.mxu0 0.0
    %1663 = vmatpush.msra.mxu0 %v1644
    %1664 = vmatpush.msra.mxu0 %v1642
    %1665 = vmatpush.msra.mxu0 %v1640
    %1666 = vmatpush.msra.mxu0 %v1638
    %1667 = vmatpush.msra.mxu0 %v1636
    %1668 = vmatpush.msra.mxu0 %v1634
    %1669 = vmatpush.msra.mxu0 %v1632
    %1670 = vmatpush.msra.mxu0 %v1630
    %1671 = vmatmul.f32.gmra.mxu0 %v1653
    %v1672 = vpop.f32.mrf.mxu0
    %v1673 = vadd.f32 %v1648, %v1672
    %1674 = vdwg.mxu0
    %1675 = vmatpush.msra.mxu0 0.0
    %1676 = vmatpush.msra.mxu0 0.0
    %1677 = vmatpush.msra.mxu0 0.0
    %1678 = vmatpush.msra.mxu0 0.0
    %1679 = vmatpush.msra.mxu0 0.0
    %1680 = vmatpush.msra.mxu0 0.0
    %1681 = vmatpush.msra.mxu0 0.0
    %1682 = vmatpush.msra.mxu0 0.0
    %1683 = vmatpush.msra.mxu0 %v1645
    %1684 = vmatpush.msra.mxu0 %v1643
    %1685 = vmatpush.msra.mxu0 %v1641
    %1686 = vmatpush.msra.mxu0 %v1639
    %1687 = vmatpush.msra.mxu0 %v1637
    %1688 = vmatpush.msra.mxu0 %v1635
    %1689 = vmatpush.msra.mxu0 %v1633
    %1690 = vmatpush.msra.mxu0 %v1631
    %1691 = vmatmul.f32.gmra.mxu0 %v1653
    %v1692 = vpop.f32.mrf.mxu0
    %v1693 = vadd.f32 %v1649, %v1692
    %1694 = vdwg.mxu0
    %v1695 = vadd.f32 %v1628, %v1673
    %v1696 = vxor.u32 %v1695, 2147483648
    %v1697 = vmul.f32 %v1696, 1.442695
    %v1698 = vpow.pop %v1697
    %v1699 = vadd.f32 %v1698, 1.0
    %v1700 = vrcp.pop %v1699
    %v1701 = vmul.f32 %v1699, %v1700
    %v1702 = vsub.f32 1.0, %v1701
    %v1703 = vmul.f32 %v1700, %v1702
    %v1704 = vadd.f32 %v1700, %v1703
    %vm1705 = vweird.f32 %v1699
    %vm1706 = vweird.f32 %v1700
    %vm1707 = vmor %vm1705, %vm1706
    %v1708 = vsel %vm1707, %v1700, %v1704
    %v1709 = vand.u32 2147483647, %v1699
    %vm1710 = vcmp.eq.f32.partialorder %v1709, 8.507059e+37
    %v1711 = vand.u32 %v1699, 2147483648
    %v1712 = vor.u32 1.1754944e-38, %v1711
    %v1713 = vsel %vm1710, %v1712, %v1708
    %v1714 = vmul.f32 1.0, %v1713
    %1716 = vrot.lane.b32.xlu0 %v1673, 64
    %v1717 = vpop.permute.xlu0 %1716
    %v1719 = vmul.f32 %v1714, %v1717
    %1721 = vrot.lane.b32.xlu0 %v1719, 64
    %v1722 = vpop.permute.xlu0 %1721
    %v1724 = vadd.f32 %v1628, %v1722
    %v1725 = vtanh.pop %v1724
    %v1726 = vsub.f32 1.0, %v1714
    %1728 = vrot.lane.b32.xlu0 %v1725, 96
    %v1729 = vpop.permute.xlu0 %1728
    %v1731 = vmul.f32 %v1726, %v1729
    %1732 = vrot.lane.b32.xlu0 %v1627, 32
    %v1733 = vpop.permute.xlu0 %1732
    %v1735 = vmul.f32 %v1714, %v1733
    %v1736 = vadd.f32 %v1731, %v1735
    %1737 = vrot.lane.b32.xlu0 %v1673, 32
    %v1738 = vpop.permute.xlu0 %1737
    %v1740 = vadd.f32 %v1629, %v1738
    %v1741 = vxor.u32 %v1740, 2147483648
    %v1742 = vmul.f32 %v1741, 1.442695
    %v1743 = vpow.pop %v1742
    %v1744 = vadd.f32 %v1743, 1.0
    %v1745 = vrcp.pop %v1744
    %v1746 = vmul.f32 %v1744, %v1745
    %v1747 = vsub.f32 1.0, %v1746
    %v1748 = vmul.f32 %v1745, %v1747
    %v1749 = vadd.f32 %v1745, %v1748
    %vm1750 = vweird.f32 %v1744
    %vm1751 = vweird.f32 %v1745
    %vm1752 = vmor %vm1750, %vm1751
    %v1753 = vsel %vm1752, %v1745, %v1749
    %v1754 = vand.u32 2147483647, %v1744
    %vm1755 = vcmp.eq.f32.partialorder %v1754, 8.507059e+37
    %v1756 = vand.u32 %v1744, 2147483648
    %v1757 = vor.u32 1.1754944e-38, %v1756
    %v1758 = vsel %vm1755, %v1757, %v1753
    %v1759 = vmul.f32 1.0, %v1758
    %1761 = vrot.lane.b32.xlu0 %v1693, 32
    %v1762 = vpop.permute.xlu0 %1761
    %v1764 = vadd.f32 %v1629, %v1762
    %v1765 = vxor.u32 %v1764, 2147483648
    %v1766 = vmul.f32 %v1765, 1.442695
    %v1767 = vpow.pop %v1766
    %v1768 = vadd.f32 %v1767, 1.0
    %v1769 = vrcp.pop %v1768
    %v1770 = vmul.f32 %v1768, %v1769
    %v1771 = vsub.f32 1.0, %v1770
    %v1772 = vmul.f32 %v1769, %v1771
    %v1773 = vadd.f32 %v1769, %v1772
    %vm1774 = vweird.f32 %v1768
    %vm1775 = vweird.f32 %v1769
    %vm1776 = vmor %vm1774, %vm1775
    %v1777 = vsel %vm1776, %v1769, %v1773
    %v1778 = vand.u32 2147483647, %v1768
    %vm1779 = vcmp.eq.f32.partialorder %v1778, 8.507059e+37
    %v1780 = vand.u32 %v1768, 2147483648
    %v1781 = vor.u32 1.1754944e-38, %v1780
    %v1782 = vsel %vm1779, %v1781, %v1777
    %v1783 = vmul.f32 1.0, %v1782
    %1784 = vrot.lane.b32.xlu0 %v1693, 96
    %v1785 = vpop.permute.xlu0 %1784
    %v1787 = vmul.f32 %v1759, %v1785
    %1789 = vrot.lane.b32.xlu0 %v1787, 64
    %v1790 = vpop.permute.xlu0 %1789
    %v1792 = vadd.f32 %v1629, %v1790
    %v1793 = vtanh.pop %v1792
    %v1794 = vsub.f32 1.0, %v1783
    %1796 = vrot.lane.b32.xlu0 %v1793, 96
    %v1797 = vpop.permute.xlu0 %1796
    %v1799 = vmul.f32 %v1794, %v1797
    %v1800 = vmul.f32 %v1783, %v1627
    %v1801 = vadd.f32 %v1799, %v1800
    %1803 = vrot.lane.b32.xlu0 %v1736, 96
    %v1804 = vpop.permute.xlu0 %1803
    %1806 = vst.msk [vmem:[#allocation11 + $0x18] sm:$0x3] %vm461, %v1804
    %1808 = vrot.lane.b32.xlu0 %v1801, 96
    %v1809 = vpop.permute.xlu0 %1808
    %1811 = vst.msk [vmem:[#allocation12] sm:$0x3] %vm461, %v1809
    %v1812 = vld [vmem:[#allocation11] sm:$0xff]
    %v1813 = vld [vmem:[#allocation11 + $0x8] sm:$0xff]
    %v1814 = vld [vmem:[#allocation11 + $0x10] sm:$0xff]
    %v1815 = vld [vmem:[#allocation11 + $0x18] sm:$0xff]
    %v1816 = vld [vmem:[#allocation12] sm:$0xff]
    %v1817 = vld [vmem:[#allocation12 + $0x8] sm:$0xff]
    %v1818 = vld [vmem:[#allocation12 + $0x10] sm:$0xff]
    %v1819 = vld [vmem:[#allocation12 + $0x18] sm:$0xff]
    %1824 = vrot.lane.b32.xlu0 %v1816, 32
    %v1825 = vpop.permute.xlu0 %1824
    %1826 = vrot.lane.b32.xlu0 %v1817, 32
    %v1827 = vpop.permute.xlu0 %1826
    %1828 = vrot.lane.b32.xlu0 %v1818, 32
    %v1829 = vpop.permute.xlu0 %1828
    %1830 = vrot.lane.b32.xlu0 %v1819, 32
    %v1831 = vpop.permute.xlu0 %1830
    %v1836 = vsel %vm432, %v1812, %v1825
    %v1837 = vsel %vm432, %v1813, %v1827
    %v1838 = vsel %vm432, %v1814, %v1829
    %v1839 = vsel %vm432, %v1815, %v1831
    %v1840 = vld [vmem:[#allocation21] sm:$0xff]
    %v1841 = vld [vmem:[#allocation21 + $0x8] sm:$0xff]
    %v1842 = vld [vmem:[#allocation21 + $0x10] sm:$0xff]
    %v1843 = vld [vmem:[#allocation21 + $0x18] sm:$0xff]
    %v1844 = vld [vmem:[#allocation21 + $0x20] sm:$0xff]
    %v1845 = vld [vmem:[#allocation21 + $0x28] sm:$0xff]
    %v1846 = vld [vmem:[#allocation21 + $0x30] sm:$0xff]
    %v1847 = vld [vmem:[#allocation21 + $0x38] sm:$0xff]
    %v1848 = vld [vmem:[#allocation21 + $0x40] sm:$0xff]
    %v1849 = vld [vmem:[#allocation21 + $0x48] sm:$0xff]
    %v1850 = vld [vmem:[#allocation21 + $0x50] sm:$0xff]
    %v1851 = vld [vmem:[#allocation21 + $0x58] sm:$0xff]
    %v1852 = vld [vmem:[#allocation21 + $0x60] sm:$0xff]
    %v1853 = vld [vmem:[#allocation21 + $0x68] sm:$0xff]
    %v1854 = vld [vmem:[#allocation21 + $0x70] sm:$0xff]
    %v1855 = vld [vmem:[#allocation21 + $0x78] sm:$0xff]
    %v1856 = vld [vmem:[%s12] sm:$0x3]
    %v1858 = vperm.slane %v1856, 0
    %v1859 = vperm.slane %v1856, 1
    %v1863 = vsel %vm705, %v1836, 0
    %v1866 = vsel %vm705, %v1837, 0
    %v1869 = vsel %vm705, %v1838, 0
    %v1872 = vsel %vm705, %v1839, 0
    %1874 = vmatpush.msra.mxu0 0.0
    %1875 = vmatpush.msra.mxu0 0.0
    %1876 = vmatpush.msra.mxu0 0.0
    %1877 = vmatpush.msra.mxu0 0.0
    %1878 = vmatpush.msra.mxu0 0.0
    %1879 = vmatpush.msra.mxu0 0.0
    %1880 = vmatpush.msra.mxu0 0.0
    %1881 = vmatpush.msra.mxu0 0.0
    %1882 = vmatpush.msra.mxu0 %v1854
    %1883 = vmatpush.msra.mxu0 %v1852
    %1884 = vmatpush.msra.mxu0 %v1850
    %1885 = vmatpush.msra.mxu0 %v1848
    %1886 = vmatpush.msra.mxu0 %v1846
    %1887 = vmatpush.msra.mxu0 %v1844
    %1888 = vmatpush.msra.mxu0 %v1842
    %1889 = vmatpush.msra.mxu0 %v1840
    %1890 = vmatmul.f32.gmra.mxu0 %v1863
    %v1891 = vpop.f32.mrf.mxu0
    %v1892 = vadd.f32 %v1858, %v1891
    %1893 = vmatmul.f32.gmra.mxu0 %v1866
    %v1894 = vpop.f32.mrf.mxu0
    %v1895 = vadd.f32 %v1858, %v1894
    %1896 = vmatmul.f32.gmra.mxu0 %v1869
    %v1897 = vpop.f32.mrf.mxu0
    %v1898 = vadd.f32 %v1858, %v1897
    %1899 = vmatmul.f32.gmra.mxu0 %v1872
    %v1900 = vpop.f32.mrf.mxu0
    %v1901 = vadd.f32 %v1858, %v1900
    %1902 = vdwg.mxu0
    %1903 = vmatpush.msra.mxu0 0.0
    %1904 = vmatpush.msra.mxu0 0.0
    %1905 = vmatpush.msra.mxu0 0.0
    %1906 = vmatpush.msra.mxu0 0.0
    %1907 = vmatpush.msra.mxu0 0.0
    %1908 = vmatpush.msra.mxu0 0.0
    %1909 = vmatpush.msra.mxu0 0.0
    %1910 = vmatpush.msra.mxu0 0.0
    %1911 = vmatpush.msra.mxu0 %v1855
    %1912 = vmatpush.msra.mxu0 %v1853
    %1913 = vmatpush.msra.mxu0 %v1851
    %1914 = vmatpush.msra.mxu0 %v1849
    %1915 = vmatpush.msra.mxu0 %v1847
    %1916 = vmatpush.msra.mxu0 %v1845
    %1917 = vmatpush.msra.mxu0 %v1843
    %1918 = vmatpush.msra.mxu0 %v1841
    %1919 = vmatmul.f32.gmra.mxu0 %v1863
    %v1920 = vpop.f32.mrf.mxu0
    %v1921 = vadd.f32 %v1859, %v1920
    %1922 = vmatmul.f32.gmra.mxu0 %v1866
    %v1923 = vpop.f32.mrf.mxu0
    %v1924 = vadd.f32 %v1859, %v1923
    %1925 = vmatmul.f32.gmra.mxu0 %v1869
    %v1926 = vpop.f32.mrf.mxu0
    %v1927 = vadd.f32 %v1859, %v1926
    %1928 = vmatmul.f32.gmra.mxu0 %v1872
    %v1929 = vpop.f32.mrf.mxu0
    %v1930 = vadd.f32 %v1859, %v1929
    %1931 = vdwg.mxu0
    %1932 = vst.msk [vmem:[#allocation13] sm:$0xff] %vm1035, %v1892
    %1933 = vst.msk [vmem:[#allocation13 + $0x8] sm:$0xff] %vm1035, %v1895
    %1934 = vst.msk [vmem:[#allocation13 + $0x10] sm:$0xff] %vm1035, %v1898
    %1935 = vst.msk [vmem:[#allocation13 + $0x18] sm:$0xff] %vm1035, %v1901
    %1944 = vrot.lane.b32.xlu0 %v1892, 32
    %v1945 = vpop.permute.xlu0 %1944
    %1946 = vrot.lane.b32.xlu0 %v1921, 32
    %v1947 = vpop.permute.xlu0 %1946
    %1948 = vrot.lane.b32.xlu0 %v1895, 32
    %v1949 = vpop.permute.xlu0 %1948
    %1950 = vrot.lane.b32.xlu0 %v1924, 32
    %v1951 = vpop.permute.xlu0 %1950
    %1952 = vrot.lane.b32.xlu0 %v1898, 32
    %v1953 = vpop.permute.xlu0 %1952
    %1954 = vrot.lane.b32.xlu0 %v1927, 32
    %v1955 = vpop.permute.xlu0 %1954
    %1956 = vrot.lane.b32.xlu0 %v1901, 32
    %v1957 = vpop.permute.xlu0 %1956
    %1958 = vrot.lane.b32.xlu0 %v1930, 32
    %v1959 = vpop.permute.xlu0 %1958
    %v1960 = vsel %vm432, %v1945, %v1947
    %v1961 = vsel %vm432, %v1949, %v1951
    %v1962 = vsel %vm432, %v1953, %v1955
    %v1963 = vsel %vm432, %v1957, %v1959
    %1968 = vst.msk [vmem:[#allocation14] sm:$0xff] %vm1035, %v1960
    %1969 = vst.msk [vmem:[#allocation14 + $0x8] sm:$0xff] %vm1035, %v1961
    %1970 = vst.msk [vmem:[#allocation14 + $0x10] sm:$0xff] %vm1035, %v1962
    %1971 = vst.msk [vmem:[#allocation14 + $0x18] sm:$0xff] %vm1035, %v1963
    %v1972 = vld [vmem:[#allocation13] sm:$0x3]
    %v1973 = vld [vmem:[#allocation14 + $0x18] sm:$0x3]
    %v1974 = vld [vmem:[#allocation23] sm:$0xff]
    %v1975 = vld [vmem:[#allocation23 + $0x8] sm:$0xff]
    %v1976 = vld [vmem:[#allocation23 + $0x10] sm:$0xff]
    %v1977 = vld [vmem:[#allocation23 + $0x18] sm:$0xff]
    %v1978 = vld [vmem:[#allocation23 + $0x20] sm:$0xff]
    %v1979 = vld [vmem:[#allocation23 + $0x28] sm:$0xff]
    %v1980 = vld [vmem:[#allocation23 + $0x30] sm:$0xff]
    %v1981 = vld [vmem:[#allocation23 + $0x38] sm:$0xff]
    %v1982 = vld [vmem:[#allocation23 + $0x40] sm:$0xff]
    %v1983 = vld [vmem:[#allocation23 + $0x48] sm:$0xff]
    %v1984 = vld [vmem:[#allocation23 + $0x50] sm:$0xff]
    %v1985 = vld [vmem:[#allocation23 + $0x58] sm:$0xff]
    %v1986 = vld [vmem:[#allocation23 + $0x60] sm:$0xff]
    %v1987 = vld [vmem:[#allocation23 + $0x68] sm:$0xff]
    %v1988 = vld [vmem:[#allocation23 + $0x70] sm:$0xff]
    %v1989 = vld [vmem:[#allocation23 + $0x78] sm:$0xff]
    %v1990 = vld [vmem:[%s14] sm:$0x3]
    %v1992 = vperm.slane %v1990, 0
    %v1993 = vperm.slane %v1990, 1
    %1996 = vmatpush.msra.mxu0 0.0
    %1997 = vmatpush.msra.mxu0 0.0
    %1998 = vmatpush.msra.mxu0 0.0
    %1999 = vmatpush.msra.mxu0 0.0
    %2000 = vmatpush.msra.mxu0 0.0
    %2001 = vmatpush.msra.mxu0 0.0
    %2002 = vmatpush.msra.mxu0 0.0
    %2003 = vmatpush.msra.mxu0 0.0
    %2004 = vmatpush.msra.mxu0 %v1988
    %2005 = vmatpush.msra.mxu0 %v1986
    %2006 = vmatpush.msra.mxu0 %v1984
    %2007 = vmatpush.msra.mxu0 %v1982
    %2008 = vmatpush.msra.mxu0 %v1980
    %2009 = vmatpush.msra.mxu0 %v1978
    %2010 = vmatpush.msra.mxu0 %v1976
    %2011 = vmatpush.msra.mxu0 %v1974
    %2012 = vmatmul.f32.gmra.mxu0 %v1101
    %v2013 = vpop.f32.mrf.mxu0
    %v2014 = vadd.f32 %v1992, %v2013
    %2015 = vdwg.mxu0
    %2016 = vmatpush.msra.mxu0 0.0
    %2017 = vmatpush.msra.mxu0 0.0
    %2018 = vmatpush.msra.mxu0 0.0
    %2019 = vmatpush.msra.mxu0 0.0
    %2020 = vmatpush.msra.mxu0 0.0
    %2021 = vmatpush.msra.mxu0 0.0
    %2022 = vmatpush.msra.mxu0 0.0
    %2023 = vmatpush.msra.mxu0 0.0
    %2024 = vmatpush.msra.mxu0 %v1989
    %2025 = vmatpush.msra.mxu0 %v1987
    %2026 = vmatpush.msra.mxu0 %v1985
    %2027 = vmatpush.msra.mxu0 %v1983
    %2028 = vmatpush.msra.mxu0 %v1981
    %2029 = vmatpush.msra.mxu0 %v1979
    %2030 = vmatpush.msra.mxu0 %v1977
    %2031 = vmatpush.msra.mxu0 %v1975
    %2032 = vmatmul.f32.gmra.mxu0 %v1101
    %v2033 = vpop.f32.mrf.mxu0
    %v2034 = vadd.f32 %v1993, %v2033
    %2035 = vdwg.mxu0
    %v2036 = vadd.f32 %v1972, %v2014
    %v2037 = vxor.u32 %v2036, 2147483648
    %v2038 = vmul.f32 %v2037, 1.442695
    %v2039 = vpow.pop %v2038
    %v2040 = vadd.f32 %v2039, 1.0
    %v2041 = vrcp.pop %v2040
    %v2042 = vmul.f32 %v2040, %v2041
    %v2043 = vsub.f32 1.0, %v2042
    %v2044 = vmul.f32 %v2041, %v2043
    %v2045 = vadd.f32 %v2041, %v2044
    %vm2046 = vweird.f32 %v2040
    %vm2047 = vweird.f32 %v2041
    %vm2048 = vmor %vm2046, %vm2047
    %v2049 = vsel %vm2048, %v2041, %v2045
    %v2050 = vand.u32 2147483647, %v2040
    %vm2051 = vcmp.eq.f32.partialorder %v2050, 8.507059e+37
    %v2052 = vand.u32 %v2040, 2147483648
    %v2053 = vor.u32 1.1754944e-38, %v2052
    %v2054 = vsel %vm2051, %v2053, %v2049
    %v2055 = vmul.f32 1.0, %v2054
    %2057 = vrot.lane.b32.xlu0 %v2014, 64
    %v2058 = vpop.permute.xlu0 %2057
    %v2060 = vmul.f32 %v2055, %v2058
    %2062 = vrot.lane.b32.xlu0 %v2060, 64
    %v2063 = vpop.permute.xlu0 %2062
    %v2065 = vadd.f32 %v1972, %v2063
    %v2066 = vtanh.pop %v2065
    %v2067 = vsub.f32 1.0, %v2055
    %2069 = vrot.lane.b32.xlu0 %v2066, 96
    %v2070 = vpop.permute.xlu0 %2069
    %v2072 = vmul.f32 %v2067, %v2070
    %v2073 = vmul.f32 %v2055, 0.0
    %v2074 = vadd.f32 %v2072, %v2073
    %2075 = vrot.lane.b32.xlu0 %v2014, 32
    %v2076 = vpop.permute.xlu0 %2075
    %v2078 = vadd.f32 %v1973, %v2076
    %v2079 = vxor.u32 %v2078, 2147483648
    %v2080 = vmul.f32 %v2079, 1.442695
    %v2081 = vpow.pop %v2080
    %v2082 = vadd.f32 %v2081, 1.0
    %v2083 = vrcp.pop %v2082
    %v2084 = vmul.f32 %v2082, %v2083
    %v2085 = vsub.f32 1.0, %v2084
    %v2086 = vmul.f32 %v2083, %v2085
    %v2087 = vadd.f32 %v2083, %v2086
    %vm2088 = vweird.f32 %v2082
    %vm2089 = vweird.f32 %v2083
    %vm2090 = vmor %vm2088, %vm2089
    %v2091 = vsel %vm2090, %v2083, %v2087
    %v2092 = vand.u32 2147483647, %v2082
    %vm2093 = vcmp.eq.f32.partialorder %v2092, 8.507059e+37
    %v2094 = vand.u32 %v2082, 2147483648
    %v2095 = vor.u32 1.1754944e-38, %v2094
    %v2096 = vsel %vm2093, %v2095, %v2091
    %v2097 = vmul.f32 1.0, %v2096
    %2099 = vrot.lane.b32.xlu0 %v2034, 32
    %v2100 = vpop.permute.xlu0 %2099
    %v2102 = vadd.f32 %v1973, %v2100
    %v2103 = vxor.u32 %v2102, 2147483648
    %v2104 = vmul.f32 %v2103, 1.442695
    %v2105 = vpow.pop %v2104
    %v2106 = vadd.f32 %v2105, 1.0
    %v2107 = vrcp.pop %v2106
    %v2108 = vmul.f32 %v2106, %v2107
    %v2109 = vsub.f32 1.0, %v2108
    %v2110 = vmul.f32 %v2107, %v2109
    %v2111 = vadd.f32 %v2107, %v2110
    %vm2112 = vweird.f32 %v2106
    %vm2113 = vweird.f32 %v2107
    %vm2114 = vmor %vm2112, %vm2113
    %v2115 = vsel %vm2114, %v2107, %v2111
    %v2116 = vand.u32 2147483647, %v2106
    %vm2117 = vcmp.eq.f32.partialorder %v2116, 8.507059e+37
    %v2118 = vand.u32 %v2106, 2147483648
    %v2119 = vor.u32 1.1754944e-38, %v2118
    %v2120 = vsel %vm2117, %v2119, %v2115
    %v2121 = vmul.f32 1.0, %v2120
    %2122 = vrot.lane.b32.xlu0 %v2034, 96
    %v2123 = vpop.permute.xlu0 %2122
    %v2125 = vmul.f32 %v2097, %v2123
    %2127 = vrot.lane.b32.xlu0 %v2125, 64
    %v2128 = vpop.permute.xlu0 %2127
    %v2130 = vadd.f32 %v1973, %v2128
    %v2131 = vtanh.pop %v2130
    %v2132 = vsub.f32 1.0, %v2121
    %2134 = vrot.lane.b32.xlu0 %v2131, 96
    %v2135 = vpop.permute.xlu0 %2134
    %v2137 = vmul.f32 %v2132, %v2135
    %v2138 = vmul.f32 %v2121, 0.0
    %v2139 = vadd.f32 %v2137, %v2138
    %2141 = vrot.lane.b32.xlu0 %v2074, 96
    %v2142 = vpop.permute.xlu0 %2141
    %2144 = vst.msk [vmem:[#allocation15] sm:$0x3] %vm461, %v2142
    %2146 = vrot.lane.b32.xlu0 %v2139, 96
    %v2147 = vpop.permute.xlu0 %2146
    %2149 = vst.msk [vmem:[#allocation16 + $0x18] sm:$0x3] %vm461, %v2147
    %v2150 = vsel %vm432, %v2142, %v2139
    %v2151 = vld [vmem:[#allocation13 + $0x8] sm:$0x3]
    %v2152 = vld [vmem:[#allocation14 + $0x10] sm:$0x3]
    %v2153 = vld [vmem:[#allocation23] sm:$0xff]
    %v2154 = vld [vmem:[#allocation23 + $0x8] sm:$0xff]
    %v2155 = vld [vmem:[#allocation23 + $0x10] sm:$0xff]
    %v2156 = vld [vmem:[#allocation23 + $0x18] sm:$0xff]
    %v2157 = vld [vmem:[#allocation23 + $0x20] sm:$0xff]
    %v2158 = vld [vmem:[#allocation23 + $0x28] sm:$0xff]
    %v2159 = vld [vmem:[#allocation23 + $0x30] sm:$0xff]
    %v2160 = vld [vmem:[#allocation23 + $0x38] sm:$0xff]
    %v2161 = vld [vmem:[#allocation23 + $0x40] sm:$0xff]
    %v2162 = vld [vmem:[#allocation23 + $0x48] sm:$0xff]
    %v2163 = vld [vmem:[#allocation23 + $0x50] sm:$0xff]
    %v2164 = vld [vmem:[#allocation23 + $0x58] sm:$0xff]
    %v2165 = vld [vmem:[#allocation23 + $0x60] sm:$0xff]
    %v2166 = vld [vmem:[#allocation23 + $0x68] sm:$0xff]
    %v2167 = vld [vmem:[#allocation23 + $0x70] sm:$0xff]
    %v2168 = vld [vmem:[#allocation23 + $0x78] sm:$0xff]
    %v2169 = vld [vmem:[%s14] sm:$0x3]
    %v2171 = vperm.slane %v2169, 0
    %v2172 = vperm.slane %v2169, 1
    %v2176 = vsel %vm705, %v2150, 0
    %2178 = vmatpush.msra.mxu0 0.0
    %2179 = vmatpush.msra.mxu0 0.0
    %2180 = vmatpush.msra.mxu0 0.0
    %2181 = vmatpush.msra.mxu0 0.0
    %2182 = vmatpush.msra.mxu0 0.0
    %2183 = vmatpush.msra.mxu0 0.0
    %2184 = vmatpush.msra.mxu0 0.0
    %2185 = vmatpush.msra.mxu0 0.0
    %2186 = vmatpush.msra.mxu0 %v2167
    %2187 = vmatpush.msra.mxu0 %v2165
    %2188 = vmatpush.msra.mxu0 %v2163
    %2189 = vmatpush.msra.mxu0 %v2161
    %2190 = vmatpush.msra.mxu0 %v2159
    %2191 = vmatpush.msra.mxu0 %v2157
    %2192 = vmatpush.msra.mxu0 %v2155
    %2193 = vmatpush.msra.mxu0 %v2153
    %2194 = vmatmul.f32.gmra.mxu0 %v2176
    %v2195 = vpop.f32.mrf.mxu0
    %v2196 = vadd.f32 %v2171, %v2195
    %2197 = vdwg.mxu0
    %2198 = vmatpush.msra.mxu0 0.0
    %2199 = vmatpush.msra.mxu0 0.0
    %2200 = vmatpush.msra.mxu0 0.0
    %2201 = vmatpush.msra.mxu0 0.0
    %2202 = vmatpush.msra.mxu0 0.0
    %2203 = vmatpush.msra.mxu0 0.0
    %2204 = vmatpush.msra.mxu0 0.0
    %2205 = vmatpush.msra.mxu0 0.0
    %2206 = vmatpush.msra.mxu0 %v2168
    %2207 = vmatpush.msra.mxu0 %v2166
    %2208 = vmatpush.msra.mxu0 %v2164
    %2209 = vmatpush.msra.mxu0 %v2162
    %2210 = vmatpush.msra.mxu0 %v2160
    %2211 = vmatpush.msra.mxu0 %v2158
    %2212 = vmatpush.msra.mxu0 %v2156
    %2213 = vmatpush.msra.mxu0 %v2154
    %2214 = vmatmul.f32.gmra.mxu0 %v2176
    %v2215 = vpop.f32.mrf.mxu0
    %v2216 = vadd.f32 %v2172, %v2215
    %2217 = vdwg.mxu0
    %v2218 = vadd.f32 %v2151, %v2196
    %v2219 = vxor.u32 %v2218, 2147483648
    %v2220 = vmul.f32 %v2219, 1.442695
    %v2221 = vpow.pop %v2220
    %v2222 = vadd.f32 %v2221, 1.0
    %v2223 = vrcp.pop %v2222
    %v2224 = vmul.f32 %v2222, %v2223
    %v2225 = vsub.f32 1.0, %v2224
    %v2226 = vmul.f32 %v2223, %v2225
    %v2227 = vadd.f32 %v2223, %v2226
    %vm2228 = vweird.f32 %v2222
    %vm2229 = vweird.f32 %v2223
    %vm2230 = vmor %vm2228, %vm2229
    %v2231 = vsel %vm2230, %v2223, %v2227
    %v2232 = vand.u32 2147483647, %v2222
    %vm2233 = vcmp.eq.f32.partialorder %v2232, 8.507059e+37
    %v2234 = vand.u32 %v2222, 2147483648
    %v2235 = vor.u32 1.1754944e-38, %v2234
    %v2236 = vsel %vm2233, %v2235, %v2231
    %v2237 = vmul.f32 1.0, %v2236
    %2239 = vrot.lane.b32.xlu0 %v2196, 64
    %v2240 = vpop.permute.xlu0 %2239
    %v2242 = vmul.f32 %v2237, %v2240
    %2244 = vrot.lane.b32.xlu0 %v2242, 64
    %v2245 = vpop.permute.xlu0 %2244
    %v2247 = vadd.f32 %v2151, %v2245
    %v2248 = vtanh.pop %v2247
    %v2249 = vsub.f32 1.0, %v2237
    %2251 = vrot.lane.b32.xlu0 %v2248, 96
    %v2252 = vpop.permute.xlu0 %2251
    %v2254 = vmul.f32 %v2249, %v2252
    %2255 = vrot.lane.b32.xlu0 %v2150, 32
    %v2256 = vpop.permute.xlu0 %2255
    %v2258 = vmul.f32 %v2237, %v2256
    %v2259 = vadd.f32 %v2254, %v2258
    %2260 = vrot.lane.b32.xlu0 %v2196, 32
    %v2261 = vpop.permute.xlu0 %2260
    %v2263 = vadd.f32 %v2152, %v2261
    %v2264 = vxor.u32 %v2263, 2147483648
    %v2265 = vmul.f32 %v2264, 1.442695
    %v2266 = vpow.pop %v2265
    %v2267 = vadd.f32 %v2266, 1.0
    %v2268 = vrcp.pop %v2267
    %v2269 = vmul.f32 %v2267, %v2268
    %v2270 = vsub.f32 1.0, %v2269
    %v2271 = vmul.f32 %v2268, %v2270
    %v2272 = vadd.f32 %v2268, %v2271
    %vm2273 = vweird.f32 %v2267
    %vm2274 = vweird.f32 %v2268
    %vm2275 = vmor %vm2273, %vm2274
    %v2276 = vsel %vm2275, %v2268, %v2272
    %v2277 = vand.u32 2147483647, %v2267
    %vm2278 = vcmp.eq.f32.partialorder %v2277, 8.507059e+37
    %v2279 = vand.u32 %v2267, 2147483648
    %v2280 = vor.u32 1.1754944e-38, %v2279
    %v2281 = vsel %vm2278, %v2280, %v2276
    %v2282 = vmul.f32 1.0, %v2281
    %2284 = vrot.lane.b32.xlu0 %v2216, 32
    %v2285 = vpop.permute.xlu0 %2284
    %v2287 = vadd.f32 %v2152, %v2285
    %v2288 = vxor.u32 %v2287, 2147483648
    %v2289 = vmul.f32 %v2288, 1.442695
    %v2290 = vpow.pop %v2289
    %v2291 = vadd.f32 %v2290, 1.0
    %v2292 = vrcp.pop %v2291
    %v2293 = vmul.f32 %v2291, %v2292
    %v2294 = vsub.f32 1.0, %v2293
    %v2295 = vmul.f32 %v2292, %v2294
    %v2296 = vadd.f32 %v2292, %v2295
    %vm2297 = vweird.f32 %v2291
    %vm2298 = vweird.f32 %v2292
    %vm2299 = vmor %vm2297, %vm2298
    %v2300 = vsel %vm2299, %v2292, %v2296
    %v2301 = vand.u32 2147483647, %v2291
    %vm2302 = vcmp.eq.f32.partialorder %v2301, 8.507059e+37
    %v2303 = vand.u32 %v2291, 2147483648
    %v2304 = vor.u32 1.1754944e-38, %v2303
    %v2305 = vsel %vm2302, %v2304, %v2300
    %v2306 = vmul.f32 1.0, %v2305
    %2307 = vrot.lane.b32.xlu0 %v2216, 96
    %v2308 = vpop.permute.xlu0 %2307
    %v2310 = vmul.f32 %v2282, %v2308
    %2312 = vrot.lane.b32.xlu0 %v2310, 64
    %v2313 = vpop.permute.xlu0 %2312
    %v2315 = vadd.f32 %v2152, %v2313
    %v2316 = vtanh.pop %v2315
    %v2317 = vsub.f32 1.0, %v2306
    %2319 = vrot.lane.b32.xlu0 %v2316, 96
    %v2320 = vpop.permute.xlu0 %2319
    %v2322 = vmul.f32 %v2317, %v2320
    %v2323 = vmul.f32 %v2306, %v2150
    %v2324 = vadd.f32 %v2322, %v2323
    %2326 = vrot.lane.b32.xlu0 %v2259, 96
    %v2327 = vpop.permute.xlu0 %2326
    %2329 = vst.msk [vmem:[#allocation15 + $0x8] sm:$0x3] %vm461, %v2327
    %2331 = vrot.lane.b32.xlu0 %v2324, 96
    %v2332 = vpop.permute.xlu0 %2331
    %2334 = vst.msk [vmem:[#allocation16 + $0x10] sm:$0x3] %vm461, %v2332
    %v2335 = vsel %vm432, %v2327, %v2324
    %v2336 = vld [vmem:[#allocation13 + $0x10] sm:$0x3]
    %v2337 = vld [vmem:[#allocation14 + $0x8] sm:$0x3]
    %v2338 = vld [vmem:[#allocation23] sm:$0xff]
    %v2339 = vld [vmem:[#allocation23 + $0x8] sm:$0xff]
    %v2340 = vld [vmem:[#allocation23 + $0x10] sm:$0xff]
    %v2341 = vld [vmem:[#allocation23 + $0x18] sm:$0xff]
    %v2342 = vld [vmem:[#allocation23 + $0x20] sm:$0xff]
    %v2343 = vld [vmem:[#allocation23 + $0x28] sm:$0xff]
    %v2344 = vld [vmem:[#allocation23 + $0x30] sm:$0xff]
    %v2345 = vld [vmem:[#allocation23 + $0x38] sm:$0xff]
    %v2346 = vld [vmem:[#allocation23 + $0x40] sm:$0xff]
    %v2347 = vld [vmem:[#allocation23 + $0x48] sm:$0xff]
    %v2348 = vld [vmem:[#allocation23 + $0x50] sm:$0xff]
    %v2349 = vld [vmem:[#allocation23 + $0x58] sm:$0xff]
    %v2350 = vld [vmem:[#allocation23 + $0x60] sm:$0xff]
    %v2351 = vld [vmem:[#allocation23 + $0x68] sm:$0xff]
    %v2352 = vld [vmem:[#allocation23 + $0x70] sm:$0xff]
    %v2353 = vld [vmem:[#allocation23 + $0x78] sm:$0xff]
    %v2354 = vld [vmem:[%s14] sm:$0x3]
    %v2356 = vperm.slane %v2354, 0
    %v2357 = vperm.slane %v2354, 1
    %v2361 = vsel %vm705, %v2335, 0
    %2363 = vmatpush.msra.mxu0 0.0
    %2364 = vmatpush.msra.mxu0 0.0
    %2365 = vmatpush.msra.mxu0 0.0
    %2366 = vmatpush.msra.mxu0 0.0
    %2367 = vmatpush.msra.mxu0 0.0
    %2368 = vmatpush.msra.mxu0 0.0
    %2369 = vmatpush.msra.mxu0 0.0
    %2370 = vmatpush.msra.mxu0 0.0
    %2371 = vmatpush.msra.mxu0 %v2352
    %2372 = vmatpush.msra.mxu0 %v2350
    %2373 = vmatpush.msra.mxu0 %v2348
    %2374 = vmatpush.msra.mxu0 %v2346
    %2375 = vmatpush.msra.mxu0 %v2344
    %2376 = vmatpush.msra.mxu0 %v2342
    %2377 = vmatpush.msra.mxu0 %v2340
    %2378 = vmatpush.msra.mxu0 %v2338
    %2379 = vmatmul.f32.gmra.mxu0 %v2361
    %v2380 = vpop.f32.mrf.mxu0
    %v2381 = vadd.f32 %v2356, %v2380
    %2382 = vdwg.mxu0
    %2383 = vmatpush.msra.mxu0 0.0
    %2384 = vmatpush.msra.mxu0 0.0
    %2385 = vmatpush.msra.mxu0 0.0
    %2386 = vmatpush.msra.mxu0 0.0
    %2387 = vmatpush.msra.mxu0 0.0
    %2388 = vmatpush.msra.mxu0 0.0
    %2389 = vmatpush.msra.mxu0 0.0
    %2390 = vmatpush.msra.mxu0 0.0
    %2391 = vmatpush.msra.mxu0 %v2353
    %2392 = vmatpush.msra.mxu0 %v2351
    %2393 = vmatpush.msra.mxu0 %v2349
    %2394 = vmatpush.msra.mxu0 %v2347
    %2395 = vmatpush.msra.mxu0 %v2345
    %2396 = vmatpush.msra.mxu0 %v2343
    %2397 = vmatpush.msra.mxu0 %v2341
    %2398 = vmatpush.msra.mxu0 %v2339
    %2399 = vmatmul.f32.gmra.mxu0 %v2361
    %v2400 = vpop.f32.mrf.mxu0
    %v2401 = vadd.f32 %v2357, %v2400
    %2402 = vdwg.mxu0
    %v2403 = vadd.f32 %v2336, %v2381
    %v2404 = vxor.u32 %v2403, 2147483648
    %v2405 = vmul.f32 %v2404, 1.442695
    %v2406 = vpow.pop %v2405
    %v2407 = vadd.f32 %v2406, 1.0
    %v2408 = vrcp.pop %v2407
    %v2409 = vmul.f32 %v2407, %v2408
    %v2410 = vsub.f32 1.0, %v2409
    %v2411 = vmul.f32 %v2408, %v2410
    %v2412 = vadd.f32 %v2408, %v2411
    %vm2413 = vweird.f32 %v2407
    %vm2414 = vweird.f32 %v2408
    %vm2415 = vmor %vm2413, %vm2414
    %v2416 = vsel %vm2415, %v2408, %v2412
    %v2417 = vand.u32 2147483647, %v2407
    %vm2418 = vcmp.eq.f32.partialorder %v2417, 8.507059e+37
    %v2419 = vand.u32 %v2407, 2147483648
    %v2420 = vor.u32 1.1754944e-38, %v2419
    %v2421 = vsel %vm2418, %v2420, %v2416
    %v2422 = vmul.f32 1.0, %v2421
    %2424 = vrot.lane.b32.xlu0 %v2381, 64
    %v2425 = vpop.permute.xlu0 %2424
    %v2427 = vmul.f32 %v2422, %v2425
    %2429 = vrot.lane.b32.xlu0 %v2427, 64
    %v2430 = vpop.permute.xlu0 %2429
    %v2432 = vadd.f32 %v2336, %v2430
    %v2433 = vtanh.pop %v2432
    %v2434 = vsub.f32 1.0, %v2422
    %2436 = vrot.lane.b32.xlu0 %v2433, 96
    %v2437 = vpop.permute.xlu0 %2436
    %v2439 = vmul.f32 %v2434, %v2437
    %2440 = vrot.lane.b32.xlu0 %v2335, 32
    %v2441 = vpop.permute.xlu0 %2440
    %v2443 = vmul.f32 %v2422, %v2441
    %v2444 = vadd.f32 %v2439, %v2443
    %2445 = vrot.lane.b32.xlu0 %v2381, 32
    %v2446 = vpop.permute.xlu0 %2445
    %v2448 = vadd.f32 %v2337, %v2446
    %v2449 = vxor.u32 %v2448, 2147483648
    %v2450 = vmul.f32 %v2449, 1.442695
    %v2451 = vpow.pop %v2450
    %v2452 = vadd.f32 %v2451, 1.0
    %v2453 = vrcp.pop %v2452
    %v2454 = vmul.f32 %v2452, %v2453
    %v2455 = vsub.f32 1.0, %v2454
    %v2456 = vmul.f32 %v2453, %v2455
    %v2457 = vadd.f32 %v2453, %v2456
    %vm2458 = vweird.f32 %v2452
    %vm2459 = vweird.f32 %v2453
    %vm2460 = vmor %vm2458, %vm2459
    %v2461 = vsel %vm2460, %v2453, %v2457
    %v2462 = vand.u32 2147483647, %v2452
    %vm2463 = vcmp.eq.f32.partialorder %v2462, 8.507059e+37
    %v2464 = vand.u32 %v2452, 2147483648
    %v2465 = vor.u32 1.1754944e-38, %v2464
    %v2466 = vsel %vm2463, %v2465, %v2461
    %v2467 = vmul.f32 1.0, %v2466
    %2469 = vrot.lane.b32.xlu0 %v2401, 32
    %v2470 = vpop.permute.xlu0 %2469
    %v2472 = vadd.f32 %v2337, %v2470
    %v2473 = vxor.u32 %v2472, 2147483648
    %v2474 = vmul.f32 %v2473, 1.442695
    %v2475 = vpow.pop %v2474
    %v2476 = vadd.f32 %v2475, 1.0
    %v2477 = vrcp.pop %v2476
    %v2478 = vmul.f32 %v2476, %v2477
    %v2479 = vsub.f32 1.0, %v2478
    %v2480 = vmul.f32 %v2477, %v2479
    %v2481 = vadd.f32 %v2477, %v2480
    %vm2482 = vweird.f32 %v2476
    %vm2483 = vweird.f32 %v2477
    %vm2484 = vmor %vm2482, %vm2483
    %v2485 = vsel %vm2484, %v2477, %v2481
    %v2486 = vand.u32 2147483647, %v2476
    %vm2487 = vcmp.eq.f32.partialorder %v2486, 8.507059e+37
    %v2488 = vand.u32 %v2476, 2147483648
    %v2489 = vor.u32 1.1754944e-38, %v2488
    %v2490 = vsel %vm2487, %v2489, %v2485
    %v2491 = vmul.f32 1.0, %v2490
    %2492 = vrot.lane.b32.xlu0 %v2401, 96
    %v2493 = vpop.permute.xlu0 %2492
    %v2495 = vmul.f32 %v2467, %v2493
    %2497 = vrot.lane.b32.xlu0 %v2495, 64
    %v2498 = vpop.permute.xlu0 %2497
    %v2500 = vadd.f32 %v2337, %v2498
    %v2501 = vtanh.pop %v2500
    %v2502 = vsub.f32 1.0, %v2491
    %2504 = vrot.lane.b32.xlu0 %v2501, 96
    %v2505 = vpop.permute.xlu0 %2504
    %v2507 = vmul.f32 %v2502, %v2505
    %v2508 = vmul.f32 %v2491, %v2335
    %v2509 = vadd.f32 %v2507, %v2508
    %2511 = vrot.lane.b32.xlu0 %v2444, 96
    %v2512 = vpop.permute.xlu0 %2511
    %2514 = vst.msk [vmem:[#allocation15 + $0x10] sm:$0x3] %vm461, %v2512
    %2516 = vrot.lane.b32.xlu0 %v2509, 96
    %v2517 = vpop.permute.xlu0 %2516
    %2519 = vst.msk [vmem:[#allocation16 + $0x8] sm:$0x3] %vm461, %v2517
    %v2520 = vsel %vm432, %v2512, %v2509
    %v2521 = vld [vmem:[#allocation13 + $0x18] sm:$0x3]
    %v2522 = vld [vmem:[#allocation14] sm:$0x3]
    %v2523 = vld [vmem:[#allocation23] sm:$0xff]
    %v2524 = vld [vmem:[#allocation23 + $0x8] sm:$0xff]
    %v2525 = vld [vmem:[#allocation23 + $0x10] sm:$0xff]
    %v2526 = vld [vmem:[#allocation23 + $0x18] sm:$0xff]
    %v2527 = vld [vmem:[#allocation23 + $0x20] sm:$0xff]
    %v2528 = vld [vmem:[#allocation23 + $0x28] sm:$0xff]
    %v2529 = vld [vmem:[#allocation23 + $0x30] sm:$0xff]
    %v2530 = vld [vmem:[#allocation23 + $0x38] sm:$0xff]
    %v2531 = vld [vmem:[#allocation23 + $0x40] sm:$0xff]
    %v2532 = vld [vmem:[#allocation23 + $0x48] sm:$0xff]
    %v2533 = vld [vmem:[#allocation23 + $0x50] sm:$0xff]
    %v2534 = vld [vmem:[#allocation23 + $0x58] sm:$0xff]
    %v2535 = vld [vmem:[#allocation23 + $0x60] sm:$0xff]
    %v2536 = vld [vmem:[#allocation23 + $0x68] sm:$0xff]
    %v2537 = vld [vmem:[#allocation23 + $0x70] sm:$0xff]
    %v2538 = vld [vmem:[#allocation23 + $0x78] sm:$0xff]
    %v2539 = vld [vmem:[%s14] sm:$0x3]
    %v2541 = vperm.slane %v2539, 0
    %v2542 = vperm.slane %v2539, 1
    %v2546 = vsel %vm705, %v2520, 0
    %2548 = vmatpush.msra.mxu0 0.0
    %2549 = vmatpush.msra.mxu0 0.0
    %2550 = vmatpush.msra.mxu0 0.0
    %2551 = vmatpush.msra.mxu0 0.0
    %2552 = vmatpush.msra.mxu0 0.0
    %2553 = vmatpush.msra.mxu0 0.0
    %2554 = vmatpush.msra.mxu0 0.0
    %2555 = vmatpush.msra.mxu0 0.0
    %2556 = vmatpush.msra.mxu0 %v2537
    %2557 = vmatpush.msra.mxu0 %v2535
    %2558 = vmatpush.msra.mxu0 %v2533
    %2559 = vmatpush.msra.mxu0 %v2531
    %2560 = vmatpush.msra.mxu0 %v2529
    %2561 = vmatpush.msra.mxu0 %v2527
    %2562 = vmatpush.msra.mxu0 %v2525
    %2563 = vmatpush.msra.mxu0 %v2523
    %2564 = vmatmul.f32.gmra.mxu0 %v2546
    %v2565 = vpop.f32.mrf.mxu0
    %v2566 = vadd.f32 %v2541, %v2565
    %2567 = vdwg.mxu0
    %2568 = vmatpush.msra.mxu0 0.0
    %2569 = vmatpush.msra.mxu0 0.0
    %2570 = vmatpush.msra.mxu0 0.0
    %2571 = vmatpush.msra.mxu0 0.0
    %2572 = vmatpush.msra.mxu0 0.0
    %2573 = vmatpush.msra.mxu0 0.0
    %2574 = vmatpush.msra.mxu0 0.0
    %2575 = vmatpush.msra.mxu0 0.0
    %2576 = vmatpush.msra.mxu0 %v2538
    %2577 = vmatpush.msra.mxu0 %v2536
    %2578 = vmatpush.msra.mxu0 %v2534
    %2579 = vmatpush.msra.mxu0 %v2532
    %2580 = vmatpush.msra.mxu0 %v2530
    %2581 = vmatpush.msra.mxu0 %v2528
    %2582 = vmatpush.msra.mxu0 %v2526
    %2583 = vmatpush.msra.mxu0 %v2524
    %2584 = vmatmul.f32.gmra.mxu0 %v2546
    %v2585 = vpop.f32.mrf.mxu0
    %v2586 = vadd.f32 %v2542, %v2585
    %2587 = vdwg.mxu0
    %v2588 = vadd.f32 %v2521, %v2566
    %v2589 = vxor.u32 %v2588, 2147483648
    %v2590 = vmul.f32 %v2589, 1.442695
    %v2591 = vpow.pop %v2590
    %v2592 = vadd.f32 %v2591, 1.0
    %v2593 = vrcp.pop %v2592
    %v2594 = vmul.f32 %v2592, %v2593
    %v2595 = vsub.f32 1.0, %v2594
    %v2596 = vmul.f32 %v2593, %v2595
    %v2597 = vadd.f32 %v2593, %v2596
    %vm2598 = vweird.f32 %v2592
    %vm2599 = vweird.f32 %v2593
    %vm2600 = vmor %vm2598, %vm2599
    %v2601 = vsel %vm2600, %v2593, %v2597
    %v2602 = vand.u32 2147483647, %v2592
    %vm2603 = vcmp.eq.f32.partialorder %v2602, 8.507059e+37
    %v2604 = vand.u32 %v2592, 2147483648
    %v2605 = vor.u32 1.1754944e-38, %v2604
    %v2606 = vsel %vm2603, %v2605, %v2601
    %v2607 = vmul.f32 1.0, %v2606
    %2609 = vrot.lane.b32.xlu0 %v2566, 64
    %v2610 = vpop.permute.xlu0 %2609
    %v2612 = vmul.f32 %v2607, %v2610
    %2614 = vrot.lane.b32.xlu0 %v2612, 64
    %v2615 = vpop.permute.xlu0 %2614
    %v2617 = vadd.f32 %v2521, %v2615
    %v2618 = vtanh.pop %v2617
    %v2619 = vsub.f32 1.0, %v2607
    %2621 = vrot.lane.b32.xlu0 %v2618, 96
    %v2622 = vpop.permute.xlu0 %2621
    %v2624 = vmul.f32 %v2619, %v2622
    %2625 = vrot.lane.b32.xlu0 %v2520, 32
    %v2626 = vpop.permute.xlu0 %2625
    %v2628 = vmul.f32 %v2607, %v2626
    %v2629 = vadd.f32 %v2624, %v2628
    %2630 = vrot.lane.b32.xlu0 %v2566, 32
    %v2631 = vpop.permute.xlu0 %2630
    %v2633 = vadd.f32 %v2522, %v2631
    %v2634 = vxor.u32 %v2633, 2147483648
    %v2635 = vmul.f32 %v2634, 1.442695
    %v2636 = vpow.pop %v2635
    %v2637 = vadd.f32 %v2636, 1.0
    %v2638 = vrcp.pop %v2637
    %v2639 = vmul.f32 %v2637, %v2638
    %v2640 = vsub.f32 1.0, %v2639
    %v2641 = vmul.f32 %v2638, %v2640
    %v2642 = vadd.f32 %v2638, %v2641
    %vm2643 = vweird.f32 %v2637
    %vm2644 = vweird.f32 %v2638
    %vm2645 = vmor %vm2643, %vm2644
    %v2646 = vsel %vm2645, %v2638, %v2642
    %v2647 = vand.u32 2147483647, %v2637
    %vm2648 = vcmp.eq.f32.partialorder %v2647, 8.507059e+37
    %v2649 = vand.u32 %v2637, 2147483648
    %v2650 = vor.u32 1.1754944e-38, %v2649
    %v2651 = vsel %vm2648, %v2650, %v2646
    %v2652 = vmul.f32 1.0, %v2651
    %2654 = vrot.lane.b32.xlu0 %v2586, 32
    %v2655 = vpop.permute.xlu0 %2654
    %v2657 = vadd.f32 %v2522, %v2655
    %v2658 = vxor.u32 %v2657, 2147483648
    %v2659 = vmul.f32 %v2658, 1.442695
    %v2660 = vpow.pop %v2659
    %v2661 = vadd.f32 %v2660, 1.0
    %v2662 = vrcp.pop %v2661
    %v2663 = vmul.f32 %v2661, %v2662
    %v2664 = vsub.f32 1.0, %v2663
    %v2665 = vmul.f32 %v2662, %v2664
    %v2666 = vadd.f32 %v2662, %v2665
    %vm2667 = vweird.f32 %v2661
    %vm2668 = vweird.f32 %v2662
    %vm2669 = vmor %vm2667, %vm2668
    %v2670 = vsel %vm2669, %v2662, %v2666
    %v2671 = vand.u32 2147483647, %v2661
    %vm2672 = vcmp.eq.f32.partialorder %v2671, 8.507059e+37
    %v2673 = vand.u32 %v2661, 2147483648
    %v2674 = vor.u32 1.1754944e-38, %v2673
    %v2675 = vsel %vm2672, %v2674, %v2670
    %v2676 = vmul.f32 1.0, %v2675
    %2677 = vrot.lane.b32.xlu0 %v2586, 96
    %v2678 = vpop.permute.xlu0 %2677
    %v2680 = vmul.f32 %v2652, %v2678
    %2682 = vrot.lane.b32.xlu0 %v2680, 64
    %v2683 = vpop.permute.xlu0 %2682
    %v2685 = vadd.f32 %v2522, %v2683
    %v2686 = vtanh.pop %v2685
    %v2687 = vsub.f32 1.0, %v2676
    %2689 = vrot.lane.b32.xlu0 %v2686, 96
    %v2690 = vpop.permute.xlu0 %2689
    %v2692 = vmul.f32 %v2687, %v2690
    %v2693 = vmul.f32 %v2676, %v2520
    %v2694 = vadd.f32 %v2692, %v2693
    %2696 = vrot.lane.b32.xlu0 %v2629, 96
    %v2697 = vpop.permute.xlu0 %2696
    %2699 = vst.msk [vmem:[#allocation15 + $0x18] sm:$0x3] %vm461, %v2697
    %2701 = vrot.lane.b32.xlu0 %v2694, 96
    %v2702 = vpop.permute.xlu0 %2701
    %2704 = vst.msk [vmem:[#allocation16] sm:$0x3] %vm461, %v2702
    %v2705 = vld [vmem:[#allocation15] sm:$0xff]
    %v2706 = vld [vmem:[#allocation15 + $0x8] sm:$0xff]
    %v2707 = vld [vmem:[#allocation15 + $0x10] sm:$0xff]
    %v2708 = vld [vmem:[#allocation15 + $0x18] sm:$0xff]
    %v2709 = vld [vmem:[#allocation16] sm:$0xff]
    %v2710 = vld [vmem:[#allocation16 + $0x8] sm:$0xff]
    %v2711 = vld [vmem:[#allocation16 + $0x10] sm:$0xff]
    %v2712 = vld [vmem:[#allocation16 + $0x18] sm:$0xff]
    %2717 = vrot.lane.b32.xlu0 %v2709, 32
    %v2718 = vpop.permute.xlu0 %2717
    %2719 = vrot.lane.b32.xlu0 %v2710, 32
    %v2720 = vpop.permute.xlu0 %2719
    %2721 = vrot.lane.b32.xlu0 %v2711, 32
    %v2722 = vpop.permute.xlu0 %2721
    %2723 = vrot.lane.b32.xlu0 %v2712, 32
    %v2724 = vpop.permute.xlu0 %2723
    %v2729 = vsel %vm432, %v2705, %v2718
    %v2730 = vsel %vm432, %v2706, %v2720
    %v2731 = vsel %vm432, %v2707, %v2722
    %v2732 = vsel %vm432, %v2708, %v2724
    %v2733 = vld [vmem:[#allocation24] sm:$0xff]
    %v2734 = vld [vmem:[#allocation24 + $0x8] sm:$0xff]
    %v2735 = vld [vmem:[#allocation24 + $0x10] sm:$0xff]
    %v2736 = vld [vmem:[#allocation24 + $0x18] sm:$0xff]
    %v2737 = vld [vmem:[#allocation24 + $0x20] sm:$0xff]
    %v2738 = vld [vmem:[#allocation24 + $0x28] sm:$0xff]
    %v2739 = vld [vmem:[#allocation24 + $0x30] sm:$0xff]
    %v2740 = vld [vmem:[#allocation24 + $0x38] sm:$0xff]
    %v2741 = vld [vmem:[%s16] sm:$0x1]
    %v2743 = vperm.slane %v2741, 0
    %v2746 = vsel %vm705, %v2729, 0
    %v2749 = vsel %vm705, %v2730, 0
    %v2752 = vsel %vm705, %v2731, 0
    %v2755 = vsel %vm705, %v2732, 0
    %2757 = vmatpush.msra.mxu0 0.0
    %2758 = vmatpush.msra.mxu0 0.0
    %2759 = vmatpush.msra.mxu0 0.0
    %2760 = vmatpush.msra.mxu0 0.0
    %2761 = vmatpush.msra.mxu0 0.0
    %2762 = vmatpush.msra.mxu0 0.0
    %2763 = vmatpush.msra.mxu0 0.0
    %2764 = vmatpush.msra.mxu0 0.0
    %2765 = vmatpush.msra.mxu0 %v2740
    %2766 = vmatpush.msra.mxu0 %v2739
    %2767 = vmatpush.msra.mxu0 %v2738
    %2768 = vmatpush.msra.mxu0 %v2737
    %2769 = vmatpush.msra.mxu0 %v2736
    %2770 = vmatpush.msra.mxu0 %v2735
    %2771 = vmatpush.msra.mxu0 %v2734
    %2772 = vmatpush.msra.mxu0 %v2733
    %2773 = vmatmul.f32.gmra.mxu0 %v2746
    %v2774 = vpop.f32.mrf.mxu0
    %v2775 = vadd.f32 %v2743, %v2774
    %2776 = vmatmul.f32.gmra.mxu0 %v2749
    %v2777 = vpop.f32.mrf.mxu0
    %v2778 = vadd.f32 %v2743, %v2777
    %2779 = vmatmul.f32.gmra.mxu0 %v2752
    %v2780 = vpop.f32.mrf.mxu0
    %v2781 = vadd.f32 %v2743, %v2780
    %2782 = vmatmul.f32.gmra.mxu0 %v2755
    %v2783 = vpop.f32.mrf.mxu0
    %v2784 = vadd.f32 %v2743, %v2783
    %2785 = vdwg.mxu0
    %v2786 = vtanh.pop %v2775
    %v2787 = vtanh.pop %v2778
    %v2788 = vtanh.pop %v2781
    %v2789 = vtanh.pop %v2784
    %v2790 = vld [vmem:[%s17] sm:$0x1]
    %v2792 = vperm.slane %v2790, 0
    %v2794 = vmul.f32 %v2786, %v2792
    %v2795 = vmul.f32 %v2787, %v2792
    %v2796 = vmul.f32 %v2788, %v2792
    %v2797 = vmul.f32 %v2789, %v2792
    %v2798 = vsel %vm705, %v2794, 0.0
    %2799 = vadd.xlane.f32.xlu0 %v2798
    %v2800 = vpop.xlane.xlu0 %2799
    %v2801 = vsel %vm705, %v2795, 0.0
    %2802 = vadd.xlane.f32.xlu0 %v2801
    %v2803 = vpop.xlane.xlu0 %2802
    %v2804 = vsel %vm705, %v2796, 0.0
    %2805 = vadd.xlane.f32.xlu0 %v2804
    %v2806 = vpop.xlane.xlu0 %2805
    %v2807 = vsel %vm705, %v2797, 0.0
    %2808 = vadd.xlane.f32.xlu0 %v2807
    %v2809 = vpop.xlane.xlu0 %2808
    %v2810 = vld [vmem:[#allocation17] sm:$0x1]
    %v2812 = vperm.slane %v2810, 0
    %v2814 = vadd.f32 %v2800, %v2812
    %v2815 = vadd.f32 %v2803, %v2812
    %v2816 = vadd.f32 %v2806, %v2812
    %v2817 = vadd.f32 %v2809, %v2812
    %2819 = vrot.lane.b32.xlu0 %v2815, 1
    %v2820 = vpop.permute.xlu0 %2819
    %2823 = vrot.lane.b32.xlu0 %v2816, 2
    %v2824 = vpop.permute.xlu0 %2823
    %2827 = vrot.lane.b32.xlu0 %v2817, 3
    %v2828 = vpop.permute.xlu0 %2827
    %vm2830 = vcmask 7168
    %v2831 = vsel %vm2830, %v2814, %v2820
    %vm2832 = vcmask 15360
    %v2833 = vsel %vm2832, %v2831, %v2824
    %vm2834 = vcmask 23552
    %v2835 = vsel %vm2834, %v2833, %v2828
    %vm2836 = vcmask 25600
    %v2837 = vsel %vm2836, %v2835, -inf
    %2838 = vmax.xlane.f32.xlu0 %v2837
    %v2839 = vpop.xlane.xlu0 %2838
    %v2840 = vsub.f32 %v2835, %v2839
    %v2841 = vmul.f32 %v2840, 1.442695
    %v2842 = vpow.pop %v2841
    %v2843 = vsel %vm2836, %v2842, 0.0
    %2844 = vadd.xlane.f32.xlu0 %v2843
    %v2845 = vpop.xlane.xlu0 %2844
    %v2846 = vrcp.pop %v2845
    %v2847 = vmul.f32 %v2842, %v2846
    %2849 = vset.pattern.permute.xlu0 0
    %2850 = vperm.xlu0 %2849, %v2847
    %v2851 = vpop.permute.xlu0 %2850
    %v2853 = vmul.f32 %v2851, %v2729
    %v2854 = vadd.f32 %v2853, 0.0
    %2855 = vset.pattern.permute.xlu0 1
    %2856 = vperm.xlu0 %2855, %v2847
    %v2857 = vpop.permute.xlu0 %2856
    %v2859 = vmul.f32 %v2857, %v2730
    %v2860 = vadd.f32 %v2854, %v2859
    %2861 = vset.pattern.permute.xlu0 2
    %2862 = vperm.xlu0 %2861, %v2847
    %v2863 = vpop.permute.xlu0 %2862
    %v2865 = vmul.f32 %v2863, %v2731
    %v2866 = vadd.f32 %v2860, %v2865
    %2867 = vset.pattern.permute.xlu0 3
    %2868 = vperm.xlu0 %2867, %v2847
    %v2869 = vpop.permute.xlu0 %2868
    %v2871 = vmul.f32 %v2869, %v2732
    %v2872 = vadd.f32 %v2866, %v2871
    %v2873 = vld [vmem:[#allocation26] sm:$0xff]
    %v2874 = vld [vmem:[#allocation26 + $0x8] sm:$0xff]
    %v2875 = vld [vmem:[#allocation26 + $0x10] sm:$0xff]
    %v2876 = vld [vmem:[#allocation26 + $0x18] sm:$0xff]
    %v2877 = vld [vmem:[#allocation26 + $0x20] sm:$0xff]
    %v2878 = vld [vmem:[#allocation26 + $0x28] sm:$0xff]
    %v2879 = vld [vmem:[#allocation26 + $0x30] sm:$0xff]
    %v2880 = vld [vmem:[#allocation26 + $0x38] sm:$0xff]
    %v2881 = vld [vmem:[#allocation26 + $0x40] sm:$0xff]
    %v2882 = vld [vmem:[#allocation26 + $0x48] sm:$0xff]
    %v2883 = vld [vmem:[#allocation26 + $0x50] sm:$0xff]
    %v2884 = vld [vmem:[#allocation26 + $0x58] sm:$0xff]
    %v2885 = vld [vmem:[#allocation26 + $0x60] sm:$0xff]
    %v2886 = vld [vmem:[#allocation26 + $0x68] sm:$0xff]
    %v2887 = vld [vmem:[#allocation26 + $0x70] sm:$0xff]
    %v2888 = vld [vmem:[#allocation26 + $0x78] sm:$0xff]
    %v2889 = vld [vmem:[%s20] sm:$0x3]
    %v2891 = vperm.slane %v2889, 0
    %v2892 = vperm.slane %v2889, 1
    %v2896 = vsel %vm705, %v2872, 0
    %2898 = vmatpush.msra.mxu0 0.0
    %2899 = vmatpush.msra.mxu0 0.0
    %2900 = vmatpush.msra.mxu0 0.0
    %2901 = vmatpush.msra.mxu0 0.0
    %2902 = vmatpush.msra.mxu0 0.0
    %2903 = vmatpush.msra.mxu0 0.0
    %2904 = vmatpush.msra.mxu0 0.0
    %2905 = vmatpush.msra.mxu0 0.0
    %2906 = vmatpush.msra.mxu0 %v2887
    %2907 = vmatpush.msra.mxu0 %v2885
    %2908 = vmatpush.msra.mxu0 %v2883
    %2909 = vmatpush.msra.mxu0 %v2881
    %2910 = vmatpush.msra.mxu0 %v2879
    %2911 = vmatpush.msra.mxu0 %v2877
    %2912 = vmatpush.msra.mxu0 %v2875
    %2913 = vmatpush.msra.mxu0 %v2873
    %2914 = vmatmul.f32.gmra.mxu0 %v2896
    %v2915 = vpop.f32.mrf.mxu0
    %v2916 = vadd.f32 %v2891, %v2915
    %2917 = vdwg.mxu0
    %2918 = vmatpush.msra.mxu0 0.0
    %2919 = vmatpush.msra.mxu0 0.0
    %2920 = vmatpush.msra.mxu0 0.0
    %2921 = vmatpush.msra.mxu0 0.0
    %2922 = vmatpush.msra.mxu0 0.0
    %2923 = vmatpush.msra.mxu0 0.0
    %2924 = vmatpush.msra.mxu0 0.0
    %2925 = vmatpush.msra.mxu0 0.0
    %2926 = vmatpush.msra.mxu0 %v2888
    %2927 = vmatpush.msra.mxu0 %v2886
    %2928 = vmatpush.msra.mxu0 %v2884
    %2929 = vmatpush.msra.mxu0 %v2882
    %2930 = vmatpush.msra.mxu0 %v2880
    %2931 = vmatpush.msra.mxu0 %v2878
    %2932 = vmatpush.msra.mxu0 %v2876
    %2933 = vmatpush.msra.mxu0 %v2874
    %2934 = vmatmul.f32.gmra.mxu0 %v2896
    %v2935 = vpop.f32.mrf.mxu0
    %v2936 = vadd.f32 %v2892, %v2935
    %2937 = vdwg.mxu0
    %v2938 = vmax.f32 %v2916, 0.0
    %v2939 = vmax.f32 %v2936, 0.0
    %v2940 = vld [vmem:[%s21] sm:$0xff]
    %v2941 = vld [vmem:[%s21 + $0x8] sm:$0xff]
    %v2942 = vld [vmem:[%s21 + $0x10] sm:$0xff]
    %v2943 = vld [vmem:[%s21 + $0x18] sm:$0xff]
    %v2944 = vld [vmem:[%s21 + $0x20] sm:$0xff]
    %v2945 = vld [vmem:[%s21 + $0x28] sm:$0xff]
    %v2946 = vld [vmem:[%s21 + $0x30] sm:$0xff]
    %v2947 = vld [vmem:[%s21 + $0x38] sm:$0xff]
    %v2948 = vld [vmem:[%s21 + $0x40] sm:$0xff]
    %v2949 = vld [vmem:[%s21 + $0x48] sm:$0xff]
    %v2950 = vld [vmem:[%s21 + $0x50] sm:$0xff]
    %v2951 = vld [vmem:[%s21 + $0x58] sm:$0xff]
    %v2952 = vld [vmem:[%s21 + $0x60] sm:$0xff]
    %v2953 = vld [vmem:[%s21 + $0x68] sm:$0xff]
    %v2954 = vld [vmem:[%s21 + $0x70] sm:$0xff]
    %v2955 = vld [vmem:[%s21 + $0x78] sm:$0xff]
    %v2956 = vld [vmem:[%s21 + $0x80] sm:$0xff]
    %v2957 = vld [vmem:[%s21 + $0x88] sm:$0xff]
    %v2958 = vld [vmem:[%s21 + $0x90] sm:$0xff]
    %v2959 = vld [vmem:[%s21 + $0x98] sm:$0xff]
    %v2960 = vld [vmem:[%s21 + $0xa0] sm:$0xff]
    %v2961 = vld [vmem:[%s21 + $0xa8] sm:$0xff]
    %v2962 = vld [vmem:[%s21 + $0xb0] sm:$0xff]
    %v2963 = vld [vmem:[%s21 + $0xb8] sm:$0xff]
    %v2964 = vld [vmem:[%s21 + $0xc0] sm:$0xff]
    %v2965 = vld [vmem:[%s21 + $0xc8] sm:$0xff]
    %v2966 = vld [vmem:[%s21 + $0xd0] sm:$0xff]
    %v2967 = vld [vmem:[%s21 + $0xd8] sm:$0xff]
    %v2968 = vld [vmem:[%s21 + $0xe0] sm:$0xff]
    %v2969 = vld [vmem:[%s21 + $0xe8] sm:$0xff]
    %v2970 = vld [vmem:[%s21 + $0xf0] sm:$0xff]
    %v2971 = vld [vmem:[%s21 + $0xf8] sm:$0xff]
    %v2972 = vld [vmem:[%s22] sm:$0x1]
    %v2974 = vperm.slane %v2972, 0
    %2976 = vmatpush.msra.mxu0 %v2955
    %2977 = vmatpush.msra.mxu0 %v2954
    %2978 = vmatpush.msra.mxu0 %v2953
    %2979 = vmatpush.msra.mxu0 %v2952
    %2980 = vmatpush.msra.mxu0 %v2951
    %2981 = vmatpush.msra.mxu0 %v2950
    %2982 = vmatpush.msra.mxu0 %v2949
    %2983 = vmatpush.msra.mxu0 %v2948
    %2984 = vmatpush.msra.mxu0 %v2947
    %2985 = vmatpush.msra.mxu0 %v2946
    %2986 = vmatpush.msra.mxu0 %v2945
    %2987 = vmatpush.msra.mxu0 %v2944
    %2988 = vmatpush.msra.mxu0 %v2943
    %2989 = vmatpush.msra.mxu0 %v2942
    %2990 = vmatpush.msra.mxu0 %v2941
    %2991 = vmatpush.msra.mxu0 %v2940
    %2992 = vmatmul.f32.gmra.mxu0 %v2938
    %v2993 = vpop.f32.mrf.mxu0
    %v2994 = vadd.f32 %v2974, %v2993
    %2995 = vdwg.mxu0
    %2996 = vmatpush.msra.mxu0 %v2971
    %2997 = vmatpush.msra.mxu0 %v2970
    %2998 = vmatpush.msra.mxu0 %v2969
    %2999 = vmatpush.msra.mxu0 %v2968
    %3000 = vmatpush.msra.mxu0 %v2967
    %3001 = vmatpush.msra.mxu0 %v2966
    %3002 = vmatpush.msra.mxu0 %v2965
    %3003 = vmatpush.msra.mxu0 %v2964
    %3004 = vmatpush.msra.mxu0 %v2963
    %3005 = vmatpush.msra.mxu0 %v2962
    %3006 = vmatpush.msra.mxu0 %v2961
    %3007 = vmatpush.msra.mxu0 %v2960
    %3008 = vmatpush.msra.mxu0 %v2959
    %3009 = vmatpush.msra.mxu0 %v2958
    %3010 = vmatpush.msra.mxu0 %v2957
    %3011 = vmatpush.msra.mxu0 %v2956
    %3012 = vmatmul.f32.gmra.mxu0 %v2939
    %v3013 = vpop.f32.mrf.mxu0
    %v3014 = vadd.f32 %v2994, %v3013
    %3015 = vdwg.mxu0
    %v3016 = vmax.f32 %v3014, 0.0
    %v3017 = vld [vmem:[#allocation27] sm:$0xff]
    %v3018 = vld [vmem:[#allocation27 + $0x8] sm:$0xff]
    %v3019 = vld [vmem:[#allocation27 + $0x10] sm:$0xff]
    %v3020 = vld [vmem:[#allocation27 + $0x18] sm:$0xff]
    %v3021 = vld [vmem:[#allocation27 + $0x20] sm:$0xff]
    %v3022 = vld [vmem:[#allocation27 + $0x28] sm:$0xff]
    %v3023 = vld [vmem:[#allocation27 + $0x30] sm:$0xff]
    %v3024 = vld [vmem:[#allocation27 + $0x38] sm:$0xff]
    %v3025 = vld [vmem:[#allocation27 + $0x40] sm:$0xff]
    %v3026 = vld [vmem:[#allocation27 + $0x48] sm:$0xff]
    %v3027 = vld [vmem:[#allocation27 + $0x50] sm:$0xff]
    %v3028 = vld [vmem:[#allocation27 + $0x58] sm:$0xff]
    %v3029 = vld [vmem:[#allocation27 + $0x60] sm:$0xff]
    %v3030 = vld [vmem:[#allocation27 + $0x68] sm:$0xff]
    %v3031 = vld [vmem:[#allocation27 + $0x70] sm:$0xff]
    %v3032 = vld [vmem:[#allocation27 + $0x78] sm:$0xff]
    %v3033 = vld [vmem:[%s24] sm:$0x1]
    %v3035 = vperm.slane %v3033, 0
    %3037 = vmatpush.msra.mxu0 %v3032
    %3038 = vmatpush.msra.mxu0 %v3031
    %3039 = vmatpush.msra.mxu0 %v3030
    %3040 = vmatpush.msra.mxu0 %v3029
    %3041 = vmatpush.msra.mxu0 %v3028
    %3042 = vmatpush.msra.mxu0 %v3027
    %3043 = vmatpush.msra.mxu0 %v3026
    %3044 = vmatpush.msra.mxu0 %v3025
    %3045 = vmatpush.msra.mxu0 %v3024
    %3046 = vmatpush.msra.mxu0 %v3023
    %3047 = vmatpush.msra.mxu0 %v3022
    %3048 = vmatpush.msra.mxu0 %v3021
    %3049 = vmatpush.msra.mxu0 %v3020
    %3050 = vmatpush.msra.mxu0 %v3019
    %3051 = vmatpush.msra.mxu0 %v3018
    %3052 = vmatpush.msra.mxu0 %v3017
    %3053 = vmatmul.f32.gmra.mxu0 %v3016
    %v3054 = vpop.f32.mrf.mxu0
    %v3055 = vadd.f32 %v3035, %v3054
    %3056 = vdwg.mxu0
    %3057 = vst [vmem:[#allocation29] sm:$0x3] %v3055
    // Predicated region
    $region126: #{tpu_custom_call.1} parent=1 // pred_check
      _
    $region127: #{tpu_custom_call.1} parent=1 // pred_check_branch
      %3059 = sbr.rel (0) target = $region129
    $region128: #{tpu_custom_call.1} parent=1 // pred_region
      %3061 = vsyncadd [#allocation20], 0
      %s3063 = sshll.u32 [#allocation29], 4
      %s3064 = int_to_ptr.vmem [resolvable:$true] %s3063
      %s3065 = sshll.u32 %s25, 4
      %s3066 = int_to_ptr.hbm [resolvable:$true] %s3065
      %3068 = dma.vmem_to_hbm [thread:$0]  %s3064, 32, %s3066, [#allocation20]
    $region129: #{tpu_custom_call.1} parent=1 // pred_fallthru
      _
    // Predicated region
    $region130: #{tpu_custom_call.1} parent=1 // pred_check
      _
    $region131: #{tpu_custom_call.1} parent=1 // pred_check_branch
      %3070 = sbr.rel (0) target = $region133
    $region132: #{tpu_custom_call.1} parent=1 // pred_region
      %3072 = dma.done [#allocation20], 32
    $region133: #{tpu_custom_call.1} parent=1 // pred_fallthru
      _
    %3073 = vsyncpa [#allocation19], 1
    %3074 = vsyncpa [#allocation22], 1
    %3075 = vsyncpa [#allocation25], 1
    %3076 = vsyncpa [#allocation28], 1
    %3077 = vsyncpa [#allocation20], 1

</llo_original>
